<compile_context>
chip_gen: v7x
topology: tpu7x:2x2x1
jax: 0.10.0
libtpu: 0.0.40
codegen_flags: <defaults>
</compile_context>

<pallas_src>
import numpy as np
import jax
import jax.numpy as jnp
from jax.experimental import pallas as pl
from jax.experimental.pallas import tpu as pltpu


# ------------------------------- Pallas kernel --------------------------------

def _make_lstm2_kernel(num_layers: int, seq_len: int, batch: int, hidden: int):
    """Fused (layers x time) LSTM recurrence + h_n.view(-1, L*H) + fc1, all in VMEM."""
    L, T, B, H = num_layers, seq_len, batch, hidden

    def kernel(*refs):
        x_ref, h0_ref, c0_ref = refs[0], refs[1], refs[2]
        lw = refs[3:3 + 3 * L]                       # per layer: wih_t, whh_t, bias
        wfc_ref = refs[3 + 3 * L]                    # (L*H, P) bf16
        bfc_ref = refs[4 + 3 * L]                    # (1, P)   f32
        sel_ref = refs[5 + 3 * L]                    # (L, B, L*B) f32 0/1 selectors
        out_ref = refs[6 + 3 * L]                    # (B, P)   f32

        layer_in = x_ref[...]                        # (T*B, in_dim) bf16, row = t*B + b
        h_finals = []
        for l in range(L):
            wih_t = lw[3 * l][...]                   # (in_dim, 4H) bf16, gates [i|f|o|g]
            whh_t = lw[3 * l + 1][...]               # (H, 4H)      bf16
            bias = lw[3 * l + 2][...]                # (1, 4H)      f32 (= b_ih + b_hh)

            # Hoisted input projection: ONE batched matmul + ONE bias broadcast per layer.
            gates_x = jnp.dot(layer_in, wih_t,
                              preferred_element_type=jnp.float32) + bias   # (T*B, 4H) f32

            h = h0_ref[l]                            # (B, H) f32
            c = c0_ref[l]                            # (B, H) f32
            hs = []
            # T and L are tiny and static -> full unroll (LLO-friendly).
            # TODO(synk): switch to lax.fori_loop + VMEM scratch if reused with large T.
            for t in range(T):
                g = gates_x[t * B:(t + 1) * B, :] + jnp.dot(
                    h.astype(whh_t.dtype), whh_t,
                    preferred_element_type=jnp.float32)          # (B, 4H) f32
                act = jax.nn.sigmoid(g[:, :3 * H])               # [i|f|o] lane-dense slab
                gg = jnp.tanh(g[:, 3 * H:])                      # cell candidate
                c = act[:, H:2 * H] * c + act[:, :H] * gg        # f*c + i*g
                h = act[:, 2 * H:3 * H] * jnp.tanh(c)            # o*tanh(c)
                hs.append(h)
            h_finals.append(h)
            if l + 1 < L:
                # TODO(synk): nn.LSTM dropout(p=0.3) would apply here in train mode only.
                layer_in = jnp.concatenate(hs, axis=0).astype(jnp.bfloat16)  # (T*B, H)

        # fc1 on h_n.view(-1, L*H), fully fused.  The view interleaves layer & batch:
        #   h_cat[r, k*H:(k+1)*H] == h_flat[L*r + k],  h_flat row index = layer*B + batch.
        # Realized with 0/1 selection matmuls (MXU) instead of a minor-dim reshape.
        h_flat = jnp.concatenate(h_finals, axis=0)               # (L*B, H) f32
        wfc = wfc_ref[...]                                       # (L*H, P) bf16
        y = bfc_ref[...]                                         # (1, P) f32, broadcasts
        for k in range(L):
            rows_k = jnp.dot(sel_ref[k], h_flat,
                             preferred_element_type=jnp.float32)  # (B, H) = h_flat[L*r+k]
            y = y + jnp.dot(rows_k.astype(wfc.dtype), wfc[k * H:(k + 1) * H, :],
                            preferred_element_type=jnp.float32)
        out_ref[...] = y.astype(out_ref.dtype)

    return kernel


# --------------------------------- wrapper ------------------------------------

def lstm2_forward(x, params):
    x = x.astype(jnp.float32)                     # mirrors torch.tensor(x, dtype=float32)
    B, T, I = x.shape
    h0, c0 = params["h0"], params["c0"]
    L, _, H = h0.shape
    w_fc, b_fc = params["fc1"]
    P = w_fc.shape[0]

    # Gate permutation [i,f,g,o] -> [i,f,o,g]: one sigmoid over [:, :3H], one tanh [:, 3H:].
    perm = np.concatenate([np.arange(0, 2 * H), np.arange(3 * H, 4 * H),
                           np.arange(2 * H, 3 * H)])

    # Time-major, flattened input (row = t*B + b): each timestep is a contiguous,
    # sublane-aligned row block -> one batched input-projection matmul per layer.
    x_flat = jnp.transpose(x, (1, 0, 2)).reshape(T * B, I).astype(jnp.bfloat16)

    # 0/1 selection matrices implementing h_n.view(-1, L*H) on the MXU:
    #   sel[k] @ h_flat == h_flat[L*r + k] for every output row r.
    sel = np.zeros((L, B, L * B), np.float32)
    rows = np.arange(B)
    for k in range(L):
        sel[k, rows, L * rows + k] = 1.0

    inputs = [x_flat, h0.astype(jnp.float32), c0.astype(jnp.float32)]
    for (wih, whh, bih, bhh) in params["lstm"]:
        inputs += [
            wih.T[:, perm].astype(jnp.bfloat16),                 # (in_dim, 4H)
            whh.T[:, perm].astype(jnp.bfloat16),                 # (H, 4H)
            (bih + bhh)[perm][None, :].astype(jnp.float32),      # (1, 4H)
        ]
    inputs += [
        w_fc.T.astype(jnp.bfloat16),                             # (L*H, P)
        b_fc[None, :].astype(jnp.float32),                       # (1, P)
        jnp.asarray(sel),                                        # (L, B, L*B)
    ]

    # Whole working set < 200 KB -> single grid point, everything resident in VMEM.
    out = pl.pallas_call(
        _make_lstm2_kernel(L, T, B, H),
        out_shape=jax.ShapeDtypeStruct((B, P), jnp.float32),
        in_specs=[pl.BlockSpec(memory_space=pltpu.MemorySpace.VMEM)] * len(inputs),
        out_specs=pl.BlockSpec(memory_space=pltpu.MemorySpace.VMEM),
    )(*inputs)
    return out


# ----------------------------- deterministic init -----------------------------

def init_params(key, input_size, hidden, num_layers, pred_len, batch):
    keys = jax.random.split(key, 4 * num_layers + 4)
    nxt = iter(keys)
    bound_lstm = 1.0 / float(np.sqrt(hidden))

    lstm = []
    for l in range(num_layers):
        in_dim = input_size if l == 0 else hidden
        wih = jax.random.uniform(next(nxt), (4 * hidden, in_dim), jnp.float32, -bound_lstm, bound_lstm)
        whh = jax.random.uniform(next(nxt), (4 * hidden, hidden), jnp.float32, -bound_lstm, bound_lstm)
        bih = jax.random.uniform(next(nxt), (4 * hidden,), jnp.float32, -bound_lstm, bound_lstm)
        bhh = jax.random.uniform(next(nxt), (4 * hidden,), jnp.float32, -bound_lstm, bound_lstm)
        lstm.append((wih, whh, bih, bhh))

    bound_fc = 1.0 / float(np.sqrt(num_layers * hidden))
    w1 = jax.random.uniform(next(nxt), (pred_len, num_layers * hidden), jnp.float32, -bound_fc, bound_fc)
    b1 = jax.random.uniform(next(nxt), (pred_len,), jnp.float32, -bound_fc, bound_fc)

    # LSTM2.forward re-randomizes h_0/c_0 (xavier_uniform_) every call; sample once here
    # deterministically with the matching bounds (fan_in = B*H, fan_out = L*H for (L,B,H)).
    xb = float(np.sqrt(6.0 / (batch * hidden + num_layers * hidden)))
    h0 = jax.random.uniform(next(nxt), (num_layers, batch, hidden), jnp.float32, -xb, xb)
    c0 = jax.random.uniform(next(nxt), (num_layers, batch, hidden), jnp.float32, -xb, xb)

    return {"lstm": lstm, "fc1": (w1, b1), "h0": h0, "c0": c0}


# ----------------------------- pure-JAX reference ------------------------------

def lstm2_reference(x, params):
    x = x.astype(jnp.float32)
    B, T, _ = x.shape
    h0, c0 = params["h0"], params["c0"]
    L, _, H = h0.shape

    layer_in = x
    h_finals = []
    for l, (wih, whh, bih, bhh) in enumerate(params["lstm"]):
        h, c = h0[l], c0[l]
        outs = []
        for t in range(T):
            g = layer_in[:, t, :] @ wih.T + h @ whh.T + bih + bhh   # PyTorch order i,f,g,o
            i = jax.nn.sigmoid(g[:, :H])
            f = jax.nn.sigmoid(g[:, H:2 * H])
            gg = jnp.tanh(g[:, 2 * H:3 * H])
            o = jax.nn.sigmoid(g[:, 3 * H:])
            c = f * c + i * gg
            h = o * jnp.tanh(c)
            outs.append(h)
        layer_in = jnp.stack(outs, axis=1)
        h_finals.append(h)

    h_out = jnp.stack(h_finals, axis=0)            # (L, B, H)  == torch h_n
    h_cat = h_out.reshape(-1, L * H)               # == h_n.view(-1, L*H)
    w1, b1 = params["fc1"]
    return h_cat @ w1.T + b1


# ----------------------------------- main --------------------------------------

if __name__ == "__main__":
    hist_len, pred_len = 8, 4
    input_size, hidden_size, num_layers = 4, 32, 2
    batch = 64

    key = jax.random.PRNGKey(0)
    pkey, xkey = jax.random.split(key)
    params = init_params(pkey, input_size, hidden_size, num_layers, pred_len, batch)
    x = jax.random.normal(xkey, (batch, hist_len, input_size), dtype=jnp.float32)

    fwd = jax.jit(lstm2_forward)
    out = jax.block_until_ready(fwd(x, params))

    ref = lstm2_reference(x, params)
    # bf16 matmul operands (f32 accumulation / f32 state math) -> 2e-2 tolerance.
    np.testing.assert_allclose(np.asarray(out), np.asarray(ref), rtol=2e-2, atol=2e-2)
    assert out.shape == (batch, pred_len)

    print("KERNEL_OK")
</pallas_src>

<mosaic_0001>
module attributes {stable_mosaic.version = 11 : i64} {
  func.func @kernel(%arg0: memref<512x4xbf16, #tpu.memory_space<vmem>>, %arg1: memref<2x64x32xf32, #tpu.memory_space<vmem>>, %arg2: memref<2x64x32xf32, #tpu.memory_space<vmem>>, %arg3: memref<4x128xbf16, #tpu.memory_space<vmem>>, %arg4: memref<32x128xbf16, #tpu.memory_space<vmem>>, %arg5: memref<1x128xf32, #tpu.memory_space<vmem>>, %arg6: memref<32x128xbf16, #tpu.memory_space<vmem>>, %arg7: memref<32x128xbf16, #tpu.memory_space<vmem>>, %arg8: memref<1x128xf32, #tpu.memory_space<vmem>>, %arg9: memref<64x4xbf16, #tpu.memory_space<vmem>>, %arg10: memref<1x4xf32, #tpu.memory_space<vmem>>, %arg11: memref<2x64x128xf32, #tpu.memory_space<vmem>>, %arg12: memref<64x4xf32, #tpu.memory_space<vmem>>) attributes {dimension_semantics = [], scalar_prefetch = 0 : i64, scratch_operands = 0 : i64, tpu.core_type = #tpu.core_type<tc>} {
    %c0 = arith.constant 0 : index
    %c0_0 = arith.constant 0 : index
    %0 = vector.load %arg0[%c0, %c0_0] : memref<512x4xbf16, #tpu.memory_space<vmem>>, vector<512x4xbf16>
    %c0_1 = arith.constant 0 : index
    %c0_2 = arith.constant 0 : index
    %1 = vector.load %arg3[%c0_1, %c0_2] : memref<4x128xbf16, #tpu.memory_space<vmem>>, vector<4x128xbf16>
    %c0_3 = arith.constant 0 : index
    %c0_4 = arith.constant 0 : index
    %2 = vector.load %arg4[%c0_3, %c0_4] : memref<32x128xbf16, #tpu.memory_space<vmem>>, vector<32x128xbf16>
    %c0_5 = arith.constant 0 : index
    %c0_6 = arith.constant 0 : index
    %3 = vector.load %arg5[%c0_5, %c0_6] : memref<1x128xf32, #tpu.memory_space<vmem>>, vector<1x128xf32>
    %cst = arith.constant dense<0.000000e+00> : vector<512x128xf32>
    %4 = tpu.matmul %0, %1, %cst {dimension_numbers = #tpu.dot_dimension_numbers<[1], [0], [0], [1], [0, 0, 1, 1], [], []>} : vector<512x4xbf16>, vector<4x128xbf16>, vector<512x128xf32> -> vector<512x128xf32>
    %5 = vector.broadcast %3 : vector<1x128xf32> to vector<512x128xf32>
    %6 = arith.addf %4, %5 : vector<512x128xf32>
    %c0_7 = arith.constant 0 : index
    %c0_8 = arith.constant 0 : index
    %c0_9 = arith.constant 0 : index
    %7 = vector.load %arg1[%c0_7, %c0_8, %c0_9] : memref<2x64x32xf32, #tpu.memory_space<vmem>>, vector<1x64x32xf32>
    %8 = vector.shape_cast %7 : vector<1x64x32xf32> to vector<64x32xf32>
    %c0_10 = arith.constant 0 : index
    %c0_11 = arith.constant 0 : index
    %c0_12 = arith.constant 0 : index
    %9 = vector.load %arg2[%c0_10, %c0_11, %c0_12] : memref<2x64x32xf32, #tpu.memory_space<vmem>>, vector<1x64x32xf32>
    %10 = vector.shape_cast %9 : vector<1x64x32xf32> to vector<64x32xf32>
    %11 = vector.extract_strided_slice %6 {offsets = [0, 0], sizes = [64, 128], strides = [1, 1]} : vector<512x128xf32> to vector<64x128xf32>
    %12 = arith.truncf %8 : vector<64x32xf32> to vector<64x32xbf16>
    %cst_13 = arith.constant dense<0.000000e+00> : vector<64x128xf32>
    %13 = tpu.matmul %12, %2, %cst_13 {dimension_numbers = #tpu.dot_dimension_numbers<[1], [0], [0], [1], [0, 0, 1, 1], [], []>} : vector<64x32xbf16>, vector<32x128xbf16>, vector<64x128xf32> -> vector<64x128xf32>
    %14 = arith.addf %11, %13 : vector<64x128xf32>
    %15 = vector.extract_strided_slice %14 {offsets = [0, 0], sizes = [64, 96], strides = [1, 1]} : vector<64x128xf32> to vector<64x96xf32>
    %16 = arith.negf %15 : vector<64x96xf32>
    %17 = math.exp %16 : vector<64x96xf32>
    %cst_14 = arith.constant 1.000000e+00 : f32
    %18 = vector.broadcast %cst_14 : f32 to vector<64x96xf32>
    %19 = arith.addf %18, %17 : vector<64x96xf32>
    %20 = arith.divf %18, %19 : vector<64x96xf32>
    %21 = vector.extract_strided_slice %14 {offsets = [0, 96], sizes = [64, 32], strides = [1, 1]} : vector<64x128xf32> to vector<64x32xf32>
    %22 = math.tanh %21 : vector<64x32xf32>
    %23 = vector.extract_strided_slice %20 {offsets = [0, 32], sizes = [64, 32], strides = [1, 1]} : vector<64x96xf32> to vector<64x32xf32>
    %24 = arith.mulf %23, %10 : vector<64x32xf32>
    %25 = vector.extract_strided_slice %20 {offsets = [0, 0], sizes = [64, 32], strides = [1, 1]} : vector<64x96xf32> to vector<64x32xf32>
    %26 = arith.mulf %25, %22 : vector<64x32xf32>
    %27 = arith.addf %24, %26 : vector<64x32xf32>
    %28 = vector.extract_strided_slice %20 {offsets = [0, 64], sizes = [64, 32], strides = [1, 1]} : vector<64x96xf32> to vector<64x32xf32>
    %29 = math.tanh %27 : vector<64x32xf32>
    %30 = arith.mulf %28, %29 : vector<64x32xf32>
    %31 = vector.extract_strided_slice %6 {offsets = [64, 0], sizes = [64, 128], strides = [1, 1]} : vector<512x128xf32> to vector<64x128xf32>
    %32 = arith.truncf %30 : vector<64x32xf32> to vector<64x32xbf16>
    %cst_15 = arith.constant dense<0.000000e+00> : vector<64x128xf32>
    %33 = tpu.matmul %32, %2, %cst_15 {dimension_numbers = #tpu.dot_dimension_numbers<[1], [0], [0], [1], [0, 0, 1, 1], [], []>} : vector<64x32xbf16>, vector<32x128xbf16>, vector<64x128xf32> -> vector<64x128xf32>
    %34 = arith.addf %31, %33 : vector<64x128xf32>
    %35 = vector.extract_strided_slice %34 {offsets = [0, 0], sizes = [64, 96], strides = [1, 1]} : vector<64x128xf32> to vector<64x96xf32>
    %36 = arith.negf %35 : vector<64x96xf32>
    %37 = math.exp %36 : vector<64x96xf32>
    %cst_16 = arith.constant 1.000000e+00 : f32
    %38 = vector.broadcast %cst_16 : f32 to vector<64x96xf32>
    %39 = arith.addf %38, %37 : vector<64x96xf32>
    %40 = arith.divf %38, %39 : vector<64x96xf32>
    %41 = vector.extract_strided_slice %34 {offsets = [0, 96], sizes = [64, 32], strides = [1, 1]} : vector<64x128xf32> to vector<64x32xf32>
    %42 = math.tanh %41 : vector<64x32xf32>
    %43 = vector.extract_strided_slice %40 {offsets = [0, 32], sizes = [64, 32], strides = [1, 1]} : vector<64x96xf32> to vector<64x32xf32>
    %44 = arith.mulf %43, %27 : vector<64x32xf32>
    %45 = vector.extract_strided_slice %40 {offsets = [0, 0], sizes = [64, 32], strides = [1, 1]} : vector<64x96xf32> to vector<64x32xf32>
    %46 = arith.mulf %45, %42 : vector<64x32xf32>
    %47 = arith.addf %44, %46 : vector<64x32xf32>
    %48 = vector.extract_strided_slice %40 {offsets = [0, 64], sizes = [64, 32], strides = [1, 1]} : vector<64x96xf32> to vector<64x32xf32>
    %49 = math.tanh %47 : vector<64x32xf32>
    %50 = arith.mulf %48, %49 : vector<64x32xf32>
    %51 = vector.extract_strided_slice %6 {offsets = [128, 0], sizes = [64, 128], strides = [1, 1]} : vector<512x128xf32> to vector<64x128xf32>
    %52 = arith.truncf %50 : vector<64x32xf32> to vector<64x32xbf16>
    %cst_17 = arith.constant dense<0.000000e+00> : vector<64x128xf32>
    %53 = tpu.matmul %52, %2, %cst_17 {dimension_numbers = #tpu.dot_dimension_numbers<[1], [0], [0], [1], [0, 0, 1, 1], [], []>} : vector<64x32xbf16>, vector<32x128xbf16>, vector<64x128xf32> -> vector<64x128xf32>
    %54 = arith.addf %51, %53 : vector<64x128xf32>
    %55 = vector.extract_strided_slice %54 {offsets = [0, 0], sizes = [64, 96], strides = [1, 1]} : vector<64x128xf32> to vector<64x96xf32>
    %56 = arith.negf %55 : vector<64x96xf32>
    %57 = math.exp %56 : vector<64x96xf32>
    %cst_18 = arith.constant 1.000000e+00 : f32
    %58 = vector.broadcast %cst_18 : f32 to vector<64x96xf32>
    %59 = arith.addf %58, %57 : vector<64x96xf32>
    %60 = arith.divf %58, %59 : vector<64x96xf32>
    %61 = vector.extract_strided_slice %54 {offsets = [0, 96], sizes = [64, 32], strides = [1, 1]} : vector<64x128xf32> to vector<64x32xf32>
    %62 = math.tanh %61 : vector<64x32xf32>
    %63 = vector.extract_strided_slice %60 {offsets = [0, 32], sizes = [64, 32], strides = [1, 1]} : vector<64x96xf32> to vector<64x32xf32>
    %64 = arith.mulf %63, %47 : vector<64x32xf32>
    %65 = vector.extract_strided_slice %60 {offsets = [0, 0], sizes = [64, 32], strides = [1, 1]} : vector<64x96xf32> to vector<64x32xf32>
    %66 = arith.mulf %65, %62 : vector<64x32xf32>
    %67 = arith.addf %64, %66 : vector<64x32xf32>
    %68 = vector.extract_strided_slice %60 {offsets = [0, 64], sizes = [64, 32], strides = [1, 1]} : vector<64x96xf32> to vector<64x32xf32>
    %69 = math.tanh %67 : vector<64x32xf32>
    %70 = arith.mulf %68, %69 : vector<64x32xf32>
    %71 = vector.extract_strided_slice %6 {offsets = [192, 0], sizes = [64, 128], strides = [1, 1]} : vector<512x128xf32> to vector<64x128xf32>
    %72 = arith.truncf %70 : vector<64x32xf32> to vector<64x32xbf16>
    %cst_19 = arith.constant dense<0.000000e+00> : vector<64x128xf32>
    %73 = tpu.matmul %72, %2, %cst_19 {dimension_numbers = #tpu.dot_dimension_numbers<[1], [0], [0], [1], [0, 0, 1, 1], [], []>} : vector<64x32xbf16>, vector<32x128xbf16>, vector<64x128xf32> -> vector<64x128xf32>
    %74 = arith.addf %71, %73 : vector<64x128xf32>
    %75 = vector.extract_strided_slice %74 {offsets = [0, 0], sizes = [64, 96], strides = [1, 1]} : vector<64x128xf32> to vector<64x96xf32>
    %76 = arith.negf %75 : vector<64x96xf32>
    %77 = math.exp %76 : vector<64x96xf32>
    %cst_20 = arith.constant 1.000000e+00 : f32
    %78 = vector.broadcast %cst_20 : f32 to vector<64x96xf32>
    %79 = arith.addf %78, %77 : vector<64x96xf32>
    %80 = arith.divf %78, %79 : vector<64x96xf32>
    %81 = vector.extract_strided_slice %74 {offsets = [0, 96], sizes = [64, 32], strides = [1, 1]} : vector<64x128xf32> to vector<64x32xf32>
    %82 = math.tanh %81 : vector<64x32xf32>
    %83 = vector.extract_strided_slice %80 {offsets = [0, 32], sizes = [64, 32], strides = [1, 1]} : vector<64x96xf32> to vector<64x32xf32>
    %84 = arith.mulf %83, %67 : vector<64x32xf32>
    %85 = vector.extract_strided_slice %80 {offsets = [0, 0], sizes = [64, 32], strides = [1, 1]} : vector<64x96xf32> to vector<64x32xf32>
    %86 = arith.mulf %85, %82 : vector<64x32xf32>
    %87 = arith.addf %84, %86 : vector<64x32xf32>
    %88 = vector.extract_strided_slice %80 {offsets = [0, 64], sizes = [64, 32], strides = [1, 1]} : vector<64x96xf32> to vector<64x32xf32>
    %89 = math.tanh %87 : vector<64x32xf32>
    %90 = arith.mulf %88, %89 : vector<64x32xf32>
    %91 = vector.extract_strided_slice %6 {offsets = [256, 0], sizes = [64, 128], strides = [1, 1]} : vector<512x128xf32> to vector<64x128xf32>
    %92 = arith.truncf %90 : vector<64x32xf32> to vector<64x32xbf16>
    %cst_21 = arith.constant dense<0.000000e+00> : vector<64x128xf32>
    %93 = tpu.matmul %92, %2, %cst_21 {dimension_numbers = #tpu.dot_dimension_numbers<[1], [0], [0], [1], [0, 0, 1, 1], [], []>} : vector<64x32xbf16>, vector<32x128xbf16>, vector<64x128xf32> -> vector<64x128xf32>
    %94 = arith.addf %91, %93 : vector<64x128xf32>
    %95 = vector.extract_strided_slice %94 {offsets = [0, 0], sizes = [64, 96], strides = [1, 1]} : vector<64x128xf32> to vector<64x96xf32>
    %96 = arith.negf %95 : vector<64x96xf32>
    %97 = math.exp %96 : vector<64x96xf32>
    %cst_22 = arith.constant 1.000000e+00 : f32
    %98 = vector.broadcast %cst_22 : f32 to vector<64x96xf32>
    %99 = arith.addf %98, %97 : vector<64x96xf32>
    %100 = arith.divf %98, %99 : vector<64x96xf32>
    %101 = vector.extract_strided_slice %94 {offsets = [0, 96], sizes = [64, 32], strides = [1, 1]} : vector<64x128xf32> to vector<64x32xf32>
    %102 = math.tanh %101 : vector<64x32xf32>
    %103 = vector.extract_strided_slice %100 {offsets = [0, 32], sizes = [64, 32], strides = [1, 1]} : vector<64x96xf32> to vector<64x32xf32>
    %104 = arith.mulf %103, %87 : vector<64x32xf32>
    %105 = vector.extract_strided_slice %100 {offsets = [0, 0], sizes = [64, 32], strides = [1, 1]} : vector<64x96xf32> to vector<64x32xf32>
    %106 = arith.mulf %105, %102 : vector<64x32xf32>
    %107 = arith.addf %104, %106 : vector<64x32xf32>
    %108 = vector.extract_strided_slice %100 {offsets = [0, 64], sizes = [64, 32], strides = [1, 1]} : vector<64x96xf32> to vector<64x32xf32>
    %109 = math.tanh %107 : vector<64x32xf32>
    %110 = arith.mulf %108, %109 : vector<64x32xf32>
    %111 = vector.extract_strided_slice %6 {offsets = [320, 0], sizes = [64, 128], strides = [1, 1]} : vector<512x128xf32> to vector<64x128xf32>
    %112 = arith.truncf %110 : vector<64x32xf32> to vector<64x32xbf16>
    %cst_23 = arith.constant dense<0.000000e+00> : vector<64x128xf32>
    %113 = tpu.matmul %112, %2, %cst_23 {dimension_numbers = #tpu.dot_dimension_numbers<[1], [0], [0], [1], [0, 0, 1, 1], [], []>} : vector<64x32xbf16>, vector<32x128xbf16>, vector<64x128xf32> -> vector<64x128xf32>
    %114 = arith.addf %111, %113 : vector<64x128xf32>
    %115 = vector.extract_strided_slice %114 {offsets = [0, 0], sizes = [64, 96], strides = [1, 1]} : vector<64x128xf32> to vector<64x96xf32>
    %116 = arith.negf %115 : vector<64x96xf32>
    %117 = math.exp %116 : vector<64x96xf32>
    %cst_24 = arith.constant 1.000000e+00 : f32
    %118 = vector.broadcast %cst_24 : f32 to vector<64x96xf32>
    %119 = arith.addf %118, %117 : vector<64x96xf32>
    %120 = arith.divf %118, %119 : vector<64x96xf32>
    %121 = vector.extract_strided_slice %114 {offsets = [0, 96], sizes = [64, 32], strides = [1, 1]} : vector<64x128xf32> to vector<64x32xf32>
    %122 = math.tanh %121 : vector<64x32xf32>
    %123 = vector.extract_strided_slice %120 {offsets = [0, 32], sizes = [64, 32], strides = [1, 1]} : vector<64x96xf32> to vector<64x32xf32>
    %124 = arith.mulf %123, %107 : vector<64x32xf32>
    %125 = vector.extract_strided_slice %120 {offsets = [0, 0], sizes = [64, 32], strides = [1, 1]} : vector<64x96xf32> to vector<64x32xf32>
    %126 = arith.mulf %125, %122 : vector<64x32xf32>
    %127 = arith.addf %124, %126 : vector<64x32xf32>
    %128 = vector.extract_strided_slice %120 {offsets = [0, 64], sizes = [64, 32], strides = [1, 1]} : vector<64x96xf32> to vector<64x32xf32>
    %129 = math.tanh %127 : vector<64x32xf32>
    %130 = arith.mulf %128, %129 : vector<64x32xf32>
    %131 = vector.extract_strided_slice %6 {offsets = [384, 0], sizes = [64, 128], strides = [1, 1]} : vector<512x128xf32> to vector<64x128xf32>
    %132 = arith.truncf %130 : vector<64x32xf32> to vector<64x32xbf16>
    %cst_25 = arith.constant dense<0.000000e+00> : vector<64x128xf32>
    %133 = tpu.matmul %132, %2, %cst_25 {dimension_numbers = #tpu.dot_dimension_numbers<[1], [0], [0], [1], [0, 0, 1, 1], [], []>} : vector<64x32xbf16>, vector<32x128xbf16>, vector<64x128xf32> -> vector<64x128xf32>
    %134 = arith.addf %131, %133 : vector<64x128xf32>
    %135 = vector.extract_strided_slice %134 {offsets = [0, 0], sizes = [64, 96], strides = [1, 1]} : vector<64x128xf32> to vector<64x96xf32>
    %136 = arith.negf %135 : vector<64x96xf32>
    %137 = math.exp %136 : vector<64x96xf32>
    %cst_26 = arith.constant 1.000000e+00 : f32
    %138 = vector.broadcast %cst_26 : f32 to vector<64x96xf32>
    %139 = arith.addf %138, %137 : vector<64x96xf32>
    %140 = arith.divf %138, %139 : vector<64x96xf32>
    %141 = vector.extract_strided_slice %134 {offsets = [0, 96], sizes = [64, 32], strides = [1, 1]} : vector<64x128xf32> to vector<64x32xf32>
    %142 = math.tanh %141 : vector<64x32xf32>
    %143 = vector.extract_strided_slice %140 {offsets = [0, 32], sizes = [64, 32], strides = [1, 1]} : vector<64x96xf32> to vector<64x32xf32>
    %144 = arith.mulf %143, %127 : vector<64x32xf32>
    %145 = vector.extract_strided_slice %140 {offsets = [0, 0], sizes = [64, 32], strides = [1, 1]} : vector<64x96xf32> to vector<64x32xf32>
    %146 = arith.mulf %145, %142 : vector<64x32xf32>
    %147 = arith.addf %144, %146 : vector<64x32xf32>
    %148 = vector.extract_strided_slice %140 {offsets = [0, 64], sizes = [64, 32], strides = [1, 1]} : vector<64x96xf32> to vector<64x32xf32>
    %149 = math.tanh %147 : vector<64x32xf32>
    %150 = arith.mulf %148, %149 : vector<64x32xf32>
    %151 = vector.extract_strided_slice %6 {offsets = [448, 0], sizes = [64, 128], strides = [1, 1]} : vector<512x128xf32> to vector<64x128xf32>
    %152 = arith.truncf %150 : vector<64x32xf32> to vector<64x32xbf16>
    %cst_27 = arith.constant dense<0.000000e+00> : vector<64x128xf32>
    %153 = tpu.matmul %152, %2, %cst_27 {dimension_numbers = #tpu.dot_dimension_numbers<[1], [0], [0], [1], [0, 0, 1, 1], [], []>} : vector<64x32xbf16>, vector<32x128xbf16>, vector<64x128xf32> -> vector<64x128xf32>
    %154 = arith.addf %151, %153 : vector<64x128xf32>
    %155 = vector.extract_strided_slice %154 {offsets = [0, 0], sizes = [64, 96], strides = [1, 1]} : vector<64x128xf32> to vector<64x96xf32>
    %156 = arith.negf %155 : vector<64x96xf32>
    %157 = math.exp %156 : vector<64x96xf32>
    %cst_28 = arith.constant 1.000000e+00 : f32
    %158 = vector.broadcast %cst_28 : f32 to vector<64x96xf32>
    %159 = arith.addf %158, %157 : vector<64x96xf32>
    %160 = arith.divf %158, %159 : vector<64x96xf32>
    %161 = vector.extract_strided_slice %154 {offsets = [0, 96], sizes = [64, 32], strides = [1, 1]} : vector<64x128xf32> to vector<64x32xf32>
    %162 = math.tanh %161 : vector<64x32xf32>
    %163 = vector.extract_strided_slice %160 {offsets = [0, 32], sizes = [64, 32], strides = [1, 1]} : vector<64x96xf32> to vector<64x32xf32>
    %164 = arith.mulf %163, %147 : vector<64x32xf32>
    %165 = vector.extract_strided_slice %160 {offsets = [0, 0], sizes = [64, 32], strides = [1, 1]} : vector<64x96xf32> to vector<64x32xf32>
    %166 = arith.mulf %165, %162 : vector<64x32xf32>
    %167 = arith.addf %164, %166 : vector<64x32xf32>
    %168 = vector.extract_strided_slice %160 {offsets = [0, 64], sizes = [64, 32], strides = [1, 1]} : vector<64x96xf32> to vector<64x32xf32>
    %169 = math.tanh %167 : vector<64x32xf32>
    %170 = arith.mulf %168, %169 : vector<64x32xf32>
    %171 = tpu.concatenate %30, %50, %70, %90, %110, %130, %150, %170 in 0 : vector<64x32xf32>, vector<64x32xf32>, vector<64x32xf32>, vector<64x32xf32>, vector<64x32xf32>, vector<64x32xf32>, vector<64x32xf32>, vector<64x32xf32> -> vector<512x32xf32>
    %172 = arith.truncf %171 : vector<512x32xf32> to vector<512x32xbf16>
    %c0_29 = arith.constant 0 : index
    %c0_30 = arith.constant 0 : index
    %173 = vector.load %arg6[%c0_29, %c0_30] : memref<32x128xbf16, #tpu.memory_space<vmem>>, vector<32x128xbf16>
    %c0_31 = arith.constant 0 : index
    %c0_32 = arith.constant 0 : index
    %174 = vector.load %arg7[%c0_31, %c0_32] : memref<32x128xbf16, #tpu.memory_space<vmem>>, vector<32x128xbf16>
    %c0_33 = arith.constant 0 : index
    %c0_34 = arith.constant 0 : index
    %175 = vector.load %arg8[%c0_33, %c0_34] : memref<1x128xf32, #tpu.memory_space<vmem>>, vector<1x128xf32>
    %cst_35 = arith.constant dense<0.000000e+00> : vector<512x128xf32>
    %176 = tpu.matmul %172, %173, %cst_35 {dimension_numbers = #tpu.dot_dimension_numbers<[1], [0], [0], [1], [0, 0, 1, 1], [], []>} : vector<512x32xbf16>, vector<32x128xbf16>, vector<512x128xf32> -> vector<512x128xf32>
    %177 = vector.broadcast %175 : vector<1x128xf32> to vector<512x128xf32>
    %178 = arith.addf %176, %177 : vector<512x128xf32>
    %c1 = arith.constant 1 : index
    %c0_36 = arith.constant 0 : index
    %c0_37 = arith.constant 0 : index
    %179 = vector.load %arg1[%c1, %c0_36, %c0_37] : memref<2x64x32xf32, #tpu.memory_space<vmem>>, vector<1x64x32xf32>
    %180 = vector.shape_cast %179 : vector<1x64x32xf32> to vector<64x32xf32>
    %c1_38 = arith.constant 1 : index
    %c0_39 = arith.constant 0 : index
    %c0_40 = arith.constant 0 : index
    %181 = vector.load %arg2[%c1_38, %c0_39, %c0_40] : memref<2x64x32xf32, #tpu.memory_space<vmem>>, vector<1x64x32xf32>
    %182 = vector.shape_cast %181 : vector<1x64x32xf32> to vector<64x32xf32>
    %183 = vector.extract_strided_slice %178 {offsets = [0, 0], sizes = [64, 128], strides = [1, 1]} : vector<512x128xf32> to vector<64x128xf32>
    %184 = arith.truncf %180 : vector<64x32xf32> to vector<64x32xbf16>
    %cst_41 = arith.constant dense<0.000000e+00> : vector<64x128xf32>
    %185 = tpu.matmul %184, %174, %cst_41 {dimension_numbers = #tpu.dot_dimension_numbers<[1], [0], [0], [1], [0, 0, 1, 1], [], []>} : vector<64x32xbf16>, vector<32x128xbf16>, vector<64x128xf32> -> vector<64x128xf32>
    %186 = arith.addf %183, %185 : vector<64x128xf32>
    %187 = vector.extract_strided_slice %186 {offsets = [0, 0], sizes = [64, 96], strides = [1, 1]} : vector<64x128xf32> to vector<64x96xf32>
    %188 = arith.negf %187 : vector<64x96xf32>
    %189 = math.exp %188 : vector<64x96xf32>
    %cst_42 = arith.constant 1.000000e+00 : f32
    %190 = vector.broadcast %cst_42 : f32 to vector<64x96xf32>
    %191 = arith.addf %190, %189 : vector<64x96xf32>
    %192 = arith.divf %190, %191 : vector<64x96xf32>
    %193 = vector.extract_strided_slice %186 {offsets = [0, 96], sizes = [64, 32], strides = [1, 1]} : vector<64x128xf32> to vector<64x32xf32>
    %194 = math.tanh %193 : vector<64x32xf32>
    %195 = vector.extract_strided_slice %192 {offsets = [0, 32], sizes = [64, 32], strides = [1, 1]} : vector<64x96xf32> to vector<64x32xf32>
    %196 = arith.mulf %195, %182 : vector<64x32xf32>
    %197 = vector.extract_strided_slice %192 {offsets = [0, 0], sizes = [64, 32], strides = [1, 1]} : vector<64x96xf32> to vector<64x32xf32>
    %198 = arith.mulf %197, %194 : vector<64x32xf32>
    %199 = arith.addf %196, %198 : vector<64x32xf32>
    %200 = vector.extract_strided_slice %192 {offsets = [0, 64], sizes = [64, 32], strides = [1, 1]} : vector<64x96xf32> to vector<64x32xf32>
    %201 = math.tanh %199 : vector<64x32xf32>
    %202 = arith.mulf %200, %201 : vector<64x32xf32>
    %203 = vector.extract_strided_slice %178 {offsets = [64, 0], sizes = [64, 128], strides = [1, 1]} : vector<512x128xf32> to vector<64x128xf32>
    %204 = arith.truncf %202 : vector<64x32xf32> to vector<64x32xbf16>
    %cst_43 = arith.constant dense<0.000000e+00> : vector<64x128xf32>
    %205 = tpu.matmul %204, %174, %cst_43 {dimension_numbers = #tpu.dot_dimension_numbers<[1], [0], [0], [1], [0, 0, 1, 1], [], []>} : vector<64x32xbf16>, vector<32x128xbf16>, vector<64x128xf32> -> vector<64x128xf32>
    %206 = arith.addf %203, %205 : vector<64x128xf32>
    %207 = vector.extract_strided_slice %206 {offsets = [0, 0], sizes = [64, 96], strides = [1, 1]} : vector<64x128xf32> to vector<64x96xf32>
    %208 = arith.negf %207 : vector<64x96xf32>
    %209 = math.exp %208 : vector<64x96xf32>
    %cst_44 = arith.constant 1.000000e+00 : f32
    %210 = vector.broadcast %cst_44 : f32 to vector<64x96xf32>
    %211 = arith.addf %210, %209 : vector<64x96xf32>
    %212 = arith.divf %210, %211 : vector<64x96xf32>
    %213 = vector.extract_strided_slice %206 {offsets = [0, 96], sizes = [64, 32], strides = [1, 1]} : vector<64x128xf32> to vector<64x32xf32>
    %214 = math.tanh %213 : vector<64x32xf32>
    %215 = vector.extract_strided_slice %212 {offsets = [0, 32], sizes = [64, 32], strides = [1, 1]} : vector<64x96xf32> to vector<64x32xf32>
    %216 = arith.mulf %215, %199 : vector<64x32xf32>
    %217 = vector.extract_strided_slice %212 {offsets = [0, 0], sizes = [64, 32], strides = [1, 1]} : vector<64x96xf32> to vector<64x32xf32>
    %218 = arith.mulf %217, %214 : vector<64x32xf32>
    %219 = arith.addf %216, %218 : vector<64x32xf32>
    %220 = vector.extract_strided_slice %212 {offsets = [0, 64], sizes = [64, 32], strides = [1, 1]} : vector<64x96xf32> to vector<64x32xf32>
    %221 = math.tanh %219 : vector<64x32xf32>
    %222 = arith.mulf %220, %221 : vector<64x32xf32>
    %223 = vector.extract_strided_slice %178 {offsets = [128, 0], sizes = [64, 128], strides = [1, 1]} : vector<512x128xf32> to vector<64x128xf32>
    %224 = arith.truncf %222 : vector<64x32xf32> to vector<64x32xbf16>
    %cst_45 = arith.constant dense<0.000000e+00> : vector<64x128xf32>
    %225 = tpu.matmul %224, %174, %cst_45 {dimension_numbers = #tpu.dot_dimension_numbers<[1], [0], [0], [1], [0, 0, 1, 1], [], []>} : vector<64x32xbf16>, vector<32x128xbf16>, vector<64x128xf32> -> vector<64x128xf32>
    %226 = arith.addf %223, %225 : vector<64x128xf32>
    %227 = vector.extract_strided_slice %226 {offsets = [0, 0], sizes = [64, 96], strides = [1, 1]} : vector<64x128xf32> to vector<64x96xf32>
    %228 = arith.negf %227 : vector<64x96xf32>
    %229 = math.exp %228 : vector<64x96xf32>
    %cst_46 = arith.constant 1.000000e+00 : f32
    %230 = vector.broadcast %cst_46 : f32 to vector<64x96xf32>
    %231 = arith.addf %230, %229 : vector<64x96xf32>
    %232 = arith.divf %230, %231 : vector<64x96xf32>
    %233 = vector.extract_strided_slice %226 {offsets = [0, 96], sizes = [64, 32], strides = [1, 1]} : vector<64x128xf32> to vector<64x32xf32>
    %234 = math.tanh %233 : vector<64x32xf32>
    %235 = vector.extract_strided_slice %232 {offsets = [0, 32], sizes = [64, 32], strides = [1, 1]} : vector<64x96xf32> to vector<64x32xf32>
    %236 = arith.mulf %235, %219 : vector<64x32xf32>
    %237 = vector.extract_strided_slice %232 {offsets = [0, 0], sizes = [64, 32], strides = [1, 1]} : vector<64x96xf32> to vector<64x32xf32>
    %238 = arith.mulf %237, %234 : vector<64x32xf32>
    %239 = arith.addf %236, %238 : vector<64x32xf32>
    %240 = vector.extract_strided_slice %232 {offsets = [0, 64], sizes = [64, 32], strides = [1, 1]} : vector<64x96xf32> to vector<64x32xf32>
    %241 = math.tanh %239 : vector<64x32xf32>
    %242 = arith.mulf %240, %241 : vector<64x32xf32>
    %243 = vector.extract_strided_slice %178 {offsets = [192, 0], sizes = [64, 128], strides = [1, 1]} : vector<512x128xf32> to vector<64x128xf32>
    %244 = arith.truncf %242 : vector<64x32xf32> to vector<64x32xbf16>
    %cst_47 = arith.constant dense<0.000000e+00> : vector<64x128xf32>
    %245 = tpu.matmul %244, %174, %cst_47 {dimension_numbers = #tpu.dot_dimension_numbers<[1], [0], [0], [1], [0, 0, 1, 1], [], []>} : vector<64x32xbf16>, vector<32x128xbf16>, vector<64x128xf32> -> vector<64x128xf32>
    %246 = arith.addf %243, %245 : vector<64x128xf32>
    %247 = vector.extract_strided_slice %246 {offsets = [0, 0], sizes = [64, 96], strides = [1, 1]} : vector<64x128xf32> to vector<64x96xf32>
    %248 = arith.negf %247 : vector<64x96xf32>
    %249 = math.exp %248 : vector<64x96xf32>
    %cst_48 = arith.constant 1.000000e+00 : f32
    %250 = vector.broadcast %cst_48 : f32 to vector<64x96xf32>
    %251 = arith.addf %250, %249 : vector<64x96xf32>
    %252 = arith.divf %250, %251 : vector<64x96xf32>
    %253 = vector.extract_strided_slice %246 {offsets = [0, 96], sizes = [64, 32], strides = [1, 1]} : vector<64x128xf32> to vector<64x32xf32>
    %254 = math.tanh %253 : vector<64x32xf32>
    %255 = vector.extract_strided_slice %252 {offsets = [0, 32], sizes = [64, 32], strides = [1, 1]} : vector<64x96xf32> to vector<64x32xf32>
    %256 = arith.mulf %255, %239 : vector<64x32xf32>
    %257 = vector.extract_strided_slice %252 {offsets = [0, 0], sizes = [64, 32], strides = [1, 1]} : vector<64x96xf32> to vector<64x32xf32>
    %258 = arith.mulf %257, %254 : vector<64x32xf32>
    %259 = arith.addf %256, %258 : vector<64x32xf32>
    %260 = vector.extract_strided_slice %252 {offsets = [0, 64], sizes = [64, 32], strides = [1, 1]} : vector<64x96xf32> to vector<64x32xf32>
    %261 = math.tanh %259 : vector<64x32xf32>
    %262 = arith.mulf %260, %261 : vector<64x32xf32>
    %263 = vector.extract_strided_slice %178 {offsets = [256, 0], sizes = [64, 128], strides = [1, 1]} : vector<512x128xf32> to vector<64x128xf32>
    %264 = arith.truncf %262 : vector<64x32xf32> to vector<64x32xbf16>
    %cst_49 = arith.constant dense<0.000000e+00> : vector<64x128xf32>
    %265 = tpu.matmul %264, %174, %cst_49 {dimension_numbers = #tpu.dot_dimension_numbers<[1], [0], [0], [1], [0, 0, 1, 1], [], []>} : vector<64x32xbf16>, vector<32x128xbf16>, vector<64x128xf32> -> vector<64x128xf32>
    %266 = arith.addf %263, %265 : vector<64x128xf32>
    %267 = vector.extract_strided_slice %266 {offsets = [0, 0], sizes = [64, 96], strides = [1, 1]} : vector<64x128xf32> to vector<64x96xf32>
    %268 = arith.negf %267 : vector<64x96xf32>
    %269 = math.exp %268 : vector<64x96xf32>
    %cst_50 = arith.constant 1.000000e+00 : f32
    %270 = vector.broadcast %cst_50 : f32 to vector<64x96xf32>
    %271 = arith.addf %270, %269 : vector<64x96xf32>
    %272 = arith.divf %270, %271 : vector<64x96xf32>
    %273 = vector.extract_strided_slice %266 {offsets = [0, 96], sizes = [64, 32], strides = [1, 1]} : vector<64x128xf32> to vector<64x32xf32>
    %274 = math.tanh %273 : vector<64x32xf32>
    %275 = vector.extract_strided_slice %272 {offsets = [0, 32], sizes = [64, 32], strides = [1, 1]} : vector<64x96xf32> to vector<64x32xf32>
    %276 = arith.mulf %275, %259 : vector<64x32xf32>
    %277 = vector.extract_strided_slice %272 {offsets = [0, 0], sizes = [64, 32], strides = [1, 1]} : vector<64x96xf32> to vector<64x32xf32>
    %278 = arith.mulf %277, %274 : vector<64x32xf32>
    %279 = arith.addf %276, %278 : vector<64x32xf32>
    %280 = vector.extract_strided_slice %272 {offsets = [0, 64], sizes = [64, 32], strides = [1, 1]} : vector<64x96xf32> to vector<64x32xf32>
    %281 = math.tanh %279 : vector<64x32xf32>
    %282 = arith.mulf %280, %281 : vector<64x32xf32>
    %283 = vector.extract_strided_slice %178 {offsets = [320, 0], sizes = [64, 128], strides = [1, 1]} : vector<512x128xf32> to vector<64x128xf32>
    %284 = arith.truncf %282 : vector<64x32xf32> to vector<64x32xbf16>
    %cst_51 = arith.constant dense<0.000000e+00> : vector<64x128xf32>
    %285 = tpu.matmul %284, %174, %cst_51 {dimension_numbers = #tpu.dot_dimension_numbers<[1], [0], [0], [1], [0, 0, 1, 1], [], []>} : vector<64x32xbf16>, vector<32x128xbf16>, vector<64x128xf32> -> vector<64x128xf32>
    %286 = arith.addf %283, %285 : vector<64x128xf32>
    %287 = vector.extract_strided_slice %286 {offsets = [0, 0], sizes = [64, 96], strides = [1, 1]} : vector<64x128xf32> to vector<64x96xf32>
    %288 = arith.negf %287 : vector<64x96xf32>
    %289 = math.exp %288 : vector<64x96xf32>
    %cst_52 = arith.constant 1.000000e+00 : f32
    %290 = vector.broadcast %cst_52 : f32 to vector<64x96xf32>
    %291 = arith.addf %290, %289 : vector<64x96xf32>
    %292 = arith.divf %290, %291 : vector<64x96xf32>
    %293 = vector.extract_strided_slice %286 {offsets = [0, 96], sizes = [64, 32], strides = [1, 1]} : vector<64x128xf32> to vector<64x32xf32>
    %294 = math.tanh %293 : vector<64x32xf32>
    %295 = vector.extract_strided_slice %292 {offsets = [0, 32], sizes = [64, 32], strides = [1, 1]} : vector<64x96xf32> to vector<64x32xf32>
    %296 = arith.mulf %295, %279 : vector<64x32xf32>
    %297 = vector.extract_strided_slice %292 {offsets = [0, 0], sizes = [64, 32], strides = [1, 1]} : vector<64x96xf32> to vector<64x32xf32>
    %298 = arith.mulf %297, %294 : vector<64x32xf32>
    %299 = arith.addf %296, %298 : vector<64x32xf32>
    %300 = vector.extract_strided_slice %292 {offsets = [0, 64], sizes = [64, 32], strides = [1, 1]} : vector<64x96xf32> to vector<64x32xf32>
    %301 = math.tanh %299 : vector<64x32xf32>
    %302 = arith.mulf %300, %301 : vector<64x32xf32>
    %303 = vector.extract_strided_slice %178 {offsets = [384, 0], sizes = [64, 128], strides = [1, 1]} : vector<512x128xf32> to vector<64x128xf32>
    %304 = arith.truncf %302 : vector<64x32xf32> to vector<64x32xbf16>
    %cst_53 = arith.constant dense<0.000000e+00> : vector<64x128xf32>
    %305 = tpu.matmul %304, %174, %cst_53 {dimension_numbers = #tpu.dot_dimension_numbers<[1], [0], [0], [1], [0, 0, 1, 1], [], []>} : vector<64x32xbf16>, vector<32x128xbf16>, vector<64x128xf32> -> vector<64x128xf32>
    %306 = arith.addf %303, %305 : vector<64x128xf32>
    %307 = vector.extract_strided_slice %306 {offsets = [0, 0], sizes = [64, 96], strides = [1, 1]} : vector<64x128xf32> to vector<64x96xf32>
    %308 = arith.negf %307 : vector<64x96xf32>
    %309 = math.exp %308 : vector<64x96xf32>
    %cst_54 = arith.constant 1.000000e+00 : f32
    %310 = vector.broadcast %cst_54 : f32 to vector<64x96xf32>
    %311 = arith.addf %310, %309 : vector<64x96xf32>
    %312 = arith.divf %310, %311 : vector<64x96xf32>
    %313 = vector.extract_strided_slice %306 {offsets = [0, 96], sizes = [64, 32], strides = [1, 1]} : vector<64x128xf32> to vector<64x32xf32>
    %314 = math.tanh %313 : vector<64x32xf32>
    %315 = vector.extract_strided_slice %312 {offsets = [0, 32], sizes = [64, 32], strides = [1, 1]} : vector<64x96xf32> to vector<64x32xf32>
    %316 = arith.mulf %315, %299 : vector<64x32xf32>
    %317 = vector.extract_strided_slice %312 {offsets = [0, 0], sizes = [64, 32], strides = [1, 1]} : vector<64x96xf32> to vector<64x32xf32>
    %318 = arith.mulf %317, %314 : vector<64x32xf32>
    %319 = arith.addf %316, %318 : vector<64x32xf32>
    %320 = vector.extract_strided_slice %312 {offsets = [0, 64], sizes = [64, 32], strides = [1, 1]} : vector<64x96xf32> to vector<64x32xf32>
    %321 = math.tanh %319 : vector<64x32xf32>
    %322 = arith.mulf %320, %321 : vector<64x32xf32>
    %323 = vector.extract_strided_slice %178 {offsets = [448, 0], sizes = [64, 128], strides = [1, 1]} : vector<512x128xf32> to vector<64x128xf32>
    %324 = arith.truncf %322 : vector<64x32xf32> to vector<64x32xbf16>
    %cst_55 = arith.constant dense<0.000000e+00> : vector<64x128xf32>
    %325 = tpu.matmul %324, %174, %cst_55 {dimension_numbers = #tpu.dot_dimension_numbers<[1], [0], [0], [1], [0, 0, 1, 1], [], []>} : vector<64x32xbf16>, vector<32x128xbf16>, vector<64x128xf32> -> vector<64x128xf32>
    %326 = arith.addf %323, %325 : vector<64x128xf32>
    %327 = vector.extract_strided_slice %326 {offsets = [0, 0], sizes = [64, 96], strides = [1, 1]} : vector<64x128xf32> to vector<64x96xf32>
    %328 = arith.negf %327 : vector<64x96xf32>
    %329 = math.exp %328 : vector<64x96xf32>
    %cst_56 = arith.constant 1.000000e+00 : f32
    %330 = vector.broadcast %cst_56 : f32 to vector<64x96xf32>
    %331 = arith.addf %330, %329 : vector<64x96xf32>
    %332 = arith.divf %330, %331 : vector<64x96xf32>
    %333 = vector.extract_strided_slice %326 {offsets = [0, 96], sizes = [64, 32], strides = [1, 1]} : vector<64x128xf32> to vector<64x32xf32>
    %334 = math.tanh %333 : vector<64x32xf32>
    %335 = vector.extract_strided_slice %332 {offsets = [0, 32], sizes = [64, 32], strides = [1, 1]} : vector<64x96xf32> to vector<64x32xf32>
    %336 = arith.mulf %335, %319 : vector<64x32xf32>
    %337 = vector.extract_strided_slice %332 {offsets = [0, 0], sizes = [64, 32], strides = [1, 1]} : vector<64x96xf32> to vector<64x32xf32>
    %338 = arith.mulf %337, %334 : vector<64x32xf32>
    %339 = arith.addf %336, %338 : vector<64x32xf32>
    %340 = vector.extract_strided_slice %332 {offsets = [0, 64], sizes = [64, 32], strides = [1, 1]} : vector<64x96xf32> to vector<64x32xf32>
    %341 = math.tanh %339 : vector<64x32xf32>
    %342 = arith.mulf %340, %341 : vector<64x32xf32>
    %343 = tpu.concatenate %170, %342 in 0 : vector<64x32xf32>, vector<64x32xf32> -> vector<128x32xf32>
    %c0_57 = arith.constant 0 : index
    %c0_58 = arith.constant 0 : index
    %344 = vector.load %arg9[%c0_57, %c0_58] : memref<64x4xbf16, #tpu.memory_space<vmem>>, vector<64x4xbf16>
    %c0_59 = arith.constant 0 : index
    %c0_60 = arith.constant 0 : index
    %345 = vector.load %arg10[%c0_59, %c0_60] : memref<1x4xf32, #tpu.memory_space<vmem>>, vector<1x4xf32>
    %c0_61 = arith.constant 0 : index
    %c0_62 = arith.constant 0 : index
    %c0_63 = arith.constant 0 : index
    %346 = vector.load %arg11[%c0_61, %c0_62, %c0_63] : memref<2x64x128xf32, #tpu.memory_space<vmem>>, vector<1x64x128xf32>
    %347 = vector.shape_cast %346 : vector<1x64x128xf32> to vector<64x128xf32>
    %cst_64 = arith.constant dense<0.000000e+00> : vector<64x32xf32>
    %348 = tpu.matmul %347, %343, %cst_64 {dimension_numbers = #tpu.dot_dimension_numbers<[1], [0], [0], [1], [0, 0, 1, 1], [], []>} : vector<64x128xf32>, vector<128x32xf32>, vector<64x32xf32> -> vector<64x32xf32>
    %349 = arith.truncf %348 : vector<64x32xf32> to vector<64x32xbf16>
    %350 = vector.extract_strided_slice %344 {offsets = [0, 0], sizes = [32, 4], strides = [1, 1]} : vector<64x4xbf16> to vector<32x4xbf16>
    %cst_65 = arith.constant dense<0.000000e+00> : vector<64x4xf32>
    %351 = tpu.matmul %349, %350, %cst_65 {dimension_numbers = #tpu.dot_dimension_numbers<[1], [0], [0], [1], [0, 0, 1, 1], [], []>} : vector<64x32xbf16>, vector<32x4xbf16>, vector<64x4xf32> -> vector<64x4xf32>
    %352 = vector.broadcast %345 : vector<1x4xf32> to vector<64x4xf32>
    %353 = arith.addf %352, %351 : vector<64x4xf32>
    %c1_66 = arith.constant 1 : index
    %c0_67 = arith.constant 0 : index
    %c0_68 = arith.constant 0 : index
    %354 = vector.load %arg11[%c1_66, %c0_67, %c0_68] : memref<2x64x128xf32, #tpu.memory_space<vmem>>, vector<1x64x128xf32>
    %355 = vector.shape_cast %354 : vector<1x64x128xf32> to vector<64x128xf32>
    %cst_69 = arith.constant dense<0.000000e+00> : vector<64x32xf32>
    %356 = tpu.matmul %355, %343, %cst_69 {dimension_numbers = #tpu.dot_dimension_numbers<[1], [0], [0], [1], [0, 0, 1, 1], [], []>} : vector<64x128xf32>, vector<128x32xf32>, vector<64x32xf32> -> vector<64x32xf32>
    %357 = arith.truncf %356 : vector<64x32xf32> to vector<64x32xbf16>
    %358 = vector.extract_strided_slice %344 {offsets = [32, 0], sizes = [32, 4], strides = [1, 1]} : vector<64x4xbf16> to vector<32x4xbf16>
    %cst_70 = arith.constant dense<0.000000e+00> : vector<64x4xf32>
    %359 = tpu.matmul %357, %358, %cst_70 {dimension_numbers = #tpu.dot_dimension_numbers<[1], [0], [0], [1], [0, 0, 1, 1], [], []>} : vector<64x32xbf16>, vector<32x4xbf16>, vector<64x4xf32> -> vector<64x4xf32>
    %360 = arith.addf %353, %359 : vector<64x4xf32>
    %c0_71 = arith.constant 0 : index
    %c0_72 = arith.constant 0 : index
    %361 = vector.load %arg12[%c0_71, %c0_72] : memref<64x4xf32, #tpu.memory_space<vmem>>, vector<64x4xf32>
    tpu.vector_store %arg12[%c0_71, %c0_72], %360 {strides = array<i32>} : memref<64x4xf32, #tpu.memory_space<vmem>>, vector<64x4xf32>,
    return
  }
}

</mosaic_0001>

<llo_original>
// kernel: lstm2_forward.1
$region0: #{lstm2_forward.1}
  #allocation0 [shape = 'u32[]', space=smem, size = 0x4, offset = 0x4, fixed_abs, tag = 'smem constant byte address 0x4 - core index']
  #allocation1 [shape = 'u32[144,128]{1,0:T(1,128)}', space=vmem, size = 0x12000, scoped, tag = 'internal scratch']
  %s0 = inlined_call_operand.vmem [shape: bf16[512,4], index: 0, kind: input, shape index: {}]
  %s1 = inlined_call_operand.vmem [shape: f32[2,64,32], index: 1, kind: input, shape index: {}]
  %s2 = inlined_call_operand.vmem [shape: f32[2,64,32], index: 2, kind: input, shape index: {}]
  %s3 = inlined_call_operand.vmem [shape: bf16[4,128], index: 3, kind: input, shape index: {}]
  %s4 = inlined_call_operand.vmem [shape: bf16[32,128], index: 4, kind: input, shape index: {}]
  %s5 = inlined_call_operand.vmem [shape: f32[1,128], index: 5, kind: input, shape index: {}]
  %s6 = inlined_call_operand.vmem [shape: bf16[32,128], index: 6, kind: input, shape index: {}]
  %s7 = inlined_call_operand.vmem [shape: bf16[32,128], index: 7, kind: input, shape index: {}]
  %s8 = inlined_call_operand.vmem [shape: f32[1,128], index: 8, kind: input, shape index: {}]
  %s9 = inlined_call_operand.vmem [shape: bf16[64,4], index: 9, kind: input, shape index: {}]
  %s10 = inlined_call_operand.vmem [shape: f32[1,4], index: 10, kind: input, shape index: {}]
  %s11 = inlined_call_operand.vmem [shape: f32[2,64,128], index: 11, kind: input, shape index: {}]
  %s12 = inlined_call_operand.vmem [shape: f32[64,4], index: 12, kind: output, shape index: {}]
  %s13 = sld [smem:[#allocation0]]
  $region58: #{lstm2_forward.1} parent=0
    _
  %s15 = ssub.s32 1, %s13
  %s16 = scalar_select 0, %s15, %s13
  // Predicated region
  $region2: #{lstm2_forward.1} parent=0 // pred_check
    _
  $region3: #{lstm2_forward.1} parent=0 // pred_check_branch
    %18 = sbr.rel (0) target = $region5
  $region4: #{lstm2_forward.1} parent=0 // pred_region
    _
  $region5: #{lstm2_forward.1} parent=0 // pred_fallthru
    _
  // Predicated region
  $region6: #{lstm2_forward.1} parent=0 // pred_check
    _
  $region7: #{lstm2_forward.1} parent=0 // pred_check_branch
    %20 = sbr.rel (0) target = $region9
  $region8: #{lstm2_forward.1} parent=0 // pred_region
    _
  $region9: #{lstm2_forward.1} parent=0 // pred_fallthru
    _
  // Predicated region
  $region10: #{lstm2_forward.1} parent=0 // pred_check
    _
  $region11: #{lstm2_forward.1} parent=0 // pred_check_branch
    %22 = sbr.rel (0) target = $region13
  $region12: #{lstm2_forward.1} parent=0 // pred_region
    _
  $region13: #{lstm2_forward.1} parent=0 // pred_fallthru
    _
  // Predicated region
  $region14: #{lstm2_forward.1} parent=0 // pred_check
    _
  $region15: #{lstm2_forward.1} parent=0 // pred_check_branch
    %24 = sbr.rel (0) target = $region17
  $region16: #{lstm2_forward.1} parent=0 // pred_region
    _
  $region17: #{lstm2_forward.1} parent=0 // pred_fallthru
    _
  // Predicated region
  $region18: #{lstm2_forward.1} parent=0 // pred_check
    _
  $region19: #{lstm2_forward.1} parent=0 // pred_check_branch
    %26 = sbr.rel (0) target = $region21
  $region20: #{lstm2_forward.1} parent=0 // pred_region
    _
  $region21: #{lstm2_forward.1} parent=0 // pred_fallthru
    _
  // Predicated region
  $region22: #{lstm2_forward.1} parent=0 // pred_check
    _
  $region23: #{lstm2_forward.1} parent=0 // pred_check_branch
    %28 = sbr.rel (0) target = $region25
  $region24: #{lstm2_forward.1} parent=0 // pred_region
    _
  $region25: #{lstm2_forward.1} parent=0 // pred_fallthru
    _
  // Predicated region
  $region26: #{lstm2_forward.1} parent=0 // pred_check
    _
  $region27: #{lstm2_forward.1} parent=0 // pred_check_branch
    %30 = sbr.rel (0) target = $region29
  $region28: #{lstm2_forward.1} parent=0 // pred_region
    _
  $region29: #{lstm2_forward.1} parent=0 // pred_fallthru
    _
  // Predicated region
  $region30: #{lstm2_forward.1} parent=0 // pred_check
    _
  $region31: #{lstm2_forward.1} parent=0 // pred_check_branch
    %32 = sbr.rel (0) target = $region33
  $region32: #{lstm2_forward.1} parent=0 // pred_region
    _
  $region33: #{lstm2_forward.1} parent=0 // pred_fallthru
    _
  // Predicated region
  $region34: #{lstm2_forward.1} parent=0 // pred_check
    _
  $region35: #{lstm2_forward.1} parent=0 // pred_check_branch
    %34 = sbr.rel (0) target = $region37
  $region36: #{lstm2_forward.1} parent=0 // pred_region
    _
  $region37: #{lstm2_forward.1} parent=0 // pred_fallthru
    _
  // Predicated region
  $region38: #{lstm2_forward.1} parent=0 // pred_check
    _
  $region39: #{lstm2_forward.1} parent=0 // pred_check_branch
    %36 = sbr.rel (0) target = $region41
  $region40: #{lstm2_forward.1} parent=0 // pred_region
    _
  $region41: #{lstm2_forward.1} parent=0 // pred_fallthru
    _
  // Predicated region
  $region42: #{lstm2_forward.1} parent=0 // pred_check
    _
  $region43: #{lstm2_forward.1} parent=0 // pred_check_branch
    %38 = sbr.rel (0) target = $region45
  $region44: #{lstm2_forward.1} parent=0 // pred_region
    _
  $region45: #{lstm2_forward.1} parent=0 // pred_fallthru
    _
  // Predicated region
  $region46: #{lstm2_forward.1} parent=0 // pred_check
    _
  $region47: #{lstm2_forward.1} parent=0 // pred_check_branch
    %40 = sbr.rel (0) target = $region49
  $region48: #{lstm2_forward.1} parent=0 // pred_region
    _
  $region49: #{lstm2_forward.1} parent=0 // pred_fallthru
    _
  %v42 = vld [vmem:[%s0] sm:$0xf]
  %v43 = vld [vmem:[%s0 + $0x4] sm:$0xf]
  %v44 = vld [vmem:[%s0 + $0x8] sm:$0xf]
  %v45 = vld [vmem:[%s0 + $0xc] sm:$0xf]
  %v46 = vld [vmem:[%s0 + $0x10] sm:$0xf]
  %v47 = vld [vmem:[%s0 + $0x14] sm:$0xf]
  %v48 = vld [vmem:[%s0 + $0x18] sm:$0xf]
  %v49 = vld [vmem:[%s0 + $0x1c] sm:$0xf]
  %v50 = vld [vmem:[%s0 + $0x20] sm:$0xf]
  %v51 = vld [vmem:[%s0 + $0x24] sm:$0xf]
  %v52 = vld [vmem:[%s0 + $0x28] sm:$0xf]
  %v53 = vld [vmem:[%s0 + $0x2c] sm:$0xf]
  %v54 = vld [vmem:[%s0 + $0x30] sm:$0xf]
  %v55 = vld [vmem:[%s0 + $0x34] sm:$0xf]
  %v56 = vld [vmem:[%s0 + $0x38] sm:$0xf]
  %v57 = vld [vmem:[%s0 + $0x3c] sm:$0xf]
  %v58 = vld [vmem:[%s0 + $0x40] sm:$0xf]
  %v59 = vld [vmem:[%s0 + $0x44] sm:$0xf]
  %v60 = vld [vmem:[%s0 + $0x48] sm:$0xf]
  %v61 = vld [vmem:[%s0 + $0x4c] sm:$0xf]
  %v62 = vld [vmem:[%s0 + $0x50] sm:$0xf]
  %v63 = vld [vmem:[%s0 + $0x54] sm:$0xf]
  %v64 = vld [vmem:[%s0 + $0x58] sm:$0xf]
  %v65 = vld [vmem:[%s0 + $0x5c] sm:$0xf]
  %v66 = vld [vmem:[%s0 + $0x60] sm:$0xf]
  %v67 = vld [vmem:[%s0 + $0x64] sm:$0xf]
  %v68 = vld [vmem:[%s0 + $0x68] sm:$0xf]
  %v69 = vld [vmem:[%s0 + $0x6c] sm:$0xf]
  %v70 = vld [vmem:[%s0 + $0x70] sm:$0xf]
  %v71 = vld [vmem:[%s0 + $0x74] sm:$0xf]
  %v72 = vld [vmem:[%s0 + $0x78] sm:$0xf]
  %v73 = vld [vmem:[%s0 + $0x7c] sm:$0xf]
  %v74 = vld [vmem:[%s0 + $0x80] sm:$0xf]
  %v75 = vld [vmem:[%s0 + $0x84] sm:$0xf]
  %v76 = vld [vmem:[%s0 + $0x88] sm:$0xf]
  %v77 = vld [vmem:[%s0 + $0x8c] sm:$0xf]
  %v78 = vld [vmem:[%s0 + $0x90] sm:$0xf]
  %v79 = vld [vmem:[%s0 + $0x94] sm:$0xf]
  %v80 = vld [vmem:[%s0 + $0x98] sm:$0xf]
  %v81 = vld [vmem:[%s0 + $0x9c] sm:$0xf]
  %v82 = vld [vmem:[%s0 + $0xa0] sm:$0xf]
  %v83 = vld [vmem:[%s0 + $0xa4] sm:$0xf]
  %v84 = vld [vmem:[%s0 + $0xa8] sm:$0xf]
  %v85 = vld [vmem:[%s0 + $0xac] sm:$0xf]
  %v86 = vld [vmem:[%s0 + $0xb0] sm:$0xf]
  %v87 = vld [vmem:[%s0 + $0xb4] sm:$0xf]
  %v88 = vld [vmem:[%s0 + $0xb8] sm:$0xf]
  %v89 = vld [vmem:[%s0 + $0xbc] sm:$0xf]
  %v90 = vld [vmem:[%s0 + $0xc0] sm:$0xf]
  %v91 = vld [vmem:[%s0 + $0xc4] sm:$0xf]
  %v92 = vld [vmem:[%s0 + $0xc8] sm:$0xf]
  %v93 = vld [vmem:[%s0 + $0xcc] sm:$0xf]
  %v94 = vld [vmem:[%s0 + $0xd0] sm:$0xf]
  %v95 = vld [vmem:[%s0 + $0xd4] sm:$0xf]
  %v96 = vld [vmem:[%s0 + $0xd8] sm:$0xf]
  %v97 = vld [vmem:[%s0 + $0xdc] sm:$0xf]
  %v98 = vld [vmem:[%s0 + $0xe0] sm:$0xf]
  %v99 = vld [vmem:[%s0 + $0xe4] sm:$0xf]
  %v100 = vld [vmem:[%s0 + $0xe8] sm:$0xf]
  %v101 = vld [vmem:[%s0 + $0xec] sm:$0xf]
  %v102 = vld [vmem:[%s0 + $0xf0] sm:$0xf]
  %v103 = vld [vmem:[%s0 + $0xf4] sm:$0xf]
  %v104 = vld [vmem:[%s0 + $0xf8] sm:$0xf]
  %v105 = vld [vmem:[%s0 + $0xfc] sm:$0xf]
  %v106 = vld [vmem:[%s3] sm:$0x3]
  %v107 = vld [vmem:[%s4] sm:$0xf]
  %v108 = vld [vmem:[%s4 + $0x4] sm:$0xf]
  %v109 = vld [vmem:[%s4 + $0x8] sm:$0xf]
  %v110 = vld [vmem:[%s4 + $0xc] sm:$0xf]
  %v111 = vld [vmem:[%s5] sm:$0x1]
  %v113 = vlaneseq
  %v114 = vshrl.u32 %v113, 7
  %v115 = vsub.s32 0, %v114
  %v116 = vrot.slane %v111, %v115
  %v182 = vunpack.c.l.b16 %v42
  %v183 = vunpack.c.l.b16 %v43
  %v184 = vunpack.c.l.b16 %v44
  %v185 = vunpack.c.l.b16 %v45
  %v186 = vunpack.c.l.b16 %v46
  %v187 = vunpack.c.l.b16 %v47
  %v188 = vunpack.c.l.b16 %v48
  %v189 = vunpack.c.l.b16 %v49
  %v190 = vunpack.c.l.b16 %v50
  %v191 = vunpack.c.l.b16 %v51
  %v192 = vunpack.c.l.b16 %v52
  %v193 = vunpack.c.l.b16 %v53
  %v194 = vunpack.c.l.b16 %v54
  %v195 = vunpack.c.l.b16 %v55
  %v196 = vunpack.c.l.b16 %v56
  %v197 = vunpack.c.l.b16 %v57
  %v198 = vunpack.c.l.b16 %v58
  %v199 = vunpack.c.l.b16 %v59
  %v200 = vunpack.c.l.b16 %v60
  %v201 = vunpack.c.l.b16 %v61
  %v202 = vunpack.c.l.b16 %v62
  %v203 = vunpack.c.l.b16 %v63
  %v204 = vunpack.c.l.b16 %v64
  %v205 = vunpack.c.l.b16 %v65
  %v206 = vunpack.c.l.b16 %v66
  %v207 = vunpack.c.l.b16 %v67
  %v208 = vunpack.c.l.b16 %v68
  %v209 = vunpack.c.l.b16 %v69
  %v210 = vunpack.c.l.b16 %v70
  %v211 = vunpack.c.l.b16 %v71
  %v212 = vunpack.c.l.b16 %v72
  %v213 = vunpack.c.l.b16 %v73
  %v214 = vunpack.c.l.b16 %v74
  %v215 = vunpack.c.l.b16 %v75
  %v216 = vunpack.c.l.b16 %v76
  %v217 = vunpack.c.l.b16 %v77
  %v218 = vunpack.c.l.b16 %v78
  %v219 = vunpack.c.l.b16 %v79
  %v220 = vunpack.c.l.b16 %v80
  %v221 = vunpack.c.l.b16 %v81
  %v222 = vunpack.c.l.b16 %v82
  %v223 = vunpack.c.l.b16 %v83
  %v224 = vunpack.c.l.b16 %v84
  %v225 = vunpack.c.l.b16 %v85
  %v226 = vunpack.c.l.b16 %v86
  %v227 = vunpack.c.l.b16 %v87
  %v228 = vunpack.c.l.b16 %v88
  %v229 = vunpack.c.l.b16 %v89
  %v230 = vunpack.c.l.b16 %v90
  %v231 = vunpack.c.l.b16 %v91
  %v232 = vunpack.c.l.b16 %v92
  %v233 = vunpack.c.l.b16 %v93
  %v234 = vunpack.c.l.b16 %v94
  %v235 = vunpack.c.l.b16 %v95
  %v236 = vunpack.c.l.b16 %v96
  %v237 = vunpack.c.l.b16 %v97
  %v238 = vunpack.c.l.b16 %v98
  %v239 = vunpack.c.l.b16 %v99
  %v240 = vunpack.c.l.b16 %v100
  %v241 = vunpack.c.l.b16 %v101
  %v242 = vunpack.c.l.b16 %v102
  %v243 = vunpack.c.l.b16 %v103
  %v244 = vunpack.c.l.b16 %v104
  %v245 = vunpack.c.l.b16 %v105
  %v246 = vpack.c.b16 %v183, %v182
  %v247 = vpack.c.b16 %v185, %v184
  %v248 = vpack.c.b16 %v187, %v186
  %v249 = vpack.c.b16 %v189, %v188
  %v250 = vpack.c.b16 %v191, %v190
  %v251 = vpack.c.b16 %v193, %v192
  %v252 = vpack.c.b16 %v195, %v194
  %v253 = vpack.c.b16 %v197, %v196
  %v254 = vpack.c.b16 %v199, %v198
  %v255 = vpack.c.b16 %v201, %v200
  %v256 = vpack.c.b16 %v203, %v202
  %v257 = vpack.c.b16 %v205, %v204
  %v258 = vpack.c.b16 %v207, %v206
  %v259 = vpack.c.b16 %v209, %v208
  %v260 = vpack.c.b16 %v211, %v210
  %v261 = vpack.c.b16 %v213, %v212
  %v262 = vpack.c.b16 %v215, %v214
  %v263 = vpack.c.b16 %v217, %v216
  %v264 = vpack.c.b16 %v219, %v218
  %v265 = vpack.c.b16 %v221, %v220
  %v266 = vpack.c.b16 %v223, %v222
  %v267 = vpack.c.b16 %v225, %v224
  %v268 = vpack.c.b16 %v227, %v226
  %v269 = vpack.c.b16 %v229, %v228
  %v270 = vpack.c.b16 %v231, %v230
  %v271 = vpack.c.b16 %v233, %v232
  %v272 = vpack.c.b16 %v235, %v234
  %v273 = vpack.c.b16 %v237, %v236
  %v274 = vpack.c.b16 %v239, %v238
  %v275 = vpack.c.b16 %v241, %v240
  %v276 = vpack.c.b16 %v243, %v242
  %v277 = vpack.c.b16 %v245, %v244
  %vm278 = vcmask 31744
  %v280 = vsel %vm278, %v246, 0
  %v283 = vsel %vm278, %v247, 0
  %v286 = vsel %vm278, %v248, 0
  %v289 = vsel %vm278, %v249, 0
  %v292 = vsel %vm278, %v250, 0
  %v295 = vsel %vm278, %v251, 0
  %v298 = vsel %vm278, %v252, 0
  %v301 = vsel %vm278, %v253, 0
  %v304 = vsel %vm278, %v254, 0
  %v307 = vsel %vm278, %v255, 0
  %v310 = vsel %vm278, %v256, 0
  %v313 = vsel %vm278, %v257, 0
  %v316 = vsel %vm278, %v258, 0
  %v319 = vsel %vm278, %v259, 0
  %v322 = vsel %vm278, %v260, 0
  %v325 = vsel %vm278, %v261, 0
  %v328 = vsel %vm278, %v262, 0
  %v331 = vsel %vm278, %v263, 0
  %v334 = vsel %vm278, %v264, 0
  %v337 = vsel %vm278, %v265, 0
  %v340 = vsel %vm278, %v266, 0
  %v343 = vsel %vm278, %v267, 0
  %v346 = vsel %vm278, %v268, 0
  %v349 = vsel %vm278, %v269, 0
  %v352 = vsel %vm278, %v270, 0
  %v355 = vsel %vm278, %v271, 0
  %v358 = vsel %vm278, %v272, 0
  %v361 = vsel %vm278, %v273, 0
  %v364 = vsel %vm278, %v274, 0
  %v367 = vsel %vm278, %v275, 0
  %v370 = vsel %vm278, %v276, 0
  %v373 = vsel %vm278, %v277, 0
  %vm375 = vcmask 1041408
  %v377 = vsel %vm375, %v106, 0
  %379 = vmatprep.subr.bf16.mxu0 0
  %380 = vmatpush1.bf16.msra.mxu0 %v377
  %381 = vmatprep.subr.bf16.mxu0 0
  %382 = vmatpush1.bf16.msra.mxu0 0
  %383 = vmatprep.subr.bf16.mxu0 0
  %384 = vmatpush1.bf16.msra.mxu0 0
  %385 = vmatprep.subr.bf16.mxu0 0
  %386 = vmatpush1.bf16.msra.mxu0 0
  %387 = vmatprep.subr.bf16.mxu0 0
  %388 = vmatpush1.bf16.msra.mxu0 0
  %389 = vmatprep.subr.bf16.mxu0 0
  %390 = vmatpush1.bf16.msra.mxu0 0
  %391 = vmatprep.subr.bf16.mxu0 0
  %392 = vmatpush1.bf16.msra.mxu0 0
  %393 = vmatprep.subr.bf16.mxu0 0
  %394 = vmatpush1.bf16.msra.mxu0 0
  %395 = vmatprep.subr.bf16.mxu0 0
  %396 = vmatpush1.bf16.msra.mxu0 0
  %397 = vmatprep.subr.bf16.mxu0 0
  %398 = vmatpush1.bf16.msra.mxu0 0
  %399 = vmatprep.subr.bf16.mxu0 0
  %400 = vmatpush1.bf16.msra.mxu0 0
  %401 = vmatprep.subr.bf16.mxu0 0
  %402 = vmatpush1.bf16.msra.mxu0 0
  %403 = vmatprep.subr.bf16.mxu0 0
  %404 = vmatpush1.bf16.msra.mxu0 0
  %405 = vmatprep.subr.bf16.mxu0 0
  %406 = vmatpush1.bf16.msra.mxu0 0
  %407 = vmatprep.subr.bf16.mxu0 0
  %408 = vmatpush1.bf16.msra.mxu0 0
  %409 = vmatprep.subr.bf16.mxu0 0
  %410 = vmatpush1.bf16.msra.mxu0 0
  %411 = vmatprep.mubr.bf16.mxu0 0
  %412 = vmatmul.mubr.bf16.gmra.mrb[0].mxu0 %v280
  %v413 = vpop.f32.mrb[0].mxu0
  %v414 = vadd.f32 %v116, %v413
  %v415 = vpop.f32.mrb[0].mxu0
  %v416 = vpop.f32.mrb[0].mxu0
  %v417 = vadd.f32 %v116, %v416
  %v418 = vpop.f32.mrb[0].mxu0
  %419 = vmatprep.mubr.bf16.mxu0 0
  %420 = vmatmul.mubr.bf16.gmra.mrb[0].mxu0 %v283
  %v421 = vpop.f32.mrb[0].mxu0
  %v422 = vadd.f32 %v116, %v421
  %v423 = vpop.f32.mrb[0].mxu0
  %v424 = vpop.f32.mrb[0].mxu0
  %v425 = vadd.f32 %v116, %v424
  %v426 = vpop.f32.mrb[0].mxu0
  %427 = vmatprep.mubr.bf16.mxu0 0
  %428 = vmatmul.mubr.bf16.gmra.mrb[0].mxu0 %v286
  %v429 = vpop.f32.mrb[0].mxu0
  %v430 = vadd.f32 %v116, %v429
  %v431 = vpop.f32.mrb[0].mxu0
  %v432 = vpop.f32.mrb[0].mxu0
  %v433 = vadd.f32 %v116, %v432
  %v434 = vpop.f32.mrb[0].mxu0
  %435 = vmatprep.mubr.bf16.mxu0 0
  %436 = vmatmul.mubr.bf16.gmra.mrb[0].mxu0 %v289
  %v437 = vpop.f32.mrb[0].mxu0
  %v438 = vadd.f32 %v116, %v437
  %v439 = vpop.f32.mrb[0].mxu0
  %v440 = vpop.f32.mrb[0].mxu0
  %v441 = vadd.f32 %v116, %v440
  %v442 = vpop.f32.mrb[0].mxu0
  %443 = vmatprep.mubr.bf16.mxu0 0
  %444 = vmatmul.mubr.bf16.gmra.mrb[0].mxu0 %v292
  %v445 = vpop.f32.mrb[0].mxu0
  %v446 = vadd.f32 %v116, %v445
  %v447 = vpop.f32.mrb[0].mxu0
  %v448 = vpop.f32.mrb[0].mxu0
  %v449 = vadd.f32 %v116, %v448
  %v450 = vpop.f32.mrb[0].mxu0
  %451 = vmatprep.mubr.bf16.mxu0 0
  %452 = vmatmul.mubr.bf16.gmra.mrb[0].mxu0 %v295
  %v453 = vpop.f32.mrb[0].mxu0
  %v454 = vadd.f32 %v116, %v453
  %v455 = vpop.f32.mrb[0].mxu0
  %v456 = vpop.f32.mrb[0].mxu0
  %v457 = vadd.f32 %v116, %v456
  %v458 = vpop.f32.mrb[0].mxu0
  %459 = vmatprep.mubr.bf16.mxu0 0
  %460 = vmatmul.mubr.bf16.gmra.mrb[0].mxu0 %v298
  %v461 = vpop.f32.mrb[0].mxu0
  %v462 = vadd.f32 %v116, %v461
  %v463 = vpop.f32.mrb[0].mxu0
  %v464 = vpop.f32.mrb[0].mxu0
  %v465 = vadd.f32 %v116, %v464
  %v466 = vpop.f32.mrb[0].mxu0
  %467 = vmatprep.mubr.bf16.mxu0 0
  %468 = vmatmul.mubr.bf16.gmra.mrb[0].mxu0 %v301
  %v469 = vpop.f32.mrb[0].mxu0
  %v470 = vadd.f32 %v116, %v469
  %v471 = vpop.f32.mrb[0].mxu0
  %v472 = vpop.f32.mrb[0].mxu0
  %v473 = vadd.f32 %v116, %v472
  %v474 = vpop.f32.mrb[0].mxu0
  %475 = vmatprep.mubr.bf16.mxu0 0
  %476 = vmatmul.mubr.bf16.gmra.mrb[0].mxu0 %v304
  %v477 = vpop.f32.mrb[0].mxu0
  %v478 = vadd.f32 %v116, %v477
  %v479 = vpop.f32.mrb[0].mxu0
  %v480 = vpop.f32.mrb[0].mxu0
  %v481 = vadd.f32 %v116, %v480
  %v482 = vpop.f32.mrb[0].mxu0
  %483 = vmatprep.mubr.bf16.mxu0 0
  %484 = vmatmul.mubr.bf16.gmra.mrb[0].mxu0 %v307
  %v485 = vpop.f32.mrb[0].mxu0
  %v486 = vadd.f32 %v116, %v485
  %v487 = vpop.f32.mrb[0].mxu0
  %v488 = vpop.f32.mrb[0].mxu0
  %v489 = vadd.f32 %v116, %v488
  %v490 = vpop.f32.mrb[0].mxu0
  %491 = vmatprep.mubr.bf16.mxu0 0
  %492 = vmatmul.mubr.bf16.gmra.mrb[0].mxu0 %v310
  %v493 = vpop.f32.mrb[0].mxu0
  %v494 = vadd.f32 %v116, %v493
  %v495 = vpop.f32.mrb[0].mxu0
  %v496 = vpop.f32.mrb[0].mxu0
  %v497 = vadd.f32 %v116, %v496
  %v498 = vpop.f32.mrb[0].mxu0
  %499 = vmatprep.mubr.bf16.mxu0 0
  %500 = vmatmul.mubr.bf16.gmra.mrb[0].mxu0 %v313
  %v501 = vpop.f32.mrb[0].mxu0
  %v502 = vadd.f32 %v116, %v501
  %v503 = vpop.f32.mrb[0].mxu0
  %v504 = vpop.f32.mrb[0].mxu0
  %v505 = vadd.f32 %v116, %v504
  %v506 = vpop.f32.mrb[0].mxu0
  %507 = vmatprep.mubr.bf16.mxu0 0
  %508 = vmatmul.mubr.bf16.gmra.mrb[0].mxu0 %v316
  %v509 = vpop.f32.mrb[0].mxu0
  %v510 = vadd.f32 %v116, %v509
  %v511 = vpop.f32.mrb[0].mxu0
  %v512 = vpop.f32.mrb[0].mxu0
  %v513 = vadd.f32 %v116, %v512
  %v514 = vpop.f32.mrb[0].mxu0
  %515 = vmatprep.mubr.bf16.mxu0 0
  %516 = vmatmul.mubr.bf16.gmra.mrb[0].mxu0 %v319
  %v517 = vpop.f32.mrb[0].mxu0
  %v518 = vadd.f32 %v116, %v517
  %v519 = vpop.f32.mrb[0].mxu0
  %v520 = vpop.f32.mrb[0].mxu0
  %v521 = vadd.f32 %v116, %v520
  %v522 = vpop.f32.mrb[0].mxu0
  %523 = vmatprep.mubr.bf16.mxu0 0
  %524 = vmatmul.mubr.bf16.gmra.mrb[0].mxu0 %v322
  %v525 = vpop.f32.mrb[0].mxu0
  %v526 = vadd.f32 %v116, %v525
  %v527 = vpop.f32.mrb[0].mxu0
  %v528 = vpop.f32.mrb[0].mxu0
  %v529 = vadd.f32 %v116, %v528
  %v530 = vpop.f32.mrb[0].mxu0
  %531 = vmatprep.mubr.bf16.mxu0 0
  %532 = vmatmul.mubr.bf16.gmra.mrb[0].mxu0 %v325
  %v533 = vpop.f32.mrb[0].mxu0
  %v534 = vadd.f32 %v116, %v533
  %v535 = vpop.f32.mrb[0].mxu0
  %v536 = vpop.f32.mrb[0].mxu0
  %v537 = vadd.f32 %v116, %v536
  %v538 = vpop.f32.mrb[0].mxu0
  %539 = vmatprep.mubr.bf16.mxu0 0
  %540 = vmatmul.mubr.bf16.gmra.mrb[0].mxu0 %v328
  %v541 = vpop.f32.mrb[0].mxu0
  %v542 = vadd.f32 %v116, %v541
  %v543 = vpop.f32.mrb[0].mxu0
  %v544 = vpop.f32.mrb[0].mxu0
  %v545 = vadd.f32 %v116, %v544
  %v546 = vpop.f32.mrb[0].mxu0
  %547 = vmatprep.mubr.bf16.mxu0 0
  %548 = vmatmul.mubr.bf16.gmra.mrb[0].mxu0 %v331
  %v549 = vpop.f32.mrb[0].mxu0
  %v550 = vadd.f32 %v116, %v549
  %v551 = vpop.f32.mrb[0].mxu0
  %v552 = vpop.f32.mrb[0].mxu0
  %v553 = vadd.f32 %v116, %v552
  %v554 = vpop.f32.mrb[0].mxu0
  %555 = vmatprep.mubr.bf16.mxu0 0
  %556 = vmatmul.mubr.bf16.gmra.mrb[0].mxu0 %v334
  %v557 = vpop.f32.mrb[0].mxu0
  %v558 = vadd.f32 %v116, %v557
  %v559 = vpop.f32.mrb[0].mxu0
  %v560 = vpop.f32.mrb[0].mxu0
  %v561 = vadd.f32 %v116, %v560
  %v562 = vpop.f32.mrb[0].mxu0
  %563 = vmatprep.mubr.bf16.mxu0 0
  %564 = vmatmul.mubr.bf16.gmra.mrb[0].mxu0 %v337
  %v565 = vpop.f32.mrb[0].mxu0
  %v566 = vadd.f32 %v116, %v565
  %v567 = vpop.f32.mrb[0].mxu0
  %v568 = vpop.f32.mrb[0].mxu0
  %v569 = vadd.f32 %v116, %v568
  %v570 = vpop.f32.mrb[0].mxu0
  %571 = vmatprep.mubr.bf16.mxu0 0
  %572 = vmatmul.mubr.bf16.gmra.mrb[0].mxu0 %v340
  %v573 = vpop.f32.mrb[0].mxu0
  %v574 = vadd.f32 %v116, %v573
  %v575 = vpop.f32.mrb[0].mxu0
  %v576 = vpop.f32.mrb[0].mxu0
  %v577 = vadd.f32 %v116, %v576
  %v578 = vpop.f32.mrb[0].mxu0
  %579 = vmatprep.mubr.bf16.mxu0 0
  %580 = vmatmul.mubr.bf16.gmra.mrb[0].mxu0 %v343
  %v581 = vpop.f32.mrb[0].mxu0
  %v582 = vadd.f32 %v116, %v581
  %v583 = vpop.f32.mrb[0].mxu0
  %v584 = vpop.f32.mrb[0].mxu0
  %v585 = vadd.f32 %v116, %v584
  %v586 = vpop.f32.mrb[0].mxu0
  %587 = vmatprep.mubr.bf16.mxu0 0
  %588 = vmatmul.mubr.bf16.gmra.mrb[0].mxu0 %v346
  %v589 = vpop.f32.mrb[0].mxu0
  %v590 = vadd.f32 %v116, %v589
  %v591 = vpop.f32.mrb[0].mxu0
  %v592 = vpop.f32.mrb[0].mxu0
  %v593 = vadd.f32 %v116, %v592
  %v594 = vpop.f32.mrb[0].mxu0
  %595 = vmatprep.mubr.bf16.mxu0 0
  %596 = vmatmul.mubr.bf16.gmra.mrb[0].mxu0 %v349
  %v597 = vpop.f32.mrb[0].mxu0
  %v598 = vadd.f32 %v116, %v597
  %v599 = vpop.f32.mrb[0].mxu0
  %v600 = vpop.f32.mrb[0].mxu0
  %v601 = vadd.f32 %v116, %v600
  %v602 = vpop.f32.mrb[0].mxu0
  %603 = vmatprep.mubr.bf16.mxu0 0
  %604 = vmatmul.mubr.bf16.gmra.mrb[0].mxu0 %v352
  %v605 = vpop.f32.mrb[0].mxu0
  %v606 = vadd.f32 %v116, %v605
  %v607 = vpop.f32.mrb[0].mxu0
  %v608 = vpop.f32.mrb[0].mxu0
  %v609 = vadd.f32 %v116, %v608
  %v610 = vpop.f32.mrb[0].mxu0
  %611 = vmatprep.mubr.bf16.mxu0 0
  %612 = vmatmul.mubr.bf16.gmra.mrb[0].mxu0 %v355
  %v613 = vpop.f32.mrb[0].mxu0
  %v614 = vadd.f32 %v116, %v613
  %v615 = vpop.f32.mrb[0].mxu0
  %v616 = vpop.f32.mrb[0].mxu0
  %v617 = vadd.f32 %v116, %v616
  %v618 = vpop.f32.mrb[0].mxu0
  %619 = vmatprep.mubr.bf16.mxu0 0
  %620 = vmatmul.mubr.bf16.gmra.mrb[0].mxu0 %v358
  %v621 = vpop.f32.mrb[0].mxu0
  %v622 = vadd.f32 %v116, %v621
  %v623 = vpop.f32.mrb[0].mxu0
  %v624 = vpop.f32.mrb[0].mxu0
  %v625 = vadd.f32 %v116, %v624
  %v626 = vpop.f32.mrb[0].mxu0
  %627 = vmatprep.mubr.bf16.mxu0 0
  %628 = vmatmul.mubr.bf16.gmra.mrb[0].mxu0 %v361
  %v629 = vpop.f32.mrb[0].mxu0
  %v630 = vadd.f32 %v116, %v629
  %v631 = vpop.f32.mrb[0].mxu0
  %v632 = vpop.f32.mrb[0].mxu0
  %v633 = vadd.f32 %v116, %v632
  %v634 = vpop.f32.mrb[0].mxu0
  %635 = vmatprep.mubr.bf16.mxu0 0
  %636 = vmatmul.mubr.bf16.gmra.mrb[0].mxu0 %v364
  %v637 = vpop.f32.mrb[0].mxu0
  %v638 = vadd.f32 %v116, %v637
  %v639 = vpop.f32.mrb[0].mxu0
  %v640 = vpop.f32.mrb[0].mxu0
  %v641 = vadd.f32 %v116, %v640
  %v642 = vpop.f32.mrb[0].mxu0
  %643 = vmatprep.mubr.bf16.mxu0 0
  %644 = vmatmul.mubr.bf16.gmra.mrb[0].mxu0 %v367
  %v645 = vpop.f32.mrb[0].mxu0
  %v646 = vadd.f32 %v116, %v645
  %v647 = vpop.f32.mrb[0].mxu0
  %v648 = vpop.f32.mrb[0].mxu0
  %v649 = vadd.f32 %v116, %v648
  %v650 = vpop.f32.mrb[0].mxu0
  %651 = vmatprep.mubr.bf16.mxu0 0
  %652 = vmatmul.mubr.bf16.gmra.mrb[0].mxu0 %v370
  %v653 = vpop.f32.mrb[0].mxu0
  %v654 = vadd.f32 %v116, %v653
  %v655 = vpop.f32.mrb[0].mxu0
  %v656 = vpop.f32.mrb[0].mxu0
  %v657 = vadd.f32 %v116, %v656
  %v658 = vpop.f32.mrb[0].mxu0
  %659 = vmatprep.mubr.bf16.mxu0 0
  %660 = vmatmul.mubr.bf16.gmra.mrb[0].mxu0 %v373
  %v661 = vpop.f32.mrb[0].mxu0
  %v662 = vadd.f32 %v116, %v661
  %v663 = vpop.f32.mrb[0].mxu0
  %v664 = vpop.f32.mrb[0].mxu0
  %v665 = vadd.f32 %v116, %v664
  %v666 = vpop.f32.mrb[0].mxu0
  %667 = vdwg.mxu0
  %v668 = vld [vmem:[%s1] sm:$0xff]
  %v669 = vld [vmem:[%s1 + $0x8] sm:$0xff]
  %v670 = vld [vmem:[%s1 + $0x10] sm:$0xff]
  %v671 = vld [vmem:[%s1 + $0x18] sm:$0xff]
  %v672 = vld [vmem:[%s1 + $0x20] sm:$0xff]
  %v673 = vld [vmem:[%s1 + $0x28] sm:$0xff]
  %v674 = vld [vmem:[%s1 + $0x30] sm:$0xff]
  %v675 = vld [vmem:[%s1 + $0x38] sm:$0xff]
  %v676 = vld [vmem:[%s2] sm:$0xff]
  %v677 = vld [vmem:[%s2 + $0x8] sm:$0xff]
  %v678 = vld [vmem:[%s2 + $0x10] sm:$0xff]
  %v679 = vld [vmem:[%s2 + $0x18] sm:$0xff]
  %v680 = vld [vmem:[%s2 + $0x20] sm:$0xff]
  %v681 = vld [vmem:[%s2 + $0x28] sm:$0xff]
  %v682 = vld [vmem:[%s2 + $0x30] sm:$0xff]
  %v683 = vld [vmem:[%s2 + $0x38] sm:$0xff]
  %v684 = vpack.c.bf16 %v669, %v668
  %v685 = vpack.c.bf16 %v671, %v670
  %v686 = vpack.c.bf16 %v673, %v672
  %v687 = vpack.c.bf16 %v675, %v674
  %v692 = vunpack.c.l.b16 %v107
  %v693 = vunpack.c.l.b16 %v108
  %v694 = vunpack.c.l.b16 %v109
  %v695 = vunpack.c.l.b16 %v110
  %v696 = vpack.c.b16 %v693, %v692
  %v697 = vpack.c.b16 %v695, %v694
  %vm700 = vcmask 261120
  %v702 = vsel %vm700, %v684, 0
  %v705 = vsel %vm700, %v685, 0
  %v708 = vsel %vm700, %v686, 0
  %v711 = vsel %vm700, %v687, 0
  %713 = vmatprep.subr.bf16.mxu0 0
  %714 = vmatpush1.bf16.msra.mxu0 %v696
  %715 = vmatprep.subr.bf16.mxu0 0
  %716 = vmatpush1.bf16.msra.mxu0 %v697
  %717 = vmatprep.subr.bf16.mxu0 0
  %718 = vmatpush1.bf16.msra.mxu0 0
  %719 = vmatprep.subr.bf16.mxu0 0
  %720 = vmatpush1.bf16.msra.mxu0 0
  %721 = vmatprep.subr.bf16.mxu0 0
  %722 = vmatpush1.bf16.msra.mxu0 0
  %723 = vmatprep.subr.bf16.mxu0 0
  %724 = vmatpush1.bf16.msra.mxu0 0
  %725 = vmatprep.subr.bf16.mxu0 0
  %726 = vmatpush1.bf16.msra.mxu0 0
  %727 = vmatprep.subr.bf16.mxu0 0
  %728 = vmatpush1.bf16.msra.mxu0 0
  %729 = vmatprep.subr.bf16.mxu0 0
  %730 = vmatpush1.bf16.msra.mxu0 0
  %731 = vmatprep.subr.bf16.mxu0 0
  %732 = vmatpush1.bf16.msra.mxu0 0
  %733 = vmatprep.subr.bf16.mxu0 0
  %734 = vmatpush1.bf16.msra.mxu0 0
  %735 = vmatprep.subr.bf16.mxu0 0
  %736 = vmatpush1.bf16.msra.mxu0 0
  %737 = vmatprep.subr.bf16.mxu0 0
  %738 = vmatpush1.bf16.msra.mxu0 0
  %739 = vmatprep.subr.bf16.mxu0 0
  %740 = vmatpush1.bf16.msra.mxu0 0
  %741 = vmatprep.subr.bf16.mxu0 0
  %742 = vmatpush1.bf16.msra.mxu0 0
  %743 = vmatprep.subr.bf16.mxu0 0
  %744 = vmatpush1.bf16.msra.mxu0 0
  %745 = vmatprep.mubr.bf16.mxu0 0
  %746 = vmatmul.mubr.bf16.gmra.mrb[0].mxu0 %v702
  %v747 = vpop.f32.mrb[0].mxu0
  %v748 = vadd.f32 0.0, %v747
  %v749 = vpop.f32.mrb[0].mxu0
  %v750 = vpop.f32.mrb[0].mxu0
  %v751 = vadd.f32 0.0, %v750
  %v752 = vpop.f32.mrb[0].mxu0
  %753 = vmatprep.mubr.bf16.mxu0 0
  %754 = vmatmul.mubr.bf16.gmra.mrb[0].mxu0 %v705
  %v755 = vpop.f32.mrb[0].mxu0
  %v756 = vadd.f32 0.0, %v755
  %v757 = vpop.f32.mrb[0].mxu0
  %v758 = vpop.f32.mrb[0].mxu0
  %v759 = vadd.f32 0.0, %v758
  %v760 = vpop.f32.mrb[0].mxu0
  %761 = vmatprep.mubr.bf16.mxu0 0
  %762 = vmatmul.mubr.bf16.gmra.mrb[0].mxu0 %v708
  %v763 = vpop.f32.mrb[0].mxu0
  %v764 = vadd.f32 0.0, %v763
  %v765 = vpop.f32.mrb[0].mxu0
  %v766 = vpop.f32.mrb[0].mxu0
  %v767 = vadd.f32 0.0, %v766
  %v768 = vpop.f32.mrb[0].mxu0
  %769 = vmatprep.mubr.bf16.mxu0 0
  %770 = vmatmul.mubr.bf16.gmra.mrb[0].mxu0 %v711
  %v771 = vpop.f32.mrb[0].mxu0
  %v772 = vadd.f32 0.0, %v771
  %v773 = vpop.f32.mrb[0].mxu0
  %v774 = vpop.f32.mrb[0].mxu0
  %v775 = vadd.f32 0.0, %v774
  %v776 = vpop.f32.mrb[0].mxu0
  %777 = vdwg.mxu0
  %v778 = vadd.f32 %v414, %v748
  %v779 = vadd.f32 %v417, %v751
  %v780 = vadd.f32 %v422, %v756
  %v781 = vadd.f32 %v425, %v759
  %v782 = vadd.f32 %v430, %v764
  %v783 = vadd.f32 %v433, %v767
  %v784 = vadd.f32 %v438, %v772
  %v785 = vadd.f32 %v441, %v775
  %v786 = vxor.u32 %v778, 2147483648
  %v787 = vxor.u32 %v779, 2147483648
  %v788 = vxor.u32 %v780, 2147483648
  %v789 = vxor.u32 %v781, 2147483648
  %v790 = vxor.u32 %v782, 2147483648
  %v791 = vxor.u32 %v783, 2147483648
  %v792 = vxor.u32 %v784, 2147483648
  %v793 = vxor.u32 %v785, 2147483648
  %v794 = vmul.f32 %v786, 1.442695
  %v795 = vpow.pop %v794
  %v796 = vmul.f32 %v787, 1.442695
  %v797 = vpow.pop %v796
  %v798 = vmul.f32 %v788, 1.442695
  %v799 = vpow.pop %v798
  %v800 = vmul.f32 %v789, 1.442695
  %v801 = vpow.pop %v800
  %v802 = vmul.f32 %v790, 1.442695
  %v803 = vpow.pop %v802
  %v804 = vmul.f32 %v791, 1.442695
  %v805 = vpow.pop %v804
  %v806 = vmul.f32 %v792, 1.442695
  %v807 = vpow.pop %v806
  %v808 = vmul.f32 %v793, 1.442695
  %v809 = vpow.pop %v808
  %v810 = vadd.f32 %v795, 1.0
  %v811 = vadd.f32 %v797, 1.0
  %v812 = vadd.f32 %v799, 1.0
  %v813 = vadd.f32 %v801, 1.0
  %v814 = vadd.f32 %v803, 1.0
  %v815 = vadd.f32 %v805, 1.0
  %v816 = vadd.f32 %v807, 1.0
  %v817 = vadd.f32 %v809, 1.0
  %v818 = vrcp.pop %v810
  %v819 = vmul.f32 1.0, %v818
  %v820 = vrcp.pop %v811
  %v821 = vmul.f32 1.0, %v820
  %v822 = vrcp.pop %v812
  %v823 = vmul.f32 1.0, %v822
  %v824 = vrcp.pop %v813
  %v825 = vmul.f32 1.0, %v824
  %v826 = vrcp.pop %v814
  %v827 = vmul.f32 1.0, %v826
  %v828 = vrcp.pop %v815
  %v829 = vmul.f32 1.0, %v828
  %v830 = vrcp.pop %v816
  %v831 = vmul.f32 1.0, %v830
  %v832 = vrcp.pop %v817
  %v833 = vmul.f32 1.0, %v832
  %v834 = vtanh.pop %v778
  %v835 = vtanh.pop %v779
  %v836 = vtanh.pop %v780
  %v837 = vtanh.pop %v781
  %v838 = vtanh.pop %v782
  %v839 = vtanh.pop %v783
  %v840 = vtanh.pop %v784
  %v841 = vtanh.pop %v785
  %850 = vrot.lane.b32.xlu0 %v676, 32
  %v851 = vpop.permute.xlu0 %850
  %852 = vrot.lane.b32.xlu0 %v677, 32
  %v853 = vpop.permute.xlu0 %852
  %854 = vrot.lane.b32.xlu0 %v678, 32
  %v855 = vpop.permute.xlu0 %854
  %856 = vrot.lane.b32.xlu0 %v679, 32
  %v857 = vpop.permute.xlu0 %856
  %858 = vrot.lane.b32.xlu0 %v680, 32
  %v859 = vpop.permute.xlu0 %858
  %860 = vrot.lane.b32.xlu0 %v681, 32
  %v861 = vpop.permute.xlu0 %860
  %862 = vrot.lane.b32.xlu0 %v682, 32
  %v863 = vpop.permute.xlu0 %862
  %864 = vrot.lane.b32.xlu0 %v683, 32
  %v865 = vpop.permute.xlu0 %864
  %v874 = vmul.f32 %v819, %v851
  %v875 = vmul.f32 %v821, %v853
  %v876 = vmul.f32 %v823, %v855
  %v877 = vmul.f32 %v825, %v857
  %v878 = vmul.f32 %v827, %v859
  %v879 = vmul.f32 %v829, %v861
  %v880 = vmul.f32 %v831, %v863
  %v881 = vmul.f32 %v833, %v865
  %890 = vrot.lane.b32.xlu0 %v834, 32
  %v891 = vpop.permute.xlu0 %890
  %892 = vrot.lane.b32.xlu0 %v835, 32
  %v893 = vpop.permute.xlu0 %892
  %894 = vrot.lane.b32.xlu0 %v836, 32
  %v895 = vpop.permute.xlu0 %894
  %896 = vrot.lane.b32.xlu0 %v837, 32
  %v897 = vpop.permute.xlu0 %896
  %898 = vrot.lane.b32.xlu0 %v838, 32
  %v899 = vpop.permute.xlu0 %898
  %900 = vrot.lane.b32.xlu0 %v839, 32
  %v901 = vpop.permute.xlu0 %900
  %902 = vrot.lane.b32.xlu0 %v840, 32
  %v903 = vpop.permute.xlu0 %902
  %904 = vrot.lane.b32.xlu0 %v841, 32
  %v905 = vpop.permute.xlu0 %904
  %v914 = vmul.f32 %v819, %v891
  %v915 = vmul.f32 %v821, %v893
  %v916 = vmul.f32 %v823, %v895
  %v917 = vmul.f32 %v825, %v897
  %v918 = vmul.f32 %v827, %v899
  %v919 = vmul.f32 %v829, %v901
  %v920 = vmul.f32 %v831, %v903
  %v921 = vmul.f32 %v833, %v905
  %930 = vrot.lane.b32.xlu0 %v914, 32
  %v931 = vpop.permute.xlu0 %930
  %932 = vrot.lane.b32.xlu0 %v915, 32
  %v933 = vpop.permute.xlu0 %932
  %934 = vrot.lane.b32.xlu0 %v916, 32
  %v935 = vpop.permute.xlu0 %934
  %936 = vrot.lane.b32.xlu0 %v917, 32
  %v937 = vpop.permute.xlu0 %936
  %938 = vrot.lane.b32.xlu0 %v918, 32
  %v939 = vpop.permute.xlu0 %938
  %940 = vrot.lane.b32.xlu0 %v919, 32
  %v941 = vpop.permute.xlu0 %940
  %942 = vrot.lane.b32.xlu0 %v920, 32
  %v943 = vpop.permute.xlu0 %942
  %944 = vrot.lane.b32.xlu0 %v921, 32
  %v945 = vpop.permute.xlu0 %944
  %v954 = vadd.f32 %v874, %v931
  %v955 = vadd.f32 %v875, %v933
  %v956 = vadd.f32 %v876, %v935
  %v957 = vadd.f32 %v877, %v937
  %v958 = vadd.f32 %v878, %v939
  %v959 = vadd.f32 %v879, %v941
  %v960 = vadd.f32 %v880, %v943
  %v961 = vadd.f32 %v881, %v945
  %v962 = vtanh.pop %v954
  %v963 = vtanh.pop %v955
  %v964 = vtanh.pop %v956
  %v965 = vtanh.pop %v957
  %v966 = vtanh.pop %v958
  %v967 = vtanh.pop %v959
  %v968 = vtanh.pop %v960
  %v969 = vtanh.pop %v961
  %978 = vrot.lane.b32.xlu0 %v962, 32
  %v979 = vpop.permute.xlu0 %978
  %980 = vrot.lane.b32.xlu0 %v963, 32
  %v981 = vpop.permute.xlu0 %980
  %982 = vrot.lane.b32.xlu0 %v964, 32
  %v983 = vpop.permute.xlu0 %982
  %984 = vrot.lane.b32.xlu0 %v965, 32
  %v985 = vpop.permute.xlu0 %984
  %986 = vrot.lane.b32.xlu0 %v966, 32
  %v987 = vpop.permute.xlu0 %986
  %988 = vrot.lane.b32.xlu0 %v967, 32
  %v989 = vpop.permute.xlu0 %988
  %990 = vrot.lane.b32.xlu0 %v968, 32
  %v991 = vpop.permute.xlu0 %990
  %992 = vrot.lane.b32.xlu0 %v969, 32
  %v993 = vpop.permute.xlu0 %992
  %v1002 = vmul.f32 %v819, %v979
  %v1003 = vmul.f32 %v821, %v981
  %v1004 = vmul.f32 %v823, %v983
  %v1005 = vmul.f32 %v825, %v985
  %v1006 = vmul.f32 %v827, %v987
  %v1007 = vmul.f32 %v829, %v989
  %v1008 = vmul.f32 %v831, %v991
  %v1009 = vmul.f32 %v833, %v993
  %v1010 = vpack.c.bf16 %v1003, %v1002
  %v1011 = vpack.c.bf16 %v1005, %v1004
  %v1012 = vpack.c.bf16 %v1007, %v1006
  %v1013 = vpack.c.bf16 %v1009, %v1008
  %1018 = vrot.lane.b32.xlu0 %v1010, 64
  %v1019 = vpop.permute.xlu0 %1018
  %1020 = vrot.lane.b32.xlu0 %v1011, 64
  %v1021 = vpop.permute.xlu0 %1020
  %1022 = vrot.lane.b32.xlu0 %v1012, 64
  %v1023 = vpop.permute.xlu0 %1022
  %1024 = vrot.lane.b32.xlu0 %v1013, 64
  %v1025 = vpop.permute.xlu0 %1024
  %v1027 = vsel %vm700, %v1019, 0
  %v1030 = vsel %vm700, %v1021, 0
  %v1033 = vsel %vm700, %v1023, 0
  %v1036 = vsel %vm700, %v1025, 0
  %1038 = vmatprep.subr.bf16.mxu0 0
  %1039 = vmatpush1.bf16.msra.mxu0 %v696
  %1040 = vmatprep.subr.bf16.mxu0 0
  %1041 = vmatpush1.bf16.msra.mxu0 %v697
  %1042 = vmatprep.subr.bf16.mxu0 0
  %1043 = vmatpush1.bf16.msra.mxu0 0
  %1044 = vmatprep.subr.bf16.mxu0 0
  %1045 = vmatpush1.bf16.msra.mxu0 0
  %1046 = vmatprep.subr.bf16.mxu0 0
  %1047 = vmatpush1.bf16.msra.mxu0 0
  %1048 = vmatprep.subr.bf16.mxu0 0
  %1049 = vmatpush1.bf16.msra.mxu0 0
  %1050 = vmatprep.subr.bf16.mxu0 0
  %1051 = vmatpush1.bf16.msra.mxu0 0
  %1052 = vmatprep.subr.bf16.mxu0 0
  %1053 = vmatpush1.bf16.msra.mxu0 0
  %1054 = vmatprep.subr.bf16.mxu0 0
  %1055 = vmatpush1.bf16.msra.mxu0 0
  %1056 = vmatprep.subr.bf16.mxu0 0
  %1057 = vmatpush1.bf16.msra.mxu0 0
  %1058 = vmatprep.subr.bf16.mxu0 0
  %1059 = vmatpush1.bf16.msra.mxu0 0
  %1060 = vmatprep.subr.bf16.mxu0 0
  %1061 = vmatpush1.bf16.msra.mxu0 0
  %1062 = vmatprep.subr.bf16.mxu0 0
  %1063 = vmatpush1.bf16.msra.mxu0 0
  %1064 = vmatprep.subr.bf16.mxu0 0
  %1065 = vmatpush1.bf16.msra.mxu0 0
  %1066 = vmatprep.subr.bf16.mxu0 0
  %1067 = vmatpush1.bf16.msra.mxu0 0
  %1068 = vmatprep.subr.bf16.mxu0 0
  %1069 = vmatpush1.bf16.msra.mxu0 0
  %1070 = vmatprep.mubr.bf16.mxu0 0
  %1071 = vmatmul.mubr.bf16.gmra.mrb[0].mxu0 %v1027
  %v1072 = vpop.f32.mrb[0].mxu0
  %v1073 = vadd.f32 0.0, %v1072
  %v1074 = vpop.f32.mrb[0].mxu0
  %v1075 = vpop.f32.mrb[0].mxu0
  %v1076 = vadd.f32 0.0, %v1075
  %v1077 = vpop.f32.mrb[0].mxu0
  %1078 = vmatprep.mubr.bf16.mxu0 0
  %1079 = vmatmul.mubr.bf16.gmra.mrb[0].mxu0 %v1030
  %v1080 = vpop.f32.mrb[0].mxu0
  %v1081 = vadd.f32 0.0, %v1080
  %v1082 = vpop.f32.mrb[0].mxu0
  %v1083 = vpop.f32.mrb[0].mxu0
  %v1084 = vadd.f32 0.0, %v1083
  %v1085 = vpop.f32.mrb[0].mxu0
  %1086 = vmatprep.mubr.bf16.mxu0 0
  %1087 = vmatmul.mubr.bf16.gmra.mrb[0].mxu0 %v1033
  %v1088 = vpop.f32.mrb[0].mxu0
  %v1089 = vadd.f32 0.0, %v1088
  %v1090 = vpop.f32.mrb[0].mxu0
  %v1091 = vpop.f32.mrb[0].mxu0
  %v1092 = vadd.f32 0.0, %v1091
  %v1093 = vpop.f32.mrb[0].mxu0
  %1094 = vmatprep.mubr.bf16.mxu0 0
  %1095 = vmatmul.mubr.bf16.gmra.mrb[0].mxu0 %v1036
  %v1096 = vpop.f32.mrb[0].mxu0
  %v1097 = vadd.f32 0.0, %v1096
  %v1098 = vpop.f32.mrb[0].mxu0
  %v1099 = vpop.f32.mrb[0].mxu0
  %v1100 = vadd.f32 0.0, %v1099
  %v1101 = vpop.f32.mrb[0].mxu0
  %1102 = vdwg.mxu0
  %v1103 = vadd.f32 %v446, %v1073
  %v1104 = vadd.f32 %v449, %v1076
  %v1105 = vadd.f32 %v454, %v1081
  %v1106 = vadd.f32 %v457, %v1084
  %v1107 = vadd.f32 %v462, %v1089
  %v1108 = vadd.f32 %v465, %v1092
  %v1109 = vadd.f32 %v470, %v1097
  %v1110 = vadd.f32 %v473, %v1100
  %v1111 = vxor.u32 %v1103, 2147483648
  %v1112 = vxor.u32 %v1104, 2147483648
  %v1113 = vxor.u32 %v1105, 2147483648
  %v1114 = vxor.u32 %v1106, 2147483648
  %v1115 = vxor.u32 %v1107, 2147483648
  %v1116 = vxor.u32 %v1108, 2147483648
  %v1117 = vxor.u32 %v1109, 2147483648
  %v1118 = vxor.u32 %v1110, 2147483648
  %v1119 = vmul.f32 %v1111, 1.442695
  %v1120 = vpow.pop %v1119
  %v1121 = vmul.f32 %v1112, 1.442695
  %v1122 = vpow.pop %v1121
  %v1123 = vmul.f32 %v1113, 1.442695
  %v1124 = vpow.pop %v1123
  %v1125 = vmul.f32 %v1114, 1.442695
  %v1126 = vpow.pop %v1125
  %v1127 = vmul.f32 %v1115, 1.442695
  %v1128 = vpow.pop %v1127
  %v1129 = vmul.f32 %v1116, 1.442695
  %v1130 = vpow.pop %v1129
  %v1131 = vmul.f32 %v1117, 1.442695
  %v1132 = vpow.pop %v1131
  %v1133 = vmul.f32 %v1118, 1.442695
  %v1134 = vpow.pop %v1133
  %v1135 = vadd.f32 %v1120, 1.0
  %v1136 = vadd.f32 %v1122, 1.0
  %v1137 = vadd.f32 %v1124, 1.0
  %v1138 = vadd.f32 %v1126, 1.0
  %v1139 = vadd.f32 %v1128, 1.0
  %v1140 = vadd.f32 %v1130, 1.0
  %v1141 = vadd.f32 %v1132, 1.0
  %v1142 = vadd.f32 %v1134, 1.0
  %v1143 = vrcp.pop %v1135
  %v1144 = vmul.f32 1.0, %v1143
  %v1145 = vrcp.pop %v1136
  %v1146 = vmul.f32 1.0, %v1145
  %v1147 = vrcp.pop %v1137
  %v1148 = vmul.f32 1.0, %v1147
  %v1149 = vrcp.pop %v1138
  %v1150 = vmul.f32 1.0, %v1149
  %v1151 = vrcp.pop %v1139
  %v1152 = vmul.f32 1.0, %v1151
  %v1153 = vrcp.pop %v1140
  %v1154 = vmul.f32 1.0, %v1153
  %v1155 = vrcp.pop %v1141
  %v1156 = vmul.f32 1.0, %v1155
  %v1157 = vrcp.pop %v1142
  %v1158 = vmul.f32 1.0, %v1157
  %v1159 = vtanh.pop %v1103
  %v1160 = vtanh.pop %v1104
  %v1161 = vtanh.pop %v1105
  %v1162 = vtanh.pop %v1106
  %v1163 = vtanh.pop %v1107
  %v1164 = vtanh.pop %v1108
  %v1165 = vtanh.pop %v1109
  %v1166 = vtanh.pop %v1110
  %v1167 = vmul.f32 %v1144, %v954
  %v1168 = vmul.f32 %v1146, %v955
  %v1169 = vmul.f32 %v1148, %v956
  %v1170 = vmul.f32 %v1150, %v957
  %v1171 = vmul.f32 %v1152, %v958
  %v1172 = vmul.f32 %v1154, %v959
  %v1173 = vmul.f32 %v1156, %v960
  %v1174 = vmul.f32 %v1158, %v961
  %1183 = vrot.lane.b32.xlu0 %v1159, 32
  %v1184 = vpop.permute.xlu0 %1183
  %1185 = vrot.lane.b32.xlu0 %v1160, 32
  %v1186 = vpop.permute.xlu0 %1185
  %1187 = vrot.lane.b32.xlu0 %v1161, 32
  %v1188 = vpop.permute.xlu0 %1187
  %1189 = vrot.lane.b32.xlu0 %v1162, 32
  %v1190 = vpop.permute.xlu0 %1189
  %1191 = vrot.lane.b32.xlu0 %v1163, 32
  %v1192 = vpop.permute.xlu0 %1191
  %1193 = vrot.lane.b32.xlu0 %v1164, 32
  %v1194 = vpop.permute.xlu0 %1193
  %1195 = vrot.lane.b32.xlu0 %v1165, 32
  %v1196 = vpop.permute.xlu0 %1195
  %1197 = vrot.lane.b32.xlu0 %v1166, 32
  %v1198 = vpop.permute.xlu0 %1197
  %v1207 = vmul.f32 %v1144, %v1184
  %v1208 = vmul.f32 %v1146, %v1186
  %v1209 = vmul.f32 %v1148, %v1188
  %v1210 = vmul.f32 %v1150, %v1190
  %v1211 = vmul.f32 %v1152, %v1192
  %v1212 = vmul.f32 %v1154, %v1194
  %v1213 = vmul.f32 %v1156, %v1196
  %v1214 = vmul.f32 %v1158, %v1198
  %1223 = vrot.lane.b32.xlu0 %v1207, 32
  %v1224 = vpop.permute.xlu0 %1223
  %1225 = vrot.lane.b32.xlu0 %v1208, 32
  %v1226 = vpop.permute.xlu0 %1225
  %1227 = vrot.lane.b32.xlu0 %v1209, 32
  %v1228 = vpop.permute.xlu0 %1227
  %1229 = vrot.lane.b32.xlu0 %v1210, 32
  %v1230 = vpop.permute.xlu0 %1229
  %1231 = vrot.lane.b32.xlu0 %v1211, 32
  %v1232 = vpop.permute.xlu0 %1231
  %1233 = vrot.lane.b32.xlu0 %v1212, 32
  %v1234 = vpop.permute.xlu0 %1233
  %1235 = vrot.lane.b32.xlu0 %v1213, 32
  %v1236 = vpop.permute.xlu0 %1235
  %1237 = vrot.lane.b32.xlu0 %v1214, 32
  %v1238 = vpop.permute.xlu0 %1237
  %v1247 = vadd.f32 %v1167, %v1224
  %v1248 = vadd.f32 %v1168, %v1226
  %v1249 = vadd.f32 %v1169, %v1228
  %v1250 = vadd.f32 %v1170, %v1230
  %v1251 = vadd.f32 %v1171, %v1232
  %v1252 = vadd.f32 %v1172, %v1234
  %v1253 = vadd.f32 %v1173, %v1236
  %v1254 = vadd.f32 %v1174, %v1238
  %v1255 = vtanh.pop %v1247
  %v1256 = vtanh.pop %v1248
  %v1257 = vtanh.pop %v1249
  %v1258 = vtanh.pop %v1250
  %v1259 = vtanh.pop %v1251
  %v1260 = vtanh.pop %v1252
  %v1261 = vtanh.pop %v1253
  %v1262 = vtanh.pop %v1254
  %1271 = vrot.lane.b32.xlu0 %v1255, 32
  %v1272 = vpop.permute.xlu0 %1271
  %1273 = vrot.lane.b32.xlu0 %v1256, 32
  %v1274 = vpop.permute.xlu0 %1273
  %1275 = vrot.lane.b32.xlu0 %v1257, 32
  %v1276 = vpop.permute.xlu0 %1275
  %1277 = vrot.lane.b32.xlu0 %v1258, 32
  %v1278 = vpop.permute.xlu0 %1277
  %1279 = vrot.lane.b32.xlu0 %v1259, 32
  %v1280 = vpop.permute.xlu0 %1279
  %1281 = vrot.lane.b32.xlu0 %v1260, 32
  %v1282 = vpop.permute.xlu0 %1281
  %1283 = vrot.lane.b32.xlu0 %v1261, 32
  %v1284 = vpop.permute.xlu0 %1283
  %1285 = vrot.lane.b32.xlu0 %v1262, 32
  %v1286 = vpop.permute.xlu0 %1285
  %v1295 = vmul.f32 %v1144, %v1272
  %v1296 = vmul.f32 %v1146, %v1274
  %v1297 = vmul.f32 %v1148, %v1276
  %v1298 = vmul.f32 %v1150, %v1278
  %v1299 = vmul.f32 %v1152, %v1280
  %v1300 = vmul.f32 %v1154, %v1282
  %v1301 = vmul.f32 %v1156, %v1284
  %v1302 = vmul.f32 %v1158, %v1286
  %v1303 = vpack.c.bf16 %v1296, %v1295
  %v1304 = vpack.c.bf16 %v1298, %v1297
  %v1305 = vpack.c.bf16 %v1300, %v1299
  %v1306 = vpack.c.bf16 %v1302, %v1301
  %1311 = vrot.lane.b32.xlu0 %v1303, 64
  %v1312 = vpop.permute.xlu0 %1311
  %1313 = vrot.lane.b32.xlu0 %v1304, 64
  %v1314 = vpop.permute.xlu0 %1313
  %1315 = vrot.lane.b32.xlu0 %v1305, 64
  %v1316 = vpop.permute.xlu0 %1315
  %1317 = vrot.lane.b32.xlu0 %v1306, 64
  %v1318 = vpop.permute.xlu0 %1317
  %v1320 = vsel %vm700, %v1312, 0
  %v1323 = vsel %vm700, %v1314, 0
  %v1326 = vsel %vm700, %v1316, 0
  %v1329 = vsel %vm700, %v1318, 0
  %1331 = vmatprep.subr.bf16.mxu0 0
  %1332 = vmatpush1.bf16.msra.mxu0 %v696
  %1333 = vmatprep.subr.bf16.mxu0 0
  %1334 = vmatpush1.bf16.msra.mxu0 %v697
  %1335 = vmatprep.subr.bf16.mxu0 0
  %1336 = vmatpush1.bf16.msra.mxu0 0
  %1337 = vmatprep.subr.bf16.mxu0 0
  %1338 = vmatpush1.bf16.msra.mxu0 0
  %1339 = vmatprep.subr.bf16.mxu0 0
  %1340 = vmatpush1.bf16.msra.mxu0 0
  %1341 = vmatprep.subr.bf16.mxu0 0
  %1342 = vmatpush1.bf16.msra.mxu0 0
  %1343 = vmatprep.subr.bf16.mxu0 0
  %1344 = vmatpush1.bf16.msra.mxu0 0
  %1345 = vmatprep.subr.bf16.mxu0 0
  %1346 = vmatpush1.bf16.msra.mxu0 0
  %1347 = vmatprep.subr.bf16.mxu0 0
  %1348 = vmatpush1.bf16.msra.mxu0 0
  %1349 = vmatprep.subr.bf16.mxu0 0
  %1350 = vmatpush1.bf16.msra.mxu0 0
  %1351 = vmatprep.subr.bf16.mxu0 0
  %1352 = vmatpush1.bf16.msra.mxu0 0
  %1353 = vmatprep.subr.bf16.mxu0 0
  %1354 = vmatpush1.bf16.msra.mxu0 0
  %1355 = vmatprep.subr.bf16.mxu0 0
  %1356 = vmatpush1.bf16.msra.mxu0 0
  %1357 = vmatprep.subr.bf16.mxu0 0
  %1358 = vmatpush1.bf16.msra.mxu0 0
  %1359 = vmatprep.subr.bf16.mxu0 0
  %1360 = vmatpush1.bf16.msra.mxu0 0
  %1361 = vmatprep.subr.bf16.mxu0 0
  %1362 = vmatpush1.bf16.msra.mxu0 0
  %1363 = vmatprep.mubr.bf16.mxu0 0
  %1364 = vmatmul.mubr.bf16.gmra.mrb[0].mxu0 %v1320
  %v1365 = vpop.f32.mrb[0].mxu0
  %v1366 = vadd.f32 0.0, %v1365
  %v1367 = vpop.f32.mrb[0].mxu0
  %v1368 = vpop.f32.mrb[0].mxu0
  %v1369 = vadd.f32 0.0, %v1368
  %v1370 = vpop.f32.mrb[0].mxu0
  %1371 = vmatprep.mubr.bf16.mxu0 0
  %1372 = vmatmul.mubr.bf16.gmra.mrb[0].mxu0 %v1323
  %v1373 = vpop.f32.mrb[0].mxu0
  %v1374 = vadd.f32 0.0, %v1373
  %v1375 = vpop.f32.mrb[0].mxu0
  %v1376 = vpop.f32.mrb[0].mxu0
  %v1377 = vadd.f32 0.0, %v1376
  %v1378 = vpop.f32.mrb[0].mxu0
  %1379 = vmatprep.mubr.bf16.mxu0 0
  %1380 = vmatmul.mubr.bf16.gmra.mrb[0].mxu0 %v1326
  %v1381 = vpop.f32.mrb[0].mxu0
  %v1382 = vadd.f32 0.0, %v1381
  %v1383 = vpop.f32.mrb[0].mxu0
  %v1384 = vpop.f32.mrb[0].mxu0
  %v1385 = vadd.f32 0.0, %v1384
  %v1386 = vpop.f32.mrb[0].mxu0
  %1387 = vmatprep.mubr.bf16.mxu0 0
  %1388 = vmatmul.mubr.bf16.gmra.mrb[0].mxu0 %v1329
  %v1389 = vpop.f32.mrb[0].mxu0
  %v1390 = vadd.f32 0.0, %v1389
  %v1391 = vpop.f32.mrb[0].mxu0
  %v1392 = vpop.f32.mrb[0].mxu0
  %v1393 = vadd.f32 0.0, %v1392
  %v1394 = vpop.f32.mrb[0].mxu0
  %1395 = vdwg.mxu0
  %v1396 = vadd.f32 %v478, %v1366
  %v1397 = vadd.f32 %v481, %v1369
  %v1398 = vadd.f32 %v486, %v1374
  %v1399 = vadd.f32 %v489, %v1377
  %v1400 = vadd.f32 %v494, %v1382
  %v1401 = vadd.f32 %v497, %v1385
  %v1402 = vadd.f32 %v502, %v1390
  %v1403 = vadd.f32 %v505, %v1393
  %v1404 = vxor.u32 %v1396, 2147483648
  %v1405 = vxor.u32 %v1397, 2147483648
  %v1406 = vxor.u32 %v1398, 2147483648
  %v1407 = vxor.u32 %v1399, 2147483648
  %v1408 = vxor.u32 %v1400, 2147483648
  %v1409 = vxor.u32 %v1401, 2147483648
  %v1410 = vxor.u32 %v1402, 2147483648
  %v1411 = vxor.u32 %v1403, 2147483648
  %v1412 = vmul.f32 %v1404, 1.442695
  %v1413 = vpow.pop %v1412
  %v1414 = vmul.f32 %v1405, 1.442695
  %v1415 = vpow.pop %v1414
  %v1416 = vmul.f32 %v1406, 1.442695
  %v1417 = vpow.pop %v1416
  %v1418 = vmul.f32 %v1407, 1.442695
  %v1419 = vpow.pop %v1418
  %v1420 = vmul.f32 %v1408, 1.442695
  %v1421 = vpow.pop %v1420
  %v1422 = vmul.f32 %v1409, 1.442695
  %v1423 = vpow.pop %v1422
  %v1424 = vmul.f32 %v1410, 1.442695
  %v1425 = vpow.pop %v1424
  %v1426 = vmul.f32 %v1411, 1.442695
  %v1427 = vpow.pop %v1426
  %v1428 = vadd.f32 %v1413, 1.0
  %v1429 = vadd.f32 %v1415, 1.0
  %v1430 = vadd.f32 %v1417, 1.0
  %v1431 = vadd.f32 %v1419, 1.0
  %v1432 = vadd.f32 %v1421, 1.0
  %v1433 = vadd.f32 %v1423, 1.0
  %v1434 = vadd.f32 %v1425, 1.0
  %v1435 = vadd.f32 %v1427, 1.0
  %v1436 = vrcp.pop %v1428
  %v1437 = vmul.f32 1.0, %v1436
  %v1438 = vrcp.pop %v1429
  %v1439 = vmul.f32 1.0, %v1438
  %v1440 = vrcp.pop %v1430
  %v1441 = vmul.f32 1.0, %v1440
  %v1442 = vrcp.pop %v1431
  %v1443 = vmul.f32 1.0, %v1442
  %v1444 = vrcp.pop %v1432
  %v1445 = vmul.f32 1.0, %v1444
  %v1446 = vrcp.pop %v1433
  %v1447 = vmul.f32 1.0, %v1446
  %v1448 = vrcp.pop %v1434
  %v1449 = vmul.f32 1.0, %v1448
  %v1450 = vrcp.pop %v1435
  %v1451 = vmul.f32 1.0, %v1450
  %v1452 = vtanh.pop %v1396
  %v1453 = vtanh.pop %v1397
  %v1454 = vtanh.pop %v1398
  %v1455 = vtanh.pop %v1399
  %v1456 = vtanh.pop %v1400
  %v1457 = vtanh.pop %v1401
  %v1458 = vtanh.pop %v1402
  %v1459 = vtanh.pop %v1403
  %v1460 = vmul.f32 %v1437, %v1247
  %v1461 = vmul.f32 %v1439, %v1248
  %v1462 = vmul.f32 %v1441, %v1249
  %v1463 = vmul.f32 %v1443, %v1250
  %v1464 = vmul.f32 %v1445, %v1251
  %v1465 = vmul.f32 %v1447, %v1252
  %v1466 = vmul.f32 %v1449, %v1253
  %v1467 = vmul.f32 %v1451, %v1254
  %1476 = vrot.lane.b32.xlu0 %v1452, 32
  %v1477 = vpop.permute.xlu0 %1476
  %1478 = vrot.lane.b32.xlu0 %v1453, 32
  %v1479 = vpop.permute.xlu0 %1478
  %1480 = vrot.lane.b32.xlu0 %v1454, 32
  %v1481 = vpop.permute.xlu0 %1480
  %1482 = vrot.lane.b32.xlu0 %v1455, 32
  %v1483 = vpop.permute.xlu0 %1482
  %1484 = vrot.lane.b32.xlu0 %v1456, 32
  %v1485 = vpop.permute.xlu0 %1484
  %1486 = vrot.lane.b32.xlu0 %v1457, 32
  %v1487 = vpop.permute.xlu0 %1486
  %1488 = vrot.lane.b32.xlu0 %v1458, 32
  %v1489 = vpop.permute.xlu0 %1488
  %1490 = vrot.lane.b32.xlu0 %v1459, 32
  %v1491 = vpop.permute.xlu0 %1490
  %v1500 = vmul.f32 %v1437, %v1477
  %v1501 = vmul.f32 %v1439, %v1479
  %v1502 = vmul.f32 %v1441, %v1481
  %v1503 = vmul.f32 %v1443, %v1483
  %v1504 = vmul.f32 %v1445, %v1485
  %v1505 = vmul.f32 %v1447, %v1487
  %v1506 = vmul.f32 %v1449, %v1489
  %v1507 = vmul.f32 %v1451, %v1491
  %1516 = vrot.lane.b32.xlu0 %v1500, 32
  %v1517 = vpop.permute.xlu0 %1516
  %1518 = vrot.lane.b32.xlu0 %v1501, 32
  %v1519 = vpop.permute.xlu0 %1518
  %1520 = vrot.lane.b32.xlu0 %v1502, 32
  %v1521 = vpop.permute.xlu0 %1520
  %1522 = vrot.lane.b32.xlu0 %v1503, 32
  %v1523 = vpop.permute.xlu0 %1522
  %1524 = vrot.lane.b32.xlu0 %v1504, 32
  %v1525 = vpop.permute.xlu0 %1524
  %1526 = vrot.lane.b32.xlu0 %v1505, 32
  %v1527 = vpop.permute.xlu0 %1526
  %1528 = vrot.lane.b32.xlu0 %v1506, 32
  %v1529 = vpop.permute.xlu0 %1528
  %1530 = vrot.lane.b32.xlu0 %v1507, 32
  %v1531 = vpop.permute.xlu0 %1530
  %v1540 = vadd.f32 %v1460, %v1517
  %v1541 = vadd.f32 %v1461, %v1519
  %v1542 = vadd.f32 %v1462, %v1521
  %v1543 = vadd.f32 %v1463, %v1523
  %v1544 = vadd.f32 %v1464, %v1525
  %v1545 = vadd.f32 %v1465, %v1527
  %v1546 = vadd.f32 %v1466, %v1529
  %v1547 = vadd.f32 %v1467, %v1531
  %v1548 = vtanh.pop %v1540
  %v1549 = vtanh.pop %v1541
  %v1550 = vtanh.pop %v1542
  %v1551 = vtanh.pop %v1543
  %v1552 = vtanh.pop %v1544
  %v1553 = vtanh.pop %v1545
  %v1554 = vtanh.pop %v1546
  %v1555 = vtanh.pop %v1547
  %1564 = vrot.lane.b32.xlu0 %v1548, 32
  %v1565 = vpop.permute.xlu0 %1564
  %1566 = vrot.lane.b32.xlu0 %v1549, 32
  %v1567 = vpop.permute.xlu0 %1566
  %1568 = vrot.lane.b32.xlu0 %v1550, 32
  %v1569 = vpop.permute.xlu0 %1568
  %1570 = vrot.lane.b32.xlu0 %v1551, 32
  %v1571 = vpop.permute.xlu0 %1570
  %1572 = vrot.lane.b32.xlu0 %v1552, 32
  %v1573 = vpop.permute.xlu0 %1572
  %1574 = vrot.lane.b32.xlu0 %v1553, 32
  %v1575 = vpop.permute.xlu0 %1574
  %1576 = vrot.lane.b32.xlu0 %v1554, 32
  %v1577 = vpop.permute.xlu0 %1576
  %1578 = vrot.lane.b32.xlu0 %v1555, 32
  %v1579 = vpop.permute.xlu0 %1578
  %v1588 = vmul.f32 %v1437, %v1565
  %v1589 = vmul.f32 %v1439, %v1567
  %v1590 = vmul.f32 %v1441, %v1569
  %v1591 = vmul.f32 %v1443, %v1571
  %v1592 = vmul.f32 %v1445, %v1573
  %v1593 = vmul.f32 %v1447, %v1575
  %v1594 = vmul.f32 %v1449, %v1577
  %v1595 = vmul.f32 %v1451, %v1579
  %v1596 = vpack.c.bf16 %v1589, %v1588
  %v1597 = vpack.c.bf16 %v1591, %v1590
  %v1598 = vpack.c.bf16 %v1593, %v1592
  %v1599 = vpack.c.bf16 %v1595, %v1594
  %1604 = vrot.lane.b32.xlu0 %v1596, 64
  %v1605 = vpop.permute.xlu0 %1604
  %1606 = vrot.lane.b32.xlu0 %v1597, 64
  %v1607 = vpop.permute.xlu0 %1606
  %1608 = vrot.lane.b32.xlu0 %v1598, 64
  %v1609 = vpop.permute.xlu0 %1608
  %1610 = vrot.lane.b32.xlu0 %v1599, 64
  %v1611 = vpop.permute.xlu0 %1610
  %v1613 = vsel %vm700, %v1605, 0
  %v1616 = vsel %vm700, %v1607, 0
  %v1619 = vsel %vm700, %v1609, 0
  %v1622 = vsel %vm700, %v1611, 0
  %1624 = vmatprep.subr.bf16.mxu0 0
  %1625 = vmatpush1.bf16.msra.mxu0 %v696
  %1626 = vmatprep.subr.bf16.mxu0 0
  %1627 = vmatpush1.bf16.msra.mxu0 %v697
  %1628 = vmatprep.subr.bf16.mxu0 0
  %1629 = vmatpush1.bf16.msra.mxu0 0
  %1630 = vmatprep.subr.bf16.mxu0 0
  %1631 = vmatpush1.bf16.msra.mxu0 0
  %1632 = vmatprep.subr.bf16.mxu0 0
  %1633 = vmatpush1.bf16.msra.mxu0 0
  %1634 = vmatprep.subr.bf16.mxu0 0
  %1635 = vmatpush1.bf16.msra.mxu0 0
  %1636 = vmatprep.subr.bf16.mxu0 0
  %1637 = vmatpush1.bf16.msra.mxu0 0
  %1638 = vmatprep.subr.bf16.mxu0 0
  %1639 = vmatpush1.bf16.msra.mxu0 0
  %1640 = vmatprep.subr.bf16.mxu0 0
  %1641 = vmatpush1.bf16.msra.mxu0 0
  %1642 = vmatprep.subr.bf16.mxu0 0
  %1643 = vmatpush1.bf16.msra.mxu0 0
  %1644 = vmatprep.subr.bf16.mxu0 0
  %1645 = vmatpush1.bf16.msra.mxu0 0
  %1646 = vmatprep.subr.bf16.mxu0 0
  %1647 = vmatpush1.bf16.msra.mxu0 0
  %1648 = vmatprep.subr.bf16.mxu0 0
  %1649 = vmatpush1.bf16.msra.mxu0 0
  %1650 = vmatprep.subr.bf16.mxu0 0
  %1651 = vmatpush1.bf16.msra.mxu0 0
  %1652 = vmatprep.subr.bf16.mxu0 0
  %1653 = vmatpush1.bf16.msra.mxu0 0
  %1654 = vmatprep.subr.bf16.mxu0 0
  %1655 = vmatpush1.bf16.msra.mxu0 0
  %1656 = vmatprep.mubr.bf16.mxu0 0
  %1657 = vmatmul.mubr.bf16.gmra.mrb[0].mxu0 %v1613
  %v1658 = vpop.f32.mrb[0].mxu0
  %v1659 = vadd.f32 0.0, %v1658
  %v1660 = vpop.f32.mrb[0].mxu0
  %v1661 = vpop.f32.mrb[0].mxu0
  %v1662 = vadd.f32 0.0, %v1661
  %v1663 = vpop.f32.mrb[0].mxu0
  %1664 = vmatprep.mubr.bf16.mxu0 0
  %1665 = vmatmul.mubr.bf16.gmra.mrb[0].mxu0 %v1616
  %v1666 = vpop.f32.mrb[0].mxu0
  %v1667 = vadd.f32 0.0, %v1666
  %v1668 = vpop.f32.mrb[0].mxu0
  %v1669 = vpop.f32.mrb[0].mxu0
  %v1670 = vadd.f32 0.0, %v1669
  %v1671 = vpop.f32.mrb[0].mxu0
  %1672 = vmatprep.mubr.bf16.mxu0 0
  %1673 = vmatmul.mubr.bf16.gmra.mrb[0].mxu0 %v1619
  %v1674 = vpop.f32.mrb[0].mxu0
  %v1675 = vadd.f32 0.0, %v1674
  %v1676 = vpop.f32.mrb[0].mxu0
  %v1677 = vpop.f32.mrb[0].mxu0
  %v1678 = vadd.f32 0.0, %v1677
  %v1679 = vpop.f32.mrb[0].mxu0
  %1680 = vmatprep.mubr.bf16.mxu0 0
  %1681 = vmatmul.mubr.bf16.gmra.mrb[0].mxu0 %v1622
  %v1682 = vpop.f32.mrb[0].mxu0
  %v1683 = vadd.f32 0.0, %v1682
  %v1684 = vpop.f32.mrb[0].mxu0
  %v1685 = vpop.f32.mrb[0].mxu0
  %v1686 = vadd.f32 0.0, %v1685
  %v1687 = vpop.f32.mrb[0].mxu0
  %1688 = vdwg.mxu0
  %v1689 = vadd.f32 %v510, %v1659
  %v1690 = vadd.f32 %v513, %v1662
  %v1691 = vadd.f32 %v518, %v1667
  %v1692 = vadd.f32 %v521, %v1670
  %v1693 = vadd.f32 %v526, %v1675
  %v1694 = vadd.f32 %v529, %v1678
  %v1695 = vadd.f32 %v534, %v1683
  %v1696 = vadd.f32 %v537, %v1686
  %v1697 = vxor.u32 %v1689, 2147483648
  %v1698 = vxor.u32 %v1690, 2147483648
  %v1699 = vxor.u32 %v1691, 2147483648
  %v1700 = vxor.u32 %v1692, 2147483648
  %v1701 = vxor.u32 %v1693, 2147483648
  %v1702 = vxor.u32 %v1694, 2147483648
  %v1703 = vxor.u32 %v1695, 2147483648
  %v1704 = vxor.u32 %v1696, 2147483648
  %v1705 = vmul.f32 %v1697, 1.442695
  %v1706 = vpow.pop %v1705
  %v1707 = vmul.f32 %v1698, 1.442695
  %v1708 = vpow.pop %v1707
  %v1709 = vmul.f32 %v1699, 1.442695
  %v1710 = vpow.pop %v1709
  %v1711 = vmul.f32 %v1700, 1.442695
  %v1712 = vpow.pop %v1711
  %v1713 = vmul.f32 %v1701, 1.442695
  %v1714 = vpow.pop %v1713
  %v1715 = vmul.f32 %v1702, 1.442695
  %v1716 = vpow.pop %v1715
  %v1717 = vmul.f32 %v1703, 1.442695
  %v1718 = vpow.pop %v1717
  %v1719 = vmul.f32 %v1704, 1.442695
  %v1720 = vpow.pop %v1719
  %v1721 = vadd.f32 %v1706, 1.0
  %v1722 = vadd.f32 %v1708, 1.0
  %v1723 = vadd.f32 %v1710, 1.0
  %v1724 = vadd.f32 %v1712, 1.0
  %v1725 = vadd.f32 %v1714, 1.0
  %v1726 = vadd.f32 %v1716, 1.0
  %v1727 = vadd.f32 %v1718, 1.0
  %v1728 = vadd.f32 %v1720, 1.0
  %v1729 = vrcp.pop %v1721
  %v1730 = vmul.f32 1.0, %v1729
  %v1731 = vrcp.pop %v1722
  %v1732 = vmul.f32 1.0, %v1731
  %v1733 = vrcp.pop %v1723
  %v1734 = vmul.f32 1.0, %v1733
  %v1735 = vrcp.pop %v1724
  %v1736 = vmul.f32 1.0, %v1735
  %v1737 = vrcp.pop %v1725
  %v1738 = vmul.f32 1.0, %v1737
  %v1739 = vrcp.pop %v1726
  %v1740 = vmul.f32 1.0, %v1739
  %v1741 = vrcp.pop %v1727
  %v1742 = vmul.f32 1.0, %v1741
  %v1743 = vrcp.pop %v1728
  %v1744 = vmul.f32 1.0, %v1743
  %v1745 = vtanh.pop %v1689
  %v1746 = vtanh.pop %v1690
  %v1747 = vtanh.pop %v1691
  %v1748 = vtanh.pop %v1692
  %v1749 = vtanh.pop %v1693
  %v1750 = vtanh.pop %v1694
  %v1751 = vtanh.pop %v1695
  %v1752 = vtanh.pop %v1696
  %v1753 = vmul.f32 %v1730, %v1540
  %v1754 = vmul.f32 %v1732, %v1541
  %v1755 = vmul.f32 %v1734, %v1542
  %v1756 = vmul.f32 %v1736, %v1543
  %v1757 = vmul.f32 %v1738, %v1544
  %v1758 = vmul.f32 %v1740, %v1545
  %v1759 = vmul.f32 %v1742, %v1546
  %v1760 = vmul.f32 %v1744, %v1547
  %1769 = vrot.lane.b32.xlu0 %v1745, 32
  %v1770 = vpop.permute.xlu0 %1769
  %1771 = vrot.lane.b32.xlu0 %v1746, 32
  %v1772 = vpop.permute.xlu0 %1771
  %1773 = vrot.lane.b32.xlu0 %v1747, 32
  %v1774 = vpop.permute.xlu0 %1773
  %1775 = vrot.lane.b32.xlu0 %v1748, 32
  %v1776 = vpop.permute.xlu0 %1775
  %1777 = vrot.lane.b32.xlu0 %v1749, 32
  %v1778 = vpop.permute.xlu0 %1777
  %1779 = vrot.lane.b32.xlu0 %v1750, 32
  %v1780 = vpop.permute.xlu0 %1779
  %1781 = vrot.lane.b32.xlu0 %v1751, 32
  %v1782 = vpop.permute.xlu0 %1781
  %1783 = vrot.lane.b32.xlu0 %v1752, 32
  %v1784 = vpop.permute.xlu0 %1783
  %v1793 = vmul.f32 %v1730, %v1770
  %v1794 = vmul.f32 %v1732, %v1772
  %v1795 = vmul.f32 %v1734, %v1774
  %v1796 = vmul.f32 %v1736, %v1776
  %v1797 = vmul.f32 %v1738, %v1778
  %v1798 = vmul.f32 %v1740, %v1780
  %v1799 = vmul.f32 %v1742, %v1782
  %v1800 = vmul.f32 %v1744, %v1784
  %1809 = vrot.lane.b32.xlu0 %v1793, 32
  %v1810 = vpop.permute.xlu0 %1809
  %1811 = vrot.lane.b32.xlu0 %v1794, 32
  %v1812 = vpop.permute.xlu0 %1811
  %1813 = vrot.lane.b32.xlu0 %v1795, 32
  %v1814 = vpop.permute.xlu0 %1813
  %1815 = vrot.lane.b32.xlu0 %v1796, 32
  %v1816 = vpop.permute.xlu0 %1815
  %1817 = vrot.lane.b32.xlu0 %v1797, 32
  %v1818 = vpop.permute.xlu0 %1817
  %1819 = vrot.lane.b32.xlu0 %v1798, 32
  %v1820 = vpop.permute.xlu0 %1819
  %1821 = vrot.lane.b32.xlu0 %v1799, 32
  %v1822 = vpop.permute.xlu0 %1821
  %1823 = vrot.lane.b32.xlu0 %v1800, 32
  %v1824 = vpop.permute.xlu0 %1823
  %v1833 = vadd.f32 %v1753, %v1810
  %v1834 = vadd.f32 %v1754, %v1812
  %v1835 = vadd.f32 %v1755, %v1814
  %v1836 = vadd.f32 %v1756, %v1816
  %v1837 = vadd.f32 %v1757, %v1818
  %v1838 = vadd.f32 %v1758, %v1820
  %v1839 = vadd.f32 %v1759, %v1822
  %v1840 = vadd.f32 %v1760, %v1824
  %v1841 = vtanh.pop %v1833
  %v1842 = vtanh.pop %v1834
  %v1843 = vtanh.pop %v1835
  %v1844 = vtanh.pop %v1836
  %v1845 = vtanh.pop %v1837
  %v1846 = vtanh.pop %v1838
  %v1847 = vtanh.pop %v1839
  %v1848 = vtanh.pop %v1840
  %1857 = vrot.lane.b32.xlu0 %v1841, 32
  %v1858 = vpop.permute.xlu0 %1857
  %1859 = vrot.lane.b32.xlu0 %v1842, 32
  %v1860 = vpop.permute.xlu0 %1859
  %1861 = vrot.lane.b32.xlu0 %v1843, 32
  %v1862 = vpop.permute.xlu0 %1861
  %1863 = vrot.lane.b32.xlu0 %v1844, 32
  %v1864 = vpop.permute.xlu0 %1863
  %1865 = vrot.lane.b32.xlu0 %v1845, 32
  %v1866 = vpop.permute.xlu0 %1865
  %1867 = vrot.lane.b32.xlu0 %v1846, 32
  %v1868 = vpop.permute.xlu0 %1867
  %1869 = vrot.lane.b32.xlu0 %v1847, 32
  %v1870 = vpop.permute.xlu0 %1869
  %1871 = vrot.lane.b32.xlu0 %v1848, 32
  %v1872 = vpop.permute.xlu0 %1871
  %v1881 = vmul.f32 %v1730, %v1858
  %v1882 = vmul.f32 %v1732, %v1860
  %v1883 = vmul.f32 %v1734, %v1862
  %v1884 = vmul.f32 %v1736, %v1864
  %v1885 = vmul.f32 %v1738, %v1866
  %v1886 = vmul.f32 %v1740, %v1868
  %v1887 = vmul.f32 %v1742, %v1870
  %v1888 = vmul.f32 %v1744, %v1872
  %v1889 = vpack.c.bf16 %v1882, %v1881
  %v1890 = vpack.c.bf16 %v1884, %v1883
  %v1891 = vpack.c.bf16 %v1886, %v1885
  %v1892 = vpack.c.bf16 %v1888, %v1887
  %1897 = vrot.lane.b32.xlu0 %v1889, 64
  %v1898 = vpop.permute.xlu0 %1897
  %1899 = vrot.lane.b32.xlu0 %v1890, 64
  %v1900 = vpop.permute.xlu0 %1899
  %1901 = vrot.lane.b32.xlu0 %v1891, 64
  %v1902 = vpop.permute.xlu0 %1901
  %1903 = vrot.lane.b32.xlu0 %v1892, 64
  %v1904 = vpop.permute.xlu0 %1903
  %v1906 = vsel %vm700, %v1898, 0
  %v1909 = vsel %vm700, %v1900, 0
  %v1912 = vsel %vm700, %v1902, 0
  %v1915 = vsel %vm700, %v1904, 0
  %1917 = vmatprep.subr.bf16.mxu0 0
  %1918 = vmatpush1.bf16.msra.mxu0 %v696
  %1919 = vmatprep.subr.bf16.mxu0 0
  %1920 = vmatpush1.bf16.msra.mxu0 %v697
  %1921 = vmatprep.subr.bf16.mxu0 0
  %1922 = vmatpush1.bf16.msra.mxu0 0
  %1923 = vmatprep.subr.bf16.mxu0 0
  %1924 = vmatpush1.bf16.msra.mxu0 0
  %1925 = vmatprep.subr.bf16.mxu0 0
  %1926 = vmatpush1.bf16.msra.mxu0 0
  %1927 = vmatprep.subr.bf16.mxu0 0
  %1928 = vmatpush1.bf16.msra.mxu0 0
  %1929 = vmatprep.subr.bf16.mxu0 0
  %1930 = vmatpush1.bf16.msra.mxu0 0
  %1931 = vmatprep.subr.bf16.mxu0 0
  %1932 = vmatpush1.bf16.msra.mxu0 0
  %1933 = vmatprep.subr.bf16.mxu0 0
  %1934 = vmatpush1.bf16.msra.mxu0 0
  %1935 = vmatprep.subr.bf16.mxu0 0
  %1936 = vmatpush1.bf16.msra.mxu0 0
  %1937 = vmatprep.subr.bf16.mxu0 0
  %1938 = vmatpush1.bf16.msra.mxu0 0
  %1939 = vmatprep.subr.bf16.mxu0 0
  %1940 = vmatpush1.bf16.msra.mxu0 0
  %1941 = vmatprep.subr.bf16.mxu0 0
  %1942 = vmatpush1.bf16.msra.mxu0 0
  %1943 = vmatprep.subr.bf16.mxu0 0
  %1944 = vmatpush1.bf16.msra.mxu0 0
  %1945 = vmatprep.subr.bf16.mxu0 0
  %1946 = vmatpush1.bf16.msra.mxu0 0
  %1947 = vmatprep.subr.bf16.mxu0 0
  %1948 = vmatpush1.bf16.msra.mxu0 0
  %1949 = vmatprep.mubr.bf16.mxu0 0
  %1950 = vmatmul.mubr.bf16.gmra.mrb[0].mxu0 %v1906
  %v1951 = vpop.f32.mrb[0].mxu0
  %v1952 = vadd.f32 0.0, %v1951
  %v1953 = vpop.f32.mrb[0].mxu0
  %v1954 = vpop.f32.mrb[0].mxu0
  %v1955 = vadd.f32 0.0, %v1954
  %v1956 = vpop.f32.mrb[0].mxu0
  %1957 = vmatprep.mubr.bf16.mxu0 0
  %1958 = vmatmul.mubr.bf16.gmra.mrb[0].mxu0 %v1909
  %v1959 = vpop.f32.mrb[0].mxu0
  %v1960 = vadd.f32 0.0, %v1959
  %v1961 = vpop.f32.mrb[0].mxu0
  %v1962 = vpop.f32.mrb[0].mxu0
  %v1963 = vadd.f32 0.0, %v1962
  %v1964 = vpop.f32.mrb[0].mxu0
  %1965 = vmatprep.mubr.bf16.mxu0 0
  %1966 = vmatmul.mubr.bf16.gmra.mrb[0].mxu0 %v1912
  %v1967 = vpop.f32.mrb[0].mxu0
  %v1968 = vadd.f32 0.0, %v1967
  %v1969 = vpop.f32.mrb[0].mxu0
  %v1970 = vpop.f32.mrb[0].mxu0
  %v1971 = vadd.f32 0.0, %v1970
  %v1972 = vpop.f32.mrb[0].mxu0
  %1973 = vmatprep.mubr.bf16.mxu0 0
  %1974 = vmatmul.mubr.bf16.gmra.mrb[0].mxu0 %v1915
  %v1975 = vpop.f32.mrb[0].mxu0
  %v1976 = vadd.f32 0.0, %v1975
  %v1977 = vpop.f32.mrb[0].mxu0
  %v1978 = vpop.f32.mrb[0].mxu0
  %v1979 = vadd.f32 0.0, %v1978
  %v1980 = vpop.f32.mrb[0].mxu0
  %1981 = vdwg.mxu0
  %v1982 = vadd.f32 %v542, %v1952
  %v1983 = vadd.f32 %v545, %v1955
  %v1984 = vadd.f32 %v550, %v1960
  %v1985 = vadd.f32 %v553, %v1963
  %v1986 = vadd.f32 %v558, %v1968
  %v1987 = vadd.f32 %v561, %v1971
  %v1988 = vadd.f32 %v566, %v1976
  %v1989 = vadd.f32 %v569, %v1979
  %v1990 = vxor.u32 %v1982, 2147483648
  %v1991 = vxor.u32 %v1983, 2147483648
  %v1992 = vxor.u32 %v1984, 2147483648
  %v1993 = vxor.u32 %v1985, 2147483648
  %v1994 = vxor.u32 %v1986, 2147483648
  %v1995 = vxor.u32 %v1987, 2147483648
  %v1996 = vxor.u32 %v1988, 2147483648
  %v1997 = vxor.u32 %v1989, 2147483648
  %v1998 = vmul.f32 %v1990, 1.442695
  %v1999 = vpow.pop %v1998
  %v2000 = vmul.f32 %v1991, 1.442695
  %v2001 = vpow.pop %v2000
  %v2002 = vmul.f32 %v1992, 1.442695
  %v2003 = vpow.pop %v2002
  %v2004 = vmul.f32 %v1993, 1.442695
  %v2005 = vpow.pop %v2004
  %v2006 = vmul.f32 %v1994, 1.442695
  %v2007 = vpow.pop %v2006
  %v2008 = vmul.f32 %v1995, 1.442695
  %v2009 = vpow.pop %v2008
  %v2010 = vmul.f32 %v1996, 1.442695
  %v2011 = vpow.pop %v2010
  %v2012 = vmul.f32 %v1997, 1.442695
  %v2013 = vpow.pop %v2012
  %v2014 = vadd.f32 %v1999, 1.0
  %v2015 = vadd.f32 %v2001, 1.0
  %v2016 = vadd.f32 %v2003, 1.0
  %v2017 = vadd.f32 %v2005, 1.0
  %v2018 = vadd.f32 %v2007, 1.0
  %v2019 = vadd.f32 %v2009, 1.0
  %v2020 = vadd.f32 %v2011, 1.0
  %v2021 = vadd.f32 %v2013, 1.0
  %v2022 = vrcp.pop %v2014
  %v2023 = vmul.f32 1.0, %v2022
  %v2024 = vrcp.pop %v2015
  %v2025 = vmul.f32 1.0, %v2024
  %v2026 = vrcp.pop %v2016
  %v2027 = vmul.f32 1.0, %v2026
  %v2028 = vrcp.pop %v2017
  %v2029 = vmul.f32 1.0, %v2028
  %v2030 = vrcp.pop %v2018
  %v2031 = vmul.f32 1.0, %v2030
  %v2032 = vrcp.pop %v2019
  %v2033 = vmul.f32 1.0, %v2032
  %v2034 = vrcp.pop %v2020
  %v2035 = vmul.f32 1.0, %v2034
  %v2036 = vrcp.pop %v2021
  %v2037 = vmul.f32 1.0, %v2036
  %v2038 = vtanh.pop %v1982
  %v2039 = vtanh.pop %v1983
  %v2040 = vtanh.pop %v1984
  %v2041 = vtanh.pop %v1985
  %v2042 = vtanh.pop %v1986
  %v2043 = vtanh.pop %v1987
  %v2044 = vtanh.pop %v1988
  %v2045 = vtanh.pop %v1989
  %v2046 = vmul.f32 %v2023, %v1833
  %v2047 = vmul.f32 %v2025, %v1834
  %v2048 = vmul.f32 %v2027, %v1835
  %v2049 = vmul.f32 %v2029, %v1836
  %v2050 = vmul.f32 %v2031, %v1837
  %v2051 = vmul.f32 %v2033, %v1838
  %v2052 = vmul.f32 %v2035, %v1839
  %v2053 = vmul.f32 %v2037, %v1840
  %2062 = vrot.lane.b32.xlu0 %v2038, 32
  %v2063 = vpop.permute.xlu0 %2062
  %2064 = vrot.lane.b32.xlu0 %v2039, 32
  %v2065 = vpop.permute.xlu0 %2064
  %2066 = vrot.lane.b32.xlu0 %v2040, 32
  %v2067 = vpop.permute.xlu0 %2066
  %2068 = vrot.lane.b32.xlu0 %v2041, 32
  %v2069 = vpop.permute.xlu0 %2068
  %2070 = vrot.lane.b32.xlu0 %v2042, 32
  %v2071 = vpop.permute.xlu0 %2070
  %2072 = vrot.lane.b32.xlu0 %v2043, 32
  %v2073 = vpop.permute.xlu0 %2072
  %2074 = vrot.lane.b32.xlu0 %v2044, 32
  %v2075 = vpop.permute.xlu0 %2074
  %2076 = vrot.lane.b32.xlu0 %v2045, 32
  %v2077 = vpop.permute.xlu0 %2076
  %v2086 = vmul.f32 %v2023, %v2063
  %v2087 = vmul.f32 %v2025, %v2065
  %v2088 = vmul.f32 %v2027, %v2067
  %v2089 = vmul.f32 %v2029, %v2069
  %v2090 = vmul.f32 %v2031, %v2071
  %v2091 = vmul.f32 %v2033, %v2073
  %v2092 = vmul.f32 %v2035, %v2075
  %v2093 = vmul.f32 %v2037, %v2077
  %2102 = vrot.lane.b32.xlu0 %v2086, 32
  %v2103 = vpop.permute.xlu0 %2102
  %2104 = vrot.lane.b32.xlu0 %v2087, 32
  %v2105 = vpop.permute.xlu0 %2104
  %2106 = vrot.lane.b32.xlu0 %v2088, 32
  %v2107 = vpop.permute.xlu0 %2106
  %2108 = vrot.lane.b32.xlu0 %v2089, 32
  %v2109 = vpop.permute.xlu0 %2108
  %2110 = vrot.lane.b32.xlu0 %v2090, 32
  %v2111 = vpop.permute.xlu0 %2110
  %2112 = vrot.lane.b32.xlu0 %v2091, 32
  %v2113 = vpop.permute.xlu0 %2112
  %2114 = vrot.lane.b32.xlu0 %v2092, 32
  %v2115 = vpop.permute.xlu0 %2114
  %2116 = vrot.lane.b32.xlu0 %v2093, 32
  %v2117 = vpop.permute.xlu0 %2116
  %v2126 = vadd.f32 %v2046, %v2103
  %v2127 = vadd.f32 %v2047, %v2105
  %v2128 = vadd.f32 %v2048, %v2107
  %v2129 = vadd.f32 %v2049, %v2109
  %v2130 = vadd.f32 %v2050, %v2111
  %v2131 = vadd.f32 %v2051, %v2113
  %v2132 = vadd.f32 %v2052, %v2115
  %v2133 = vadd.f32 %v2053, %v2117
  %v2134 = vtanh.pop %v2126
  %v2135 = vtanh.pop %v2127
  %v2136 = vtanh.pop %v2128
  %v2137 = vtanh.pop %v2129
  %v2138 = vtanh.pop %v2130
  %v2139 = vtanh.pop %v2131
  %v2140 = vtanh.pop %v2132
  %v2141 = vtanh.pop %v2133
  %2150 = vrot.lane.b32.xlu0 %v2134, 32
  %v2151 = vpop.permute.xlu0 %2150
  %2152 = vrot.lane.b32.xlu0 %v2135, 32
  %v2153 = vpop.permute.xlu0 %2152
  %2154 = vrot.lane.b32.xlu0 %v2136, 32
  %v2155 = vpop.permute.xlu0 %2154
  %2156 = vrot.lane.b32.xlu0 %v2137, 32
  %v2157 = vpop.permute.xlu0 %2156
  %2158 = vrot.lane.b32.xlu0 %v2138, 32
  %v2159 = vpop.permute.xlu0 %2158
  %2160 = vrot.lane.b32.xlu0 %v2139, 32
  %v2161 = vpop.permute.xlu0 %2160
  %2162 = vrot.lane.b32.xlu0 %v2140, 32
  %v2163 = vpop.permute.xlu0 %2162
  %2164 = vrot.lane.b32.xlu0 %v2141, 32
  %v2165 = vpop.permute.xlu0 %2164
  %v2174 = vmul.f32 %v2023, %v2151
  %v2175 = vmul.f32 %v2025, %v2153
  %v2176 = vmul.f32 %v2027, %v2155
  %v2177 = vmul.f32 %v2029, %v2157
  %v2178 = vmul.f32 %v2031, %v2159
  %v2179 = vmul.f32 %v2033, %v2161
  %v2180 = vmul.f32 %v2035, %v2163
  %v2181 = vmul.f32 %v2037, %v2165
  %v2182 = vpack.c.bf16 %v2175, %v2174
  %v2183 = vpack.c.bf16 %v2177, %v2176
  %v2184 = vpack.c.bf16 %v2179, %v2178
  %v2185 = vpack.c.bf16 %v2181, %v2180
  %2190 = vrot.lane.b32.xlu0 %v2182, 64
  %v2191 = vpop.permute.xlu0 %2190
  %2192 = vrot.lane.b32.xlu0 %v2183, 64
  %v2193 = vpop.permute.xlu0 %2192
  %2194 = vrot.lane.b32.xlu0 %v2184, 64
  %v2195 = vpop.permute.xlu0 %2194
  %2196 = vrot.lane.b32.xlu0 %v2185, 64
  %v2197 = vpop.permute.xlu0 %2196
  %v2199 = vsel %vm700, %v2191, 0
  %v2202 = vsel %vm700, %v2193, 0
  %v2205 = vsel %vm700, %v2195, 0
  %v2208 = vsel %vm700, %v2197, 0
  %2210 = vmatprep.subr.bf16.mxu0 0
  %2211 = vmatpush1.bf16.msra.mxu0 %v696
  %2212 = vmatprep.subr.bf16.mxu0 0
  %2213 = vmatpush1.bf16.msra.mxu0 %v697
  %2214 = vmatprep.subr.bf16.mxu0 0
  %2215 = vmatpush1.bf16.msra.mxu0 0
  %2216 = vmatprep.subr.bf16.mxu0 0
  %2217 = vmatpush1.bf16.msra.mxu0 0
  %2218 = vmatprep.subr.bf16.mxu0 0
  %2219 = vmatpush1.bf16.msra.mxu0 0
  %2220 = vmatprep.subr.bf16.mxu0 0
  %2221 = vmatpush1.bf16.msra.mxu0 0
  %2222 = vmatprep.subr.bf16.mxu0 0
  %2223 = vmatpush1.bf16.msra.mxu0 0
  %2224 = vmatprep.subr.bf16.mxu0 0
  %2225 = vmatpush1.bf16.msra.mxu0 0
  %2226 = vmatprep.subr.bf16.mxu0 0
  %2227 = vmatpush1.bf16.msra.mxu0 0
  %2228 = vmatprep.subr.bf16.mxu0 0
  %2229 = vmatpush1.bf16.msra.mxu0 0
  %2230 = vmatprep.subr.bf16.mxu0 0
  %2231 = vmatpush1.bf16.msra.mxu0 0
  %2232 = vmatprep.subr.bf16.mxu0 0
  %2233 = vmatpush1.bf16.msra.mxu0 0
  %2234 = vmatprep.subr.bf16.mxu0 0
  %2235 = vmatpush1.bf16.msra.mxu0 0
  %2236 = vmatprep.subr.bf16.mxu0 0
  %2237 = vmatpush1.bf16.msra.mxu0 0
  %2238 = vmatprep.subr.bf16.mxu0 0
  %2239 = vmatpush1.bf16.msra.mxu0 0
  %2240 = vmatprep.subr.bf16.mxu0 0
  %2241 = vmatpush1.bf16.msra.mxu0 0
  %2242 = vmatprep.mubr.bf16.mxu0 0
  %2243 = vmatmul.mubr.bf16.gmra.mrb[0].mxu0 %v2199
  %v2244 = vpop.f32.mrb[0].mxu0
  %v2245 = vadd.f32 0.0, %v2244
  %v2246 = vpop.f32.mrb[0].mxu0
  %v2247 = vpop.f32.mrb[0].mxu0
  %v2248 = vadd.f32 0.0, %v2247
  %v2249 = vpop.f32.mrb[0].mxu0
  %2250 = vmatprep.mubr.bf16.mxu0 0
  %2251 = vmatmul.mubr.bf16.gmra.mrb[0].mxu0 %v2202
  %v2252 = vpop.f32.mrb[0].mxu0
  %v2253 = vadd.f32 0.0, %v2252
  %v2254 = vpop.f32.mrb[0].mxu0
  %v2255 = vpop.f32.mrb[0].mxu0
  %v2256 = vadd.f32 0.0, %v2255
  %v2257 = vpop.f32.mrb[0].mxu0
  %2258 = vmatprep.mubr.bf16.mxu0 0
  %2259 = vmatmul.mubr.bf16.gmra.mrb[0].mxu0 %v2205
  %v2260 = vpop.f32.mrb[0].mxu0
  %v2261 = vadd.f32 0.0, %v2260
  %v2262 = vpop.f32.mrb[0].mxu0
  %v2263 = vpop.f32.mrb[0].mxu0
  %v2264 = vadd.f32 0.0, %v2263
  %v2265 = vpop.f32.mrb[0].mxu0
  %2266 = vmatprep.mubr.bf16.mxu0 0
  %2267 = vmatmul.mubr.bf16.gmra.mrb[0].mxu0 %v2208
  %v2268 = vpop.f32.mrb[0].mxu0
  %v2269 = vadd.f32 0.0, %v2268
  %v2270 = vpop.f32.mrb[0].mxu0
  %v2271 = vpop.f32.mrb[0].mxu0
  %v2272 = vadd.f32 0.0, %v2271
  %v2273 = vpop.f32.mrb[0].mxu0
  %2274 = vdwg.mxu0
  %v2275 = vadd.f32 %v574, %v2245
  %v2276 = vadd.f32 %v577, %v2248
  %v2277 = vadd.f32 %v582, %v2253
  %v2278 = vadd.f32 %v585, %v2256
  %v2279 = vadd.f32 %v590, %v2261
  %v2280 = vadd.f32 %v593, %v2264
  %v2281 = vadd.f32 %v598, %v2269
  %v2282 = vadd.f32 %v601, %v2272
  %v2283 = vxor.u32 %v2275, 2147483648
  %v2284 = vxor.u32 %v2276, 2147483648
  %v2285 = vxor.u32 %v2277, 2147483648
  %v2286 = vxor.u32 %v2278, 2147483648
  %v2287 = vxor.u32 %v2279, 2147483648
  %v2288 = vxor.u32 %v2280, 2147483648
  %v2289 = vxor.u32 %v2281, 2147483648
  %v2290 = vxor.u32 %v2282, 2147483648
  %v2291 = vmul.f32 %v2283, 1.442695
  %v2292 = vpow.pop %v2291
  %v2293 = vmul.f32 %v2284, 1.442695
  %v2294 = vpow.pop %v2293
  %v2295 = vmul.f32 %v2285, 1.442695
  %v2296 = vpow.pop %v2295
  %v2297 = vmul.f32 %v2286, 1.442695
  %v2298 = vpow.pop %v2297
  %v2299 = vmul.f32 %v2287, 1.442695
  %v2300 = vpow.pop %v2299
  %v2301 = vmul.f32 %v2288, 1.442695
  %v2302 = vpow.pop %v2301
  %v2303 = vmul.f32 %v2289, 1.442695
  %v2304 = vpow.pop %v2303
  %v2305 = vmul.f32 %v2290, 1.442695
  %v2306 = vpow.pop %v2305
  %v2307 = vadd.f32 %v2292, 1.0
  %v2308 = vadd.f32 %v2294, 1.0
  %v2309 = vadd.f32 %v2296, 1.0
  %v2310 = vadd.f32 %v2298, 1.0
  %v2311 = vadd.f32 %v2300, 1.0
  %v2312 = vadd.f32 %v2302, 1.0
  %v2313 = vadd.f32 %v2304, 1.0
  %v2314 = vadd.f32 %v2306, 1.0
  %v2315 = vrcp.pop %v2307
  %v2316 = vmul.f32 1.0, %v2315
  %v2317 = vrcp.pop %v2308
  %v2318 = vmul.f32 1.0, %v2317
  %v2319 = vrcp.pop %v2309
  %v2320 = vmul.f32 1.0, %v2319
  %v2321 = vrcp.pop %v2310
  %v2322 = vmul.f32 1.0, %v2321
  %v2323 = vrcp.pop %v2311
  %v2324 = vmul.f32 1.0, %v2323
  %v2325 = vrcp.pop %v2312
  %v2326 = vmul.f32 1.0, %v2325
  %v2327 = vrcp.pop %v2313
  %v2328 = vmul.f32 1.0, %v2327
  %v2329 = vrcp.pop %v2314
  %v2330 = vmul.f32 1.0, %v2329
  %v2331 = vtanh.pop %v2275
  %v2332 = vtanh.pop %v2276
  %v2333 = vtanh.pop %v2277
  %v2334 = vtanh.pop %v2278
  %v2335 = vtanh.pop %v2279
  %v2336 = vtanh.pop %v2280
  %v2337 = vtanh.pop %v2281
  %v2338 = vtanh.pop %v2282
  %v2339 = vmul.f32 %v2316, %v2126
  %v2340 = vmul.f32 %v2318, %v2127
  %v2341 = vmul.f32 %v2320, %v2128
  %v2342 = vmul.f32 %v2322, %v2129
  %v2343 = vmul.f32 %v2324, %v2130
  %v2344 = vmul.f32 %v2326, %v2131
  %v2345 = vmul.f32 %v2328, %v2132
  %v2346 = vmul.f32 %v2330, %v2133
  %2355 = vrot.lane.b32.xlu0 %v2331, 32
  %v2356 = vpop.permute.xlu0 %2355
  %2357 = vrot.lane.b32.xlu0 %v2332, 32
  %v2358 = vpop.permute.xlu0 %2357
  %2359 = vrot.lane.b32.xlu0 %v2333, 32
  %v2360 = vpop.permute.xlu0 %2359
  %2361 = vrot.lane.b32.xlu0 %v2334, 32
  %v2362 = vpop.permute.xlu0 %2361
  %2363 = vrot.lane.b32.xlu0 %v2335, 32
  %v2364 = vpop.permute.xlu0 %2363
  %2365 = vrot.lane.b32.xlu0 %v2336, 32
  %v2366 = vpop.permute.xlu0 %2365
  %2367 = vrot.lane.b32.xlu0 %v2337, 32
  %v2368 = vpop.permute.xlu0 %2367
  %2369 = vrot.lane.b32.xlu0 %v2338, 32
  %v2370 = vpop.permute.xlu0 %2369
  %v2379 = vmul.f32 %v2316, %v2356
  %v2380 = vmul.f32 %v2318, %v2358
  %v2381 = vmul.f32 %v2320, %v2360
  %v2382 = vmul.f32 %v2322, %v2362
  %v2383 = vmul.f32 %v2324, %v2364
  %v2384 = vmul.f32 %v2326, %v2366
  %v2385 = vmul.f32 %v2328, %v2368
  %v2386 = vmul.f32 %v2330, %v2370
  %2395 = vrot.lane.b32.xlu0 %v2379, 32
  %v2396 = vpop.permute.xlu0 %2395
  %2397 = vrot.lane.b32.xlu0 %v2380, 32
  %v2398 = vpop.permute.xlu0 %2397
  %2399 = vrot.lane.b32.xlu0 %v2381, 32
  %v2400 = vpop.permute.xlu0 %2399
  %2401 = vrot.lane.b32.xlu0 %v2382, 32
  %v2402 = vpop.permute.xlu0 %2401
  %2403 = vrot.lane.b32.xlu0 %v2383, 32
  %v2404 = vpop.permute.xlu0 %2403
  %2405 = vrot.lane.b32.xlu0 %v2384, 32
  %v2406 = vpop.permute.xlu0 %2405
  %2407 = vrot.lane.b32.xlu0 %v2385, 32
  %v2408 = vpop.permute.xlu0 %2407
  %2409 = vrot.lane.b32.xlu0 %v2386, 32
  %v2410 = vpop.permute.xlu0 %2409
  %v2419 = vadd.f32 %v2339, %v2396
  %v2420 = vadd.f32 %v2340, %v2398
  %v2421 = vadd.f32 %v2341, %v2400
  %v2422 = vadd.f32 %v2342, %v2402
  %v2423 = vadd.f32 %v2343, %v2404
  %v2424 = vadd.f32 %v2344, %v2406
  %v2425 = vadd.f32 %v2345, %v2408
  %v2426 = vadd.f32 %v2346, %v2410
  %v2427 = vtanh.pop %v2419
  %v2428 = vtanh.pop %v2420
  %v2429 = vtanh.pop %v2421
  %v2430 = vtanh.pop %v2422
  %v2431 = vtanh.pop %v2423
  %v2432 = vtanh.pop %v2424
  %v2433 = vtanh.pop %v2425
  %v2434 = vtanh.pop %v2426
  %2443 = vrot.lane.b32.xlu0 %v2427, 32
  %v2444 = vpop.permute.xlu0 %2443
  %2445 = vrot.lane.b32.xlu0 %v2428, 32
  %v2446 = vpop.permute.xlu0 %2445
  %2447 = vrot.lane.b32.xlu0 %v2429, 32
  %v2448 = vpop.permute.xlu0 %2447
  %2449 = vrot.lane.b32.xlu0 %v2430, 32
  %v2450 = vpop.permute.xlu0 %2449
  %2451 = vrot.lane.b32.xlu0 %v2431, 32
  %v2452 = vpop.permute.xlu0 %2451
  %2453 = vrot.lane.b32.xlu0 %v2432, 32
  %v2454 = vpop.permute.xlu0 %2453
  %2455 = vrot.lane.b32.xlu0 %v2433, 32
  %v2456 = vpop.permute.xlu0 %2455
  %2457 = vrot.lane.b32.xlu0 %v2434, 32
  %v2458 = vpop.permute.xlu0 %2457
  %v2467 = vmul.f32 %v2316, %v2444
  %v2468 = vmul.f32 %v2318, %v2446
  %v2469 = vmul.f32 %v2320, %v2448
  %v2470 = vmul.f32 %v2322, %v2450
  %v2471 = vmul.f32 %v2324, %v2452
  %v2472 = vmul.f32 %v2326, %v2454
  %v2473 = vmul.f32 %v2328, %v2456
  %v2474 = vmul.f32 %v2330, %v2458
  %v2475 = vpack.c.bf16 %v2468, %v2467
  %v2476 = vpack.c.bf16 %v2470, %v2469
  %v2477 = vpack.c.bf16 %v2472, %v2471
  %v2478 = vpack.c.bf16 %v2474, %v2473
  %2483 = vrot.lane.b32.xlu0 %v2475, 64
  %v2484 = vpop.permute.xlu0 %2483
  %2485 = vrot.lane.b32.xlu0 %v2476, 64
  %v2486 = vpop.permute.xlu0 %2485
  %2487 = vrot.lane.b32.xlu0 %v2477, 64
  %v2488 = vpop.permute.xlu0 %2487
  %2489 = vrot.lane.b32.xlu0 %v2478, 64
  %v2490 = vpop.permute.xlu0 %2489
  %v2492 = vsel %vm700, %v2484, 0
  %v2495 = vsel %vm700, %v2486, 0
  %v2498 = vsel %vm700, %v2488, 0
  %v2501 = vsel %vm700, %v2490, 0
  %2503 = vmatprep.subr.bf16.mxu0 0
  %2504 = vmatpush1.bf16.msra.mxu0 %v696
  %2505 = vmatprep.subr.bf16.mxu0 0
  %2506 = vmatpush1.bf16.msra.mxu0 %v697
  %2507 = vmatprep.subr.bf16.mxu0 0
  %2508 = vmatpush1.bf16.msra.mxu0 0
  %2509 = vmatprep.subr.bf16.mxu0 0
  %2510 = vmatpush1.bf16.msra.mxu0 0
  %2511 = vmatprep.subr.bf16.mxu0 0
  %2512 = vmatpush1.bf16.msra.mxu0 0
  %2513 = vmatprep.subr.bf16.mxu0 0
  %2514 = vmatpush1.bf16.msra.mxu0 0
  %2515 = vmatprep.subr.bf16.mxu0 0
  %2516 = vmatpush1.bf16.msra.mxu0 0
  %2517 = vmatprep.subr.bf16.mxu0 0
  %2518 = vmatpush1.bf16.msra.mxu0 0
  %2519 = vmatprep.subr.bf16.mxu0 0
  %2520 = vmatpush1.bf16.msra.mxu0 0
  %2521 = vmatprep.subr.bf16.mxu0 0
  %2522 = vmatpush1.bf16.msra.mxu0 0
  %2523 = vmatprep.subr.bf16.mxu0 0
  %2524 = vmatpush1.bf16.msra.mxu0 0
  %2525 = vmatprep.subr.bf16.mxu0 0
  %2526 = vmatpush1.bf16.msra.mxu0 0
  %2527 = vmatprep.subr.bf16.mxu0 0
  %2528 = vmatpush1.bf16.msra.mxu0 0
  %2529 = vmatprep.subr.bf16.mxu0 0
  %2530 = vmatpush1.bf16.msra.mxu0 0
  %2531 = vmatprep.subr.bf16.mxu0 0
  %2532 = vmatpush1.bf16.msra.mxu0 0
  %2533 = vmatprep.subr.bf16.mxu0 0
  %2534 = vmatpush1.bf16.msra.mxu0 0
  %2535 = vmatprep.mubr.bf16.mxu0 0
  %2536 = vmatmul.mubr.bf16.gmra.mrb[0].mxu0 %v2492
  %v2537 = vpop.f32.mrb[0].mxu0
  %v2538 = vadd.f32 0.0, %v2537
  %v2539 = vpop.f32.mrb[0].mxu0
  %v2540 = vpop.f32.mrb[0].mxu0
  %v2541 = vadd.f32 0.0, %v2540
  %v2542 = vpop.f32.mrb[0].mxu0
  %2543 = vmatprep.mubr.bf16.mxu0 0
  %2544 = vmatmul.mubr.bf16.gmra.mrb[0].mxu0 %v2495
  %v2545 = vpop.f32.mrb[0].mxu0
  %v2546 = vadd.f32 0.0, %v2545
  %v2547 = vpop.f32.mrb[0].mxu0
  %v2548 = vpop.f32.mrb[0].mxu0
  %v2549 = vadd.f32 0.0, %v2548
  %v2550 = vpop.f32.mrb[0].mxu0
  %2551 = vmatprep.mubr.bf16.mxu0 0
  %2552 = vmatmul.mubr.bf16.gmra.mrb[0].mxu0 %v2498
  %v2553 = vpop.f32.mrb[0].mxu0
  %v2554 = vadd.f32 0.0, %v2553
  %v2555 = vpop.f32.mrb[0].mxu0
  %v2556 = vpop.f32.mrb[0].mxu0
  %v2557 = vadd.f32 0.0, %v2556
  %v2558 = vpop.f32.mrb[0].mxu0
  %2559 = vmatprep.mubr.bf16.mxu0 0
  %2560 = vmatmul.mubr.bf16.gmra.mrb[0].mxu0 %v2501
  %v2561 = vpop.f32.mrb[0].mxu0
  %v2562 = vadd.f32 0.0, %v2561
  %v2563 = vpop.f32.mrb[0].mxu0
  %v2564 = vpop.f32.mrb[0].mxu0
  %v2565 = vadd.f32 0.0, %v2564
  %v2566 = vpop.f32.mrb[0].mxu0
  %2567 = vdwg.mxu0
  %v2568 = vadd.f32 %v606, %v2538
  %v2569 = vadd.f32 %v609, %v2541
  %v2570 = vadd.f32 %v614, %v2546
  %v2571 = vadd.f32 %v617, %v2549
  %v2572 = vadd.f32 %v622, %v2554
  %v2573 = vadd.f32 %v625, %v2557
  %v2574 = vadd.f32 %v630, %v2562
  %v2575 = vadd.f32 %v633, %v2565
  %v2576 = vxor.u32 %v2568, 2147483648
  %v2577 = vxor.u32 %v2569, 2147483648
  %v2578 = vxor.u32 %v2570, 2147483648
  %v2579 = vxor.u32 %v2571, 2147483648
  %v2580 = vxor.u32 %v2572, 2147483648
  %v2581 = vxor.u32 %v2573, 2147483648
  %v2582 = vxor.u32 %v2574, 2147483648
  %v2583 = vxor.u32 %v2575, 2147483648
  %v2584 = vmul.f32 %v2576, 1.442695
  %v2585 = vpow.pop %v2584
  %v2586 = vmul.f32 %v2577, 1.442695
  %v2587 = vpow.pop %v2586
  %v2588 = vmul.f32 %v2578, 1.442695
  %v2589 = vpow.pop %v2588
  %v2590 = vmul.f32 %v2579, 1.442695
  %v2591 = vpow.pop %v2590
  %v2592 = vmul.f32 %v2580, 1.442695
  %v2593 = vpow.pop %v2592
  %v2594 = vmul.f32 %v2581, 1.442695
  %v2595 = vpow.pop %v2594
  %v2596 = vmul.f32 %v2582, 1.442695
  %v2597 = vpow.pop %v2596
  %v2598 = vmul.f32 %v2583, 1.442695
  %v2599 = vpow.pop %v2598
  %v2600 = vadd.f32 %v2585, 1.0
  %v2601 = vadd.f32 %v2587, 1.0
  %v2602 = vadd.f32 %v2589, 1.0
  %v2603 = vadd.f32 %v2591, 1.0
  %v2604 = vadd.f32 %v2593, 1.0
  %v2605 = vadd.f32 %v2595, 1.0
  %v2606 = vadd.f32 %v2597, 1.0
  %v2607 = vadd.f32 %v2599, 1.0
  %v2608 = vrcp.pop %v2600
  %v2609 = vmul.f32 1.0, %v2608
  %v2610 = vrcp.pop %v2601
  %v2611 = vmul.f32 1.0, %v2610
  %v2612 = vrcp.pop %v2602
  %v2613 = vmul.f32 1.0, %v2612
  %v2614 = vrcp.pop %v2603
  %v2615 = vmul.f32 1.0, %v2614
  %v2616 = vrcp.pop %v2604
  %v2617 = vmul.f32 1.0, %v2616
  %v2618 = vrcp.pop %v2605
  %v2619 = vmul.f32 1.0, %v2618
  %v2620 = vrcp.pop %v2606
  %v2621 = vmul.f32 1.0, %v2620
  %v2622 = vrcp.pop %v2607
  %v2623 = vmul.f32 1.0, %v2622
  %v2624 = vtanh.pop %v2568
  %v2625 = vtanh.pop %v2569
  %v2626 = vtanh.pop %v2570
  %v2627 = vtanh.pop %v2571
  %v2628 = vtanh.pop %v2572
  %v2629 = vtanh.pop %v2573
  %v2630 = vtanh.pop %v2574
  %v2631 = vtanh.pop %v2575
  %v2632 = vmul.f32 %v2609, %v2419
  %v2633 = vmul.f32 %v2611, %v2420
  %v2634 = vmul.f32 %v2613, %v2421
  %v2635 = vmul.f32 %v2615, %v2422
  %v2636 = vmul.f32 %v2617, %v2423
  %v2637 = vmul.f32 %v2619, %v2424
  %v2638 = vmul.f32 %v2621, %v2425
  %v2639 = vmul.f32 %v2623, %v2426
  %2648 = vrot.lane.b32.xlu0 %v2624, 32
  %v2649 = vpop.permute.xlu0 %2648
  %2650 = vrot.lane.b32.xlu0 %v2625, 32
  %v2651 = vpop.permute.xlu0 %2650
  %2652 = vrot.lane.b32.xlu0 %v2626, 32
  %v2653 = vpop.permute.xlu0 %2652
  %2654 = vrot.lane.b32.xlu0 %v2627, 32
  %v2655 = vpop.permute.xlu0 %2654
  %2656 = vrot.lane.b32.xlu0 %v2628, 32
  %v2657 = vpop.permute.xlu0 %2656
  %2658 = vrot.lane.b32.xlu0 %v2629, 32
  %v2659 = vpop.permute.xlu0 %2658
  %2660 = vrot.lane.b32.xlu0 %v2630, 32
  %v2661 = vpop.permute.xlu0 %2660
  %2662 = vrot.lane.b32.xlu0 %v2631, 32
  %v2663 = vpop.permute.xlu0 %2662
  %v2672 = vmul.f32 %v2609, %v2649
  %v2673 = vmul.f32 %v2611, %v2651
  %v2674 = vmul.f32 %v2613, %v2653
  %v2675 = vmul.f32 %v2615, %v2655
  %v2676 = vmul.f32 %v2617, %v2657
  %v2677 = vmul.f32 %v2619, %v2659
  %v2678 = vmul.f32 %v2621, %v2661
  %v2679 = vmul.f32 %v2623, %v2663
  %2688 = vrot.lane.b32.xlu0 %v2672, 32
  %v2689 = vpop.permute.xlu0 %2688
  %2690 = vrot.lane.b32.xlu0 %v2673, 32
  %v2691 = vpop.permute.xlu0 %2690
  %2692 = vrot.lane.b32.xlu0 %v2674, 32
  %v2693 = vpop.permute.xlu0 %2692
  %2694 = vrot.lane.b32.xlu0 %v2675, 32
  %v2695 = vpop.permute.xlu0 %2694
  %2696 = vrot.lane.b32.xlu0 %v2676, 32
  %v2697 = vpop.permute.xlu0 %2696
  %2698 = vrot.lane.b32.xlu0 %v2677, 32
  %v2699 = vpop.permute.xlu0 %2698
  %2700 = vrot.lane.b32.xlu0 %v2678, 32
  %v2701 = vpop.permute.xlu0 %2700
  %2702 = vrot.lane.b32.xlu0 %v2679, 32
  %v2703 = vpop.permute.xlu0 %2702
  %v2712 = vadd.f32 %v2632, %v2689
  %v2713 = vadd.f32 %v2633, %v2691
  %v2714 = vadd.f32 %v2634, %v2693
  %v2715 = vadd.f32 %v2635, %v2695
  %v2716 = vadd.f32 %v2636, %v2697
  %v2717 = vadd.f32 %v2637, %v2699
  %v2718 = vadd.f32 %v2638, %v2701
  %v2719 = vadd.f32 %v2639, %v2703
  %v2720 = vtanh.pop %v2712
  %v2721 = vtanh.pop %v2713
  %v2722 = vtanh.pop %v2714
  %v2723 = vtanh.pop %v2715
  %v2724 = vtanh.pop %v2716
  %v2725 = vtanh.pop %v2717
  %v2726 = vtanh.pop %v2718
  %v2727 = vtanh.pop %v2719
  %2736 = vrot.lane.b32.xlu0 %v2720, 32
  %v2737 = vpop.permute.xlu0 %2736
  %2738 = vrot.lane.b32.xlu0 %v2721, 32
  %v2739 = vpop.permute.xlu0 %2738
  %2740 = vrot.lane.b32.xlu0 %v2722, 32
  %v2741 = vpop.permute.xlu0 %2740
  %2742 = vrot.lane.b32.xlu0 %v2723, 32
  %v2743 = vpop.permute.xlu0 %2742
  %2744 = vrot.lane.b32.xlu0 %v2724, 32
  %v2745 = vpop.permute.xlu0 %2744
  %2746 = vrot.lane.b32.xlu0 %v2725, 32
  %v2747 = vpop.permute.xlu0 %2746
  %2748 = vrot.lane.b32.xlu0 %v2726, 32
  %v2749 = vpop.permute.xlu0 %2748
  %2750 = vrot.lane.b32.xlu0 %v2727, 32
  %v2751 = vpop.permute.xlu0 %2750
  %v2760 = vmul.f32 %v2609, %v2737
  %v2761 = vmul.f32 %v2611, %v2739
  %v2762 = vmul.f32 %v2613, %v2741
  %v2763 = vmul.f32 %v2615, %v2743
  %v2764 = vmul.f32 %v2617, %v2745
  %v2765 = vmul.f32 %v2619, %v2747
  %v2766 = vmul.f32 %v2621, %v2749
  %v2767 = vmul.f32 %v2623, %v2751
  %v2768 = vpack.c.bf16 %v2761, %v2760
  %v2769 = vpack.c.bf16 %v2763, %v2762
  %v2770 = vpack.c.bf16 %v2765, %v2764
  %v2771 = vpack.c.bf16 %v2767, %v2766
  %2776 = vrot.lane.b32.xlu0 %v2768, 64
  %v2777 = vpop.permute.xlu0 %2776
  %2778 = vrot.lane.b32.xlu0 %v2769, 64
  %v2779 = vpop.permute.xlu0 %2778
  %2780 = vrot.lane.b32.xlu0 %v2770, 64
  %v2781 = vpop.permute.xlu0 %2780
  %2782 = vrot.lane.b32.xlu0 %v2771, 64
  %v2783 = vpop.permute.xlu0 %2782
  %v2785 = vsel %vm700, %v2777, 0
  %v2788 = vsel %vm700, %v2779, 0
  %v2791 = vsel %vm700, %v2781, 0
  %v2794 = vsel %vm700, %v2783, 0
  %2796 = vmatprep.subr.bf16.mxu0 0
  %2797 = vmatpush1.bf16.msra.mxu0 %v696
  %2798 = vmatprep.subr.bf16.mxu0 0
  %2799 = vmatpush1.bf16.msra.mxu0 %v697
  %2800 = vmatprep.subr.bf16.mxu0 0
  %2801 = vmatpush1.bf16.msra.mxu0 0
  %2802 = vmatprep.subr.bf16.mxu0 0
  %2803 = vmatpush1.bf16.msra.mxu0 0
  %2804 = vmatprep.subr.bf16.mxu0 0
  %2805 = vmatpush1.bf16.msra.mxu0 0
  %2806 = vmatprep.subr.bf16.mxu0 0
  %2807 = vmatpush1.bf16.msra.mxu0 0
  %2808 = vmatprep.subr.bf16.mxu0 0
  %2809 = vmatpush1.bf16.msra.mxu0 0
  %2810 = vmatprep.subr.bf16.mxu0 0
  %2811 = vmatpush1.bf16.msra.mxu0 0
  %2812 = vmatprep.subr.bf16.mxu0 0
  %2813 = vmatpush1.bf16.msra.mxu0 0
  %2814 = vmatprep.subr.bf16.mxu0 0
  %2815 = vmatpush1.bf16.msra.mxu0 0
  %2816 = vmatprep.subr.bf16.mxu0 0
  %2817 = vmatpush1.bf16.msra.mxu0 0
  %2818 = vmatprep.subr.bf16.mxu0 0
  %2819 = vmatpush1.bf16.msra.mxu0 0
  %2820 = vmatprep.subr.bf16.mxu0 0
  %2821 = vmatpush1.bf16.msra.mxu0 0
  %2822 = vmatprep.subr.bf16.mxu0 0
  %2823 = vmatpush1.bf16.msra.mxu0 0
  %2824 = vmatprep.subr.bf16.mxu0 0
  %2825 = vmatpush1.bf16.msra.mxu0 0
  %2826 = vmatprep.subr.bf16.mxu0 0
  %2827 = vmatpush1.bf16.msra.mxu0 0
  %2828 = vmatprep.mubr.bf16.mxu0 0
  %2829 = vmatmul.mubr.bf16.gmra.mrb[0].mxu0 %v2785
  %v2830 = vpop.f32.mrb[0].mxu0
  %v2831 = vadd.f32 0.0, %v2830
  %v2832 = vpop.f32.mrb[0].mxu0
  %v2833 = vpop.f32.mrb[0].mxu0
  %v2834 = vadd.f32 0.0, %v2833
  %v2835 = vpop.f32.mrb[0].mxu0
  %2836 = vmatprep.mubr.bf16.mxu0 0
  %2837 = vmatmul.mubr.bf16.gmra.mrb[0].mxu0 %v2788
  %v2838 = vpop.f32.mrb[0].mxu0
  %v2839 = vadd.f32 0.0, %v2838
  %v2840 = vpop.f32.mrb[0].mxu0
  %v2841 = vpop.f32.mrb[0].mxu0
  %v2842 = vadd.f32 0.0, %v2841
  %v2843 = vpop.f32.mrb[0].mxu0
  %2844 = vmatprep.mubr.bf16.mxu0 0
  %2845 = vmatmul.mubr.bf16.gmra.mrb[0].mxu0 %v2791
  %v2846 = vpop.f32.mrb[0].mxu0
  %v2847 = vadd.f32 0.0, %v2846
  %v2848 = vpop.f32.mrb[0].mxu0
  %v2849 = vpop.f32.mrb[0].mxu0
  %v2850 = vadd.f32 0.0, %v2849
  %v2851 = vpop.f32.mrb[0].mxu0
  %2852 = vmatprep.mubr.bf16.mxu0 0
  %2853 = vmatmul.mubr.bf16.gmra.mrb[0].mxu0 %v2794
  %v2854 = vpop.f32.mrb[0].mxu0
  %v2855 = vadd.f32 0.0, %v2854
  %v2856 = vpop.f32.mrb[0].mxu0
  %v2857 = vpop.f32.mrb[0].mxu0
  %v2858 = vadd.f32 0.0, %v2857
  %v2859 = vpop.f32.mrb[0].mxu0
  %2860 = vdwg.mxu0
  %v2861 = vadd.f32 %v638, %v2831
  %v2862 = vadd.f32 %v641, %v2834
  %v2863 = vadd.f32 %v646, %v2839
  %v2864 = vadd.f32 %v649, %v2842
  %v2865 = vadd.f32 %v654, %v2847
  %v2866 = vadd.f32 %v657, %v2850
  %v2867 = vadd.f32 %v662, %v2855
  %v2868 = vadd.f32 %v665, %v2858
  %v2869 = vxor.u32 %v2861, 2147483648
  %v2870 = vxor.u32 %v2862, 2147483648
  %v2871 = vxor.u32 %v2863, 2147483648
  %v2872 = vxor.u32 %v2864, 2147483648
  %v2873 = vxor.u32 %v2865, 2147483648
  %v2874 = vxor.u32 %v2866, 2147483648
  %v2875 = vxor.u32 %v2867, 2147483648
  %v2876 = vxor.u32 %v2868, 2147483648
  %v2877 = vmul.f32 %v2869, 1.442695
  %v2878 = vpow.pop %v2877
  %v2879 = vmul.f32 %v2870, 1.442695
  %v2880 = vpow.pop %v2879
  %v2881 = vmul.f32 %v2871, 1.442695
  %v2882 = vpow.pop %v2881
  %v2883 = vmul.f32 %v2872, 1.442695
  %v2884 = vpow.pop %v2883
  %v2885 = vmul.f32 %v2873, 1.442695
  %v2886 = vpow.pop %v2885
  %v2887 = vmul.f32 %v2874, 1.442695
  %v2888 = vpow.pop %v2887
  %v2889 = vmul.f32 %v2875, 1.442695
  %v2890 = vpow.pop %v2889
  %v2891 = vmul.f32 %v2876, 1.442695
  %v2892 = vpow.pop %v2891
  %v2893 = vadd.f32 %v2878, 1.0
  %v2894 = vadd.f32 %v2880, 1.0
  %v2895 = vadd.f32 %v2882, 1.0
  %v2896 = vadd.f32 %v2884, 1.0
  %v2897 = vadd.f32 %v2886, 1.0
  %v2898 = vadd.f32 %v2888, 1.0
  %v2899 = vadd.f32 %v2890, 1.0
  %v2900 = vadd.f32 %v2892, 1.0
  %v2901 = vrcp.pop %v2893
  %v2902 = vmul.f32 1.0, %v2901
  %v2903 = vrcp.pop %v2894
  %v2904 = vmul.f32 1.0, %v2903
  %v2905 = vrcp.pop %v2895
  %v2906 = vmul.f32 1.0, %v2905
  %v2907 = vrcp.pop %v2896
  %v2908 = vmul.f32 1.0, %v2907
  %v2909 = vrcp.pop %v2897
  %v2910 = vmul.f32 1.0, %v2909
  %v2911 = vrcp.pop %v2898
  %v2912 = vmul.f32 1.0, %v2911
  %v2913 = vrcp.pop %v2899
  %v2914 = vmul.f32 1.0, %v2913
  %v2915 = vrcp.pop %v2900
  %v2916 = vmul.f32 1.0, %v2915
  %v2917 = vtanh.pop %v2861
  %v2918 = vtanh.pop %v2862
  %v2919 = vtanh.pop %v2863
  %v2920 = vtanh.pop %v2864
  %v2921 = vtanh.pop %v2865
  %v2922 = vtanh.pop %v2866
  %v2923 = vtanh.pop %v2867
  %v2924 = vtanh.pop %v2868
  %v2925 = vmul.f32 %v2902, %v2712
  %v2926 = vmul.f32 %v2904, %v2713
  %v2927 = vmul.f32 %v2906, %v2714
  %v2928 = vmul.f32 %v2908, %v2715
  %v2929 = vmul.f32 %v2910, %v2716
  %v2930 = vmul.f32 %v2912, %v2717
  %v2931 = vmul.f32 %v2914, %v2718
  %v2932 = vmul.f32 %v2916, %v2719
  %2941 = vrot.lane.b32.xlu0 %v2917, 32
  %v2942 = vpop.permute.xlu0 %2941
  %2943 = vrot.lane.b32.xlu0 %v2918, 32
  %v2944 = vpop.permute.xlu0 %2943
  %2945 = vrot.lane.b32.xlu0 %v2919, 32
  %v2946 = vpop.permute.xlu0 %2945
  %2947 = vrot.lane.b32.xlu0 %v2920, 32
  %v2948 = vpop.permute.xlu0 %2947
  %2949 = vrot.lane.b32.xlu0 %v2921, 32
  %v2950 = vpop.permute.xlu0 %2949
  %2951 = vrot.lane.b32.xlu0 %v2922, 32
  %v2952 = vpop.permute.xlu0 %2951
  %2953 = vrot.lane.b32.xlu0 %v2923, 32
  %v2954 = vpop.permute.xlu0 %2953
  %2955 = vrot.lane.b32.xlu0 %v2924, 32
  %v2956 = vpop.permute.xlu0 %2955
  %v2965 = vmul.f32 %v2902, %v2942
  %v2966 = vmul.f32 %v2904, %v2944
  %v2967 = vmul.f32 %v2906, %v2946
  %v2968 = vmul.f32 %v2908, %v2948
  %v2969 = vmul.f32 %v2910, %v2950
  %v2970 = vmul.f32 %v2912, %v2952
  %v2971 = vmul.f32 %v2914, %v2954
  %v2972 = vmul.f32 %v2916, %v2956
  %2981 = vrot.lane.b32.xlu0 %v2965, 32
  %v2982 = vpop.permute.xlu0 %2981
  %2983 = vrot.lane.b32.xlu0 %v2966, 32
  %v2984 = vpop.permute.xlu0 %2983
  %2985 = vrot.lane.b32.xlu0 %v2967, 32
  %v2986 = vpop.permute.xlu0 %2985
  %2987 = vrot.lane.b32.xlu0 %v2968, 32
  %v2988 = vpop.permute.xlu0 %2987
  %2989 = vrot.lane.b32.xlu0 %v2969, 32
  %v2990 = vpop.permute.xlu0 %2989
  %2991 = vrot.lane.b32.xlu0 %v2970, 32
  %v2992 = vpop.permute.xlu0 %2991
  %2993 = vrot.lane.b32.xlu0 %v2971, 32
  %v2994 = vpop.permute.xlu0 %2993
  %2995 = vrot.lane.b32.xlu0 %v2972, 32
  %v2996 = vpop.permute.xlu0 %2995
  %v3005 = vadd.f32 %v2925, %v2982
  %v3006 = vadd.f32 %v2926, %v2984
  %v3007 = vadd.f32 %v2927, %v2986
  %v3008 = vadd.f32 %v2928, %v2988
  %v3009 = vadd.f32 %v2929, %v2990
  %v3010 = vadd.f32 %v2930, %v2992
  %v3011 = vadd.f32 %v2931, %v2994
  %v3012 = vadd.f32 %v2932, %v2996
  %v3013 = vtanh.pop %v3005
  %v3014 = vtanh.pop %v3006
  %v3015 = vtanh.pop %v3007
  %v3016 = vtanh.pop %v3008
  %v3017 = vtanh.pop %v3009
  %v3018 = vtanh.pop %v3010
  %v3019 = vtanh.pop %v3011
  %v3020 = vtanh.pop %v3012
  %3029 = vrot.lane.b32.xlu0 %v3013, 32
  %v3030 = vpop.permute.xlu0 %3029
  %3031 = vrot.lane.b32.xlu0 %v3014, 32
  %v3032 = vpop.permute.xlu0 %3031
  %3033 = vrot.lane.b32.xlu0 %v3015, 32
  %v3034 = vpop.permute.xlu0 %3033
  %3035 = vrot.lane.b32.xlu0 %v3016, 32
  %v3036 = vpop.permute.xlu0 %3035
  %3037 = vrot.lane.b32.xlu0 %v3017, 32
  %v3038 = vpop.permute.xlu0 %3037
  %3039 = vrot.lane.b32.xlu0 %v3018, 32
  %v3040 = vpop.permute.xlu0 %3039
  %3041 = vrot.lane.b32.xlu0 %v3019, 32
  %v3042 = vpop.permute.xlu0 %3041
  %3043 = vrot.lane.b32.xlu0 %v3020, 32
  %v3044 = vpop.permute.xlu0 %3043
  %v3053 = vmul.f32 %v2902, %v3030
  %v3054 = vmul.f32 %v2904, %v3032
  %v3055 = vmul.f32 %v2906, %v3034
  %v3056 = vmul.f32 %v2908, %v3036
  %v3057 = vmul.f32 %v2910, %v3038
  %v3058 = vmul.f32 %v2912, %v3040
  %v3059 = vmul.f32 %v2914, %v3042
  %v3060 = vmul.f32 %v2916, %v3044
  %v3061 = vpack.c.bf16 %v3054, %v3053
  %v3062 = vpack.c.bf16 %v3056, %v3055
  %v3063 = vpack.c.bf16 %v3058, %v3057
  %v3064 = vpack.c.bf16 %v3060, %v3059
  %v3065 = vld [vmem:[%s6] sm:$0xf]
  %v3066 = vld [vmem:[%s6 + $0x4] sm:$0xf]
  %v3067 = vld [vmem:[%s6 + $0x8] sm:$0xf]
  %v3068 = vld [vmem:[%s6 + $0xc] sm:$0xf]
  %v3069 = vld [vmem:[%s7] sm:$0xf]
  %v3070 = vld [vmem:[%s7 + $0x4] sm:$0xf]
  %v3071 = vld [vmem:[%s7 + $0x8] sm:$0xf]
  %v3072 = vld [vmem:[%s7 + $0xc] sm:$0xf]
  %v3073 = vld [vmem:[%s8] sm:$0x1]
  %v3075 = vlaneseq
  %v3076 = vshrl.u32 %v3075, 7
  %v3077 = vsub.s32 0, %v3076
  %v3078 = vrot.slane %v3073, %v3077
  %3084 = vrot.lane.b32.xlu0 %v3061, 64
  %v3085 = vpop.permute.xlu0 %3084
  %3086 = vrot.lane.b32.xlu0 %v3062, 64
  %v3087 = vpop.permute.xlu0 %3086
  %3088 = vrot.lane.b32.xlu0 %v3063, 64
  %v3089 = vpop.permute.xlu0 %3088
  %3090 = vrot.lane.b32.xlu0 %v3064, 64
  %v3091 = vpop.permute.xlu0 %3090
  %v3096 = vunpack.c.l.b16 %v3065
  %v3097 = vunpack.c.l.b16 %v3066
  %v3098 = vunpack.c.l.b16 %v3067
  %v3099 = vunpack.c.l.b16 %v3068
  %v3100 = vpack.c.b16 %v3097, %v3096
  %v3101 = vpack.c.b16 %v3099, %v3098
  %v3105 = vsel %vm700, %v3085, 0
  %v3108 = vsel %vm700, %v3087, 0
  %v3111 = vsel %vm700, %v3089, 0
  %v3114 = vsel %vm700, %v3091, 0
  %3116 = vmatprep.subr.bf16.mxu0 0
  %3117 = vmatpush1.bf16.msra.mxu0 %v3100
  %3118 = vmatprep.subr.bf16.mxu0 0
  %3119 = vmatpush1.bf16.msra.mxu0 %v3101
  %3120 = vmatprep.subr.bf16.mxu0 0
  %3121 = vmatpush1.bf16.msra.mxu0 0
  %3122 = vmatprep.subr.bf16.mxu0 0
  %3123 = vmatpush1.bf16.msra.mxu0 0
  %3124 = vmatprep.subr.bf16.mxu0 0
  %3125 = vmatpush1.bf16.msra.mxu0 0
  %3126 = vmatprep.subr.bf16.mxu0 0
  %3127 = vmatpush1.bf16.msra.mxu0 0
  %3128 = vmatprep.subr.bf16.mxu0 0
  %3129 = vmatpush1.bf16.msra.mxu0 0
  %3130 = vmatprep.subr.bf16.mxu0 0
  %3131 = vmatpush1.bf16.msra.mxu0 0
  %3132 = vmatprep.subr.bf16.mxu0 0
  %3133 = vmatpush1.bf16.msra.mxu0 0
  %3134 = vmatprep.subr.bf16.mxu0 0
  %3135 = vmatpush1.bf16.msra.mxu0 0
  %3136 = vmatprep.subr.bf16.mxu0 0
  %3137 = vmatpush1.bf16.msra.mxu0 0
  %3138 = vmatprep.subr.bf16.mxu0 0
  %3139 = vmatpush1.bf16.msra.mxu0 0
  %3140 = vmatprep.subr.bf16.mxu0 0
  %3141 = vmatpush1.bf16.msra.mxu0 0
  %3142 = vmatprep.subr.bf16.mxu0 0
  %3143 = vmatpush1.bf16.msra.mxu0 0
  %3144 = vmatprep.subr.bf16.mxu0 0
  %3145 = vmatpush1.bf16.msra.mxu0 0
  %3146 = vmatprep.subr.bf16.mxu0 0
  %3147 = vmatpush1.bf16.msra.mxu0 0
  %3148 = vmatprep.mubr.bf16.mxu0 0
  %3149 = vmatmul.mubr.bf16.gmra.mrb[0].mxu0 %v1027
  %v3150 = vpop.f32.mrb[0].mxu0
  %v3151 = vadd.f32 %v3078, %v3150
  %v3152 = vpop.f32.mrb[0].mxu0
  %v3153 = vpop.f32.mrb[0].mxu0
  %v3154 = vadd.f32 %v3078, %v3153
  %v3155 = vpop.f32.mrb[0].mxu0
  %3156 = vmatprep.mubr.bf16.mxu0 0
  %3157 = vmatmul.mubr.bf16.gmra.mrb[0].mxu0 %v1030
  %v3158 = vpop.f32.mrb[0].mxu0
  %v3159 = vadd.f32 %v3078, %v3158
  %v3160 = vpop.f32.mrb[0].mxu0
  %v3161 = vpop.f32.mrb[0].mxu0
  %v3162 = vadd.f32 %v3078, %v3161
  %v3163 = vpop.f32.mrb[0].mxu0
  %3164 = vmatprep.mubr.bf16.mxu0 0
  %3165 = vmatmul.mubr.bf16.gmra.mrb[0].mxu0 %v1033
  %v3166 = vpop.f32.mrb[0].mxu0
  %v3167 = vadd.f32 %v3078, %v3166
  %v3168 = vpop.f32.mrb[0].mxu0
  %v3169 = vpop.f32.mrb[0].mxu0
  %v3170 = vadd.f32 %v3078, %v3169
  %v3171 = vpop.f32.mrb[0].mxu0
  %3172 = vmatprep.mubr.bf16.mxu0 0
  %3173 = vmatmul.mubr.bf16.gmra.mrb[0].mxu0 %v1036
  %v3174 = vpop.f32.mrb[0].mxu0
  %v3175 = vadd.f32 %v3078, %v3174
  %v3176 = vpop.f32.mrb[0].mxu0
  %v3177 = vpop.f32.mrb[0].mxu0
  %v3178 = vadd.f32 %v3078, %v3177
  %v3179 = vpop.f32.mrb[0].mxu0
  %3180 = vmatprep.mubr.bf16.mxu0 0
  %3181 = vmatmul.mubr.bf16.gmra.mrb[0].mxu0 %v1320
  %v3182 = vpop.f32.mrb[0].mxu0
  %v3183 = vadd.f32 %v3078, %v3182
  %v3184 = vpop.f32.mrb[0].mxu0
  %v3185 = vpop.f32.mrb[0].mxu0
  %v3186 = vadd.f32 %v3078, %v3185
  %v3187 = vpop.f32.mrb[0].mxu0
  %3188 = vmatprep.mubr.bf16.mxu0 0
  %3189 = vmatmul.mubr.bf16.gmra.mrb[0].mxu0 %v1323
  %v3190 = vpop.f32.mrb[0].mxu0
  %v3191 = vadd.f32 %v3078, %v3190
  %v3192 = vpop.f32.mrb[0].mxu0
  %v3193 = vpop.f32.mrb[0].mxu0
  %v3194 = vadd.f32 %v3078, %v3193
  %v3195 = vpop.f32.mrb[0].mxu0
  %3196 = vmatprep.mubr.bf16.mxu0 0
  %3197 = vmatmul.mubr.bf16.gmra.mrb[0].mxu0 %v1326
  %v3198 = vpop.f32.mrb[0].mxu0
  %v3199 = vadd.f32 %v3078, %v3198
  %v3200 = vpop.f32.mrb[0].mxu0
  %v3201 = vpop.f32.mrb[0].mxu0
  %v3202 = vadd.f32 %v3078, %v3201
  %v3203 = vpop.f32.mrb[0].mxu0
  %3204 = vmatprep.mubr.bf16.mxu0 0
  %3205 = vmatmul.mubr.bf16.gmra.mrb[0].mxu0 %v1329
  %v3206 = vpop.f32.mrb[0].mxu0
  %v3207 = vadd.f32 %v3078, %v3206
  %v3208 = vpop.f32.mrb[0].mxu0
  %v3209 = vpop.f32.mrb[0].mxu0
  %v3210 = vadd.f32 %v3078, %v3209
  %v3211 = vpop.f32.mrb[0].mxu0
  %3212 = vmatprep.mubr.bf16.mxu0 0
  %3213 = vmatmul.mubr.bf16.gmra.mrb[0].mxu0 %v1613
  %v3214 = vpop.f32.mrb[0].mxu0
  %v3215 = vadd.f32 %v3078, %v3214
  %v3216 = vpop.f32.mrb[0].mxu0
  %v3217 = vpop.f32.mrb[0].mxu0
  %v3218 = vadd.f32 %v3078, %v3217
  %v3219 = vpop.f32.mrb[0].mxu0
  %3220 = vmatprep.mubr.bf16.mxu0 0
  %3221 = vmatmul.mubr.bf16.gmra.mrb[0].mxu0 %v1616
  %v3222 = vpop.f32.mrb[0].mxu0
  %v3223 = vadd.f32 %v3078, %v3222
  %v3224 = vpop.f32.mrb[0].mxu0
  %v3225 = vpop.f32.mrb[0].mxu0
  %v3226 = vadd.f32 %v3078, %v3225
  %v3227 = vpop.f32.mrb[0].mxu0
  %3228 = vmatprep.mubr.bf16.mxu0 0
  %3229 = vmatmul.mubr.bf16.gmra.mrb[0].mxu0 %v1619
  %v3230 = vpop.f32.mrb[0].mxu0
  %v3231 = vadd.f32 %v3078, %v3230
  %v3232 = vpop.f32.mrb[0].mxu0
  %v3233 = vpop.f32.mrb[0].mxu0
  %v3234 = vadd.f32 %v3078, %v3233
  %v3235 = vpop.f32.mrb[0].mxu0
  %3236 = vmatprep.mubr.bf16.mxu0 0
  %3237 = vmatmul.mubr.bf16.gmra.mrb[0].mxu0 %v1622
  %v3238 = vpop.f32.mrb[0].mxu0
  %v3239 = vadd.f32 %v3078, %v3238
  %v3240 = vpop.f32.mrb[0].mxu0
  %v3241 = vpop.f32.mrb[0].mxu0
  %v3242 = vadd.f32 %v3078, %v3241
  %v3243 = vpop.f32.mrb[0].mxu0
  %3244 = vmatprep.mubr.bf16.mxu0 0
  %3245 = vmatmul.mubr.bf16.gmra.mrb[0].mxu0 %v1906
  %v3246 = vpop.f32.mrb[0].mxu0
  %v3247 = vadd.f32 %v3078, %v3246
  %v3248 = vpop.f32.mrb[0].mxu0
  %v3249 = vpop.f32.mrb[0].mxu0
  %v3250 = vadd.f32 %v3078, %v3249
  %v3251 = vpop.f32.mrb[0].mxu0
  %3252 = vmatprep.mubr.bf16.mxu0 0
  %3253 = vmatmul.mubr.bf16.gmra.mrb[0].mxu0 %v1909
  %v3254 = vpop.f32.mrb[0].mxu0
  %v3255 = vadd.f32 %v3078, %v3254
  %v3256 = vpop.f32.mrb[0].mxu0
  %v3257 = vpop.f32.mrb[0].mxu0
  %v3258 = vadd.f32 %v3078, %v3257
  %v3259 = vpop.f32.mrb[0].mxu0
  %3260 = vmatprep.mubr.bf16.mxu0 0
  %3261 = vmatmul.mubr.bf16.gmra.mrb[0].mxu0 %v1912
  %v3262 = vpop.f32.mrb[0].mxu0
  %v3263 = vadd.f32 %v3078, %v3262
  %v3264 = vpop.f32.mrb[0].mxu0
  %v3265 = vpop.f32.mrb[0].mxu0
  %v3266 = vadd.f32 %v3078, %v3265
  %v3267 = vpop.f32.mrb[0].mxu0
  %3268 = vmatprep.mubr.bf16.mxu0 0
  %3269 = vmatmul.mubr.bf16.gmra.mrb[0].mxu0 %v1915
  %v3270 = vpop.f32.mrb[0].mxu0
  %v3271 = vadd.f32 %v3078, %v3270
  %v3272 = vpop.f32.mrb[0].mxu0
  %v3273 = vpop.f32.mrb[0].mxu0
  %v3274 = vadd.f32 %v3078, %v3273
  %v3275 = vpop.f32.mrb[0].mxu0
  %3276 = vmatprep.mubr.bf16.mxu0 0
  %3277 = vmatmul.mubr.bf16.gmra.mrb[0].mxu0 %v2199
  %v3278 = vpop.f32.mrb[0].mxu0
  %v3279 = vadd.f32 %v3078, %v3278
  %v3280 = vpop.f32.mrb[0].mxu0
  %v3281 = vpop.f32.mrb[0].mxu0
  %v3282 = vadd.f32 %v3078, %v3281
  %v3283 = vpop.f32.mrb[0].mxu0
  %3284 = vmatprep.mubr.bf16.mxu0 0
  %3285 = vmatmul.mubr.bf16.gmra.mrb[0].mxu0 %v2202
  %v3286 = vpop.f32.mrb[0].mxu0
  %v3287 = vadd.f32 %v3078, %v3286
  %v3288 = vpop.f32.mrb[0].mxu0
  %v3289 = vpop.f32.mrb[0].mxu0
  %v3290 = vadd.f32 %v3078, %v3289
  %v3291 = vpop.f32.mrb[0].mxu0
  %3292 = vmatprep.mubr.bf16.mxu0 0
  %3293 = vmatmul.mubr.bf16.gmra.mrb[0].mxu0 %v2205
  %v3294 = vpop.f32.mrb[0].mxu0
  %v3295 = vadd.f32 %v3078, %v3294
  %v3296 = vpop.f32.mrb[0].mxu0
  %v3297 = vpop.f32.mrb[0].mxu0
  %v3298 = vadd.f32 %v3078, %v3297
  %v3299 = vpop.f32.mrb[0].mxu0
  %3300 = vmatprep.mubr.bf16.mxu0 0
  %3301 = vmatmul.mubr.bf16.gmra.mrb[0].mxu0 %v2208
  %v3302 = vpop.f32.mrb[0].mxu0
  %v3303 = vadd.f32 %v3078, %v3302
  %v3304 = vpop.f32.mrb[0].mxu0
  %v3305 = vpop.f32.mrb[0].mxu0
  %v3306 = vadd.f32 %v3078, %v3305
  %v3307 = vpop.f32.mrb[0].mxu0
  %3308 = vmatprep.mubr.bf16.mxu0 0
  %3309 = vmatmul.mubr.bf16.gmra.mrb[0].mxu0 %v2492
  %v3310 = vpop.f32.mrb[0].mxu0
  %v3311 = vadd.f32 %v3078, %v3310
  %v3312 = vpop.f32.mrb[0].mxu0
  %v3313 = vpop.f32.mrb[0].mxu0
  %v3314 = vadd.f32 %v3078, %v3313
  %v3315 = vpop.f32.mrb[0].mxu0
  %3316 = vmatprep.mubr.bf16.mxu0 0
  %3317 = vmatmul.mubr.bf16.gmra.mrb[0].mxu0 %v2495
  %v3318 = vpop.f32.mrb[0].mxu0
  %v3319 = vadd.f32 %v3078, %v3318
  %v3320 = vpop.f32.mrb[0].mxu0
  %v3321 = vpop.f32.mrb[0].mxu0
  %v3322 = vadd.f32 %v3078, %v3321
  %v3323 = vpop.f32.mrb[0].mxu0
  %3324 = vmatprep.mubr.bf16.mxu0 0
  %3325 = vmatmul.mubr.bf16.gmra.mrb[0].mxu0 %v2498
  %v3326 = vpop.f32.mrb[0].mxu0
  %v3327 = vadd.f32 %v3078, %v3326
  %v3328 = vpop.f32.mrb[0].mxu0
  %v3329 = vpop.f32.mrb[0].mxu0
  %v3330 = vadd.f32 %v3078, %v3329
  %v3331 = vpop.f32.mrb[0].mxu0
  %3332 = vmatprep.mubr.bf16.mxu0 0
  %3333 = vmatmul.mubr.bf16.gmra.mrb[0].mxu0 %v2501
  %v3334 = vpop.f32.mrb[0].mxu0
  %v3335 = vadd.f32 %v3078, %v3334
  %v3336 = vpop.f32.mrb[0].mxu0
  %v3337 = vpop.f32.mrb[0].mxu0
  %v3338 = vadd.f32 %v3078, %v3337
  %v3339 = vpop.f32.mrb[0].mxu0
  %3340 = vmatprep.mubr.bf16.mxu0 0
  %3341 = vmatmul.mubr.bf16.gmra.mrb[0].mxu0 %v2785
  %v3342 = vpop.f32.mrb[0].mxu0
  %v3343 = vadd.f32 %v3078, %v3342
  %v3344 = vpop.f32.mrb[0].mxu0
  %v3345 = vpop.f32.mrb[0].mxu0
  %v3346 = vadd.f32 %v3078, %v3345
  %v3347 = vpop.f32.mrb[0].mxu0
  %3348 = vmatprep.mubr.bf16.mxu0 0
  %3349 = vmatmul.mubr.bf16.gmra.mrb[0].mxu0 %v2788
  %v3350 = vpop.f32.mrb[0].mxu0
  %v3351 = vadd.f32 %v3078, %v3350
  %v3352 = vpop.f32.mrb[0].mxu0
  %v3353 = vpop.f32.mrb[0].mxu0
  %v3354 = vadd.f32 %v3078, %v3353
  %v3355 = vpop.f32.mrb[0].mxu0
  %3356 = vmatprep.mubr.bf16.mxu0 0
  %3357 = vmatmul.mubr.bf16.gmra.mrb[0].mxu0 %v2791
  %v3358 = vpop.f32.mrb[0].mxu0
  %v3359 = vadd.f32 %v3078, %v3358
  %v3360 = vpop.f32.mrb[0].mxu0
  %v3361 = vpop.f32.mrb[0].mxu0
  %v3362 = vadd.f32 %v3078, %v3361
  %v3363 = vpop.f32.mrb[0].mxu0
  %3364 = vmatprep.mubr.bf16.mxu0 0
  %3365 = vmatmul.mubr.bf16.gmra.mrb[0].mxu0 %v2794
  %v3366 = vpop.f32.mrb[0].mxu0
  %v3367 = vadd.f32 %v3078, %v3366
  %v3368 = vpop.f32.mrb[0].mxu0
  %v3369 = vpop.f32.mrb[0].mxu0
  %v3370 = vadd.f32 %v3078, %v3369
  %v3371 = vpop.f32.mrb[0].mxu0
  %3372 = vmatprep.mubr.bf16.mxu0 0
  %3373 = vmatmul.mubr.bf16.gmra.mrb[0].mxu0 %v3105
  %v3374 = vpop.f32.mrb[0].mxu0
  %v3375 = vadd.f32 %v3078, %v3374
  %v3376 = vpop.f32.mrb[0].mxu0
  %v3377 = vpop.f32.mrb[0].mxu0
  %v3378 = vadd.f32 %v3078, %v3377
  %v3379 = vpop.f32.mrb[0].mxu0
  %3380 = vmatprep.mubr.bf16.mxu0 0
  %3381 = vmatmul.mubr.bf16.gmra.mrb[0].mxu0 %v3108
  %v3382 = vpop.f32.mrb[0].mxu0
  %v3383 = vadd.f32 %v3078, %v3382
  %v3384 = vpop.f32.mrb[0].mxu0
  %v3385 = vpop.f32.mrb[0].mxu0
  %v3386 = vadd.f32 %v3078, %v3385
  %v3387 = vpop.f32.mrb[0].mxu0
  %3388 = vmatprep.mubr.bf16.mxu0 0
  %3389 = vmatmul.mubr.bf16.gmra.mrb[0].mxu0 %v3111
  %v3390 = vpop.f32.mrb[0].mxu0
  %v3391 = vadd.f32 %v3078, %v3390
  %v3392 = vpop.f32.mrb[0].mxu0
  %v3393 = vpop.f32.mrb[0].mxu0
  %v3394 = vadd.f32 %v3078, %v3393
  %v3395 = vpop.f32.mrb[0].mxu0
  %3396 = vmatprep.mubr.bf16.mxu0 0
  %3397 = vmatmul.mubr.bf16.gmra.mrb[0].mxu0 %v3114
  %v3398 = vpop.f32.mrb[0].mxu0
  %v3399 = vadd.f32 %v3078, %v3398
  %v3400 = vpop.f32.mrb[0].mxu0
  %v3401 = vpop.f32.mrb[0].mxu0
  %v3402 = vadd.f32 %v3078, %v3401
  %v3403 = vpop.f32.mrb[0].mxu0
  %3404 = vdwg.mxu0
  %s3405 = scalar_lea.vmem %s1, 64
  %v3406 = vld [vmem:[%s3405] sm:$0xff]
  %v3407 = vld [vmem:[%s3405 + $0x8] sm:$0xff]
  %v3408 = vld [vmem:[%s3405 + $0x10] sm:$0xff]
  %v3409 = vld [vmem:[%s3405 + $0x18] sm:$0xff]
  %v3410 = vld [vmem:[%s3405 + $0x20] sm:$0xff]
  %v3411 = vld [vmem:[%s3405 + $0x28] sm:$0xff]
  %v3412 = vld [vmem:[%s3405 + $0x30] sm:$0xff]
  %v3413 = vld [vmem:[%s3405 + $0x38] sm:$0xff]
  %s3414 = scalar_lea.vmem %s2, 64
  %v3415 = vld [vmem:[%s3414] sm:$0xff]
  %v3416 = vld [vmem:[%s3414 + $0x8] sm:$0xff]
  %v3417 = vld [vmem:[%s3414 + $0x10] sm:$0xff]
  %v3418 = vld [vmem:[%s3414 + $0x18] sm:$0xff]
  %v3419 = vld [vmem:[%s3414 + $0x20] sm:$0xff]
  %v3420 = vld [vmem:[%s3414 + $0x28] sm:$0xff]
  %v3421 = vld [vmem:[%s3414 + $0x30] sm:$0xff]
  %v3422 = vld [vmem:[%s3414 + $0x38] sm:$0xff]
  %v3423 = vpack.c.bf16 %v3407, %v3406
  %v3424 = vpack.c.bf16 %v3409, %v3408
  %v3425 = vpack.c.bf16 %v3411, %v3410
  %v3426 = vpack.c.bf16 %v3413, %v3412
  %v3431 = vunpack.c.l.b16 %v3069
  %v3432 = vunpack.c.l.b16 %v3070
  %v3433 = vunpack.c.l.b16 %v3071
  %v3434 = vunpack.c.l.b16 %v3072
  %v3435 = vpack.c.b16 %v3432, %v3431
  %v3436 = vpack.c.b16 %v3434, %v3433
  %v3440 = vsel %vm700, %v3423, 0
  %v3443 = vsel %vm700, %v3424, 0
  %v3446 = vsel %vm700, %v3425, 0
  %v3449 = vsel %vm700, %v3426, 0
  %3451 = vmatprep.subr.bf16.mxu0 0
  %3452 = vmatpush1.bf16.msra.mxu0 %v3435
  %3453 = vmatprep.subr.bf16.mxu0 0
  %3454 = vmatpush1.bf16.msra.mxu0 %v3436
  %3455 = vmatprep.subr.bf16.mxu0 0
  %3456 = vmatpush1.bf16.msra.mxu0 0
  %3457 = vmatprep.subr.bf16.mxu0 0
  %3458 = vmatpush1.bf16.msra.mxu0 0
  %3459 = vmatprep.subr.bf16.mxu0 0
  %3460 = vmatpush1.bf16.msra.mxu0 0
  %3461 = vmatprep.subr.bf16.mxu0 0
  %3462 = vmatpush1.bf16.msra.mxu0 0
  %3463 = vmatprep.subr.bf16.mxu0 0
  %3464 = vmatpush1.bf16.msra.mxu0 0
  %3465 = vmatprep.subr.bf16.mxu0 0
  %3466 = vmatpush1.bf16.msra.mxu0 0
  %3467 = vmatprep.subr.bf16.mxu0 0
  %3468 = vmatpush1.bf16.msra.mxu0 0
  %3469 = vmatprep.subr.bf16.mxu0 0
  %3470 = vmatpush1.bf16.msra.mxu0 0
  %3471 = vmatprep.subr.bf16.mxu0 0
  %3472 = vmatpush1.bf16.msra.mxu0 0
  %3473 = vmatprep.subr.bf16.mxu0 0
  %3474 = vmatpush1.bf16.msra.mxu0 0
  %3475 = vmatprep.subr.bf16.mxu0 0
  %3476 = vmatpush1.bf16.msra.mxu0 0
  %3477 = vmatprep.subr.bf16.mxu0 0
  %3478 = vmatpush1.bf16.msra.mxu0 0
  %3479 = vmatprep.subr.bf16.mxu0 0
  %3480 = vmatpush1.bf16.msra.mxu0 0
  %3481 = vmatprep.subr.bf16.mxu0 0
  %3482 = vmatpush1.bf16.msra.mxu0 0
  %3483 = vmatprep.mubr.bf16.mxu0 0
  %3484 = vmatmul.mubr.bf16.gmra.mrb[0].mxu0 %v3440
  %v3485 = vpop.f32.mrb[0].mxu0
  %v3486 = vadd.f32 0.0, %v3485
  %v3487 = vpop.f32.mrb[0].mxu0
  %v3488 = vpop.f32.mrb[0].mxu0
  %v3489 = vadd.f32 0.0, %v3488
  %v3490 = vpop.f32.mrb[0].mxu0
  %3491 = vmatprep.mubr.bf16.mxu0 0
  %3492 = vmatmul.mubr.bf16.gmra.mrb[0].mxu0 %v3443
  %v3493 = vpop.f32.mrb[0].mxu0
  %v3494 = vadd.f32 0.0, %v3493
  %v3495 = vpop.f32.mrb[0].mxu0
  %v3496 = vpop.f32.mrb[0].mxu0
  %v3497 = vadd.f32 0.0, %v3496
  %v3498 = vpop.f32.mrb[0].mxu0
  %3499 = vmatprep.mubr.bf16.mxu0 0
  %3500 = vmatmul.mubr.bf16.gmra.mrb[0].mxu0 %v3446
  %v3501 = vpop.f32.mrb[0].mxu0
  %v3502 = vadd.f32 0.0, %v3501
  %v3503 = vpop.f32.mrb[0].mxu0
  %v3504 = vpop.f32.mrb[0].mxu0
  %v3505 = vadd.f32 0.0, %v3504
  %v3506 = vpop.f32.mrb[0].mxu0
  %3507 = vmatprep.mubr.bf16.mxu0 0
  %3508 = vmatmul.mubr.bf16.gmra.mrb[0].mxu0 %v3449
  %v3509 = vpop.f32.mrb[0].mxu0
  %v3510 = vadd.f32 0.0, %v3509
  %v3511 = vpop.f32.mrb[0].mxu0
  %v3512 = vpop.f32.mrb[0].mxu0
  %v3513 = vadd.f32 0.0, %v3512
  %v3514 = vpop.f32.mrb[0].mxu0
  %3515 = vdwg.mxu0
  %v3516 = vadd.f32 %v3151, %v3486
  %v3517 = vadd.f32 %v3154, %v3489
  %v3518 = vadd.f32 %v3159, %v3494
  %v3519 = vadd.f32 %v3162, %v3497
  %v3520 = vadd.f32 %v3167, %v3502
  %v3521 = vadd.f32 %v3170, %v3505
  %v3522 = vadd.f32 %v3175, %v3510
  %v3523 = vadd.f32 %v3178, %v3513
  %v3524 = vxor.u32 %v3516, 2147483648
  %v3525 = vxor.u32 %v3517, 2147483648
  %v3526 = vxor.u32 %v3518, 2147483648
  %v3527 = vxor.u32 %v3519, 2147483648
  %v3528 = vxor.u32 %v3520, 2147483648
  %v3529 = vxor.u32 %v3521, 2147483648
  %v3530 = vxor.u32 %v3522, 2147483648
  %v3531 = vxor.u32 %v3523, 2147483648
  %v3532 = vmul.f32 %v3524, 1.442695
  %v3533 = vpow.pop %v3532
  %v3534 = vmul.f32 %v3525, 1.442695
  %v3535 = vpow.pop %v3534
  %v3536 = vmul.f32 %v3526, 1.442695
  %v3537 = vpow.pop %v3536
  %v3538 = vmul.f32 %v3527, 1.442695
  %v3539 = vpow.pop %v3538
  %v3540 = vmul.f32 %v3528, 1.442695
  %v3541 = vpow.pop %v3540
  %v3542 = vmul.f32 %v3529, 1.442695
  %v3543 = vpow.pop %v3542
  %v3544 = vmul.f32 %v3530, 1.442695
  %v3545 = vpow.pop %v3544
  %v3546 = vmul.f32 %v3531, 1.442695
  %v3547 = vpow.pop %v3546
  %v3548 = vadd.f32 %v3533, 1.0
  %v3549 = vadd.f32 %v3535, 1.0
  %v3550 = vadd.f32 %v3537, 1.0
  %v3551 = vadd.f32 %v3539, 1.0
  %v3552 = vadd.f32 %v3541, 1.0
  %v3553 = vadd.f32 %v3543, 1.0
  %v3554 = vadd.f32 %v3545, 1.0
  %v3555 = vadd.f32 %v3547, 1.0
  %v3556 = vrcp.pop %v3548
  %v3557 = vmul.f32 1.0, %v3556
  %v3558 = vrcp.pop %v3549
  %v3559 = vmul.f32 1.0, %v3558
  %v3560 = vrcp.pop %v3550
  %v3561 = vmul.f32 1.0, %v3560
  %v3562 = vrcp.pop %v3551
  %v3563 = vmul.f32 1.0, %v3562
  %v3564 = vrcp.pop %v3552
  %v3565 = vmul.f32 1.0, %v3564
  %v3566 = vrcp.pop %v3553
  %v3567 = vmul.f32 1.0, %v3566
  %v3568 = vrcp.pop %v3554
  %v3569 = vmul.f32 1.0, %v3568
  %v3570 = vrcp.pop %v3555
  %v3571 = vmul.f32 1.0, %v3570
  %v3572 = vtanh.pop %v3516
  %v3573 = vtanh.pop %v3517
  %v3574 = vtanh.pop %v3518
  %v3575 = vtanh.pop %v3519
  %v3576 = vtanh.pop %v3520
  %v3577 = vtanh.pop %v3521
  %v3578 = vtanh.pop %v3522
  %v3579 = vtanh.pop %v3523
  %3588 = vrot.lane.b32.xlu0 %v3415, 32
  %v3589 = vpop.permute.xlu0 %3588
  %3590 = vrot.lane.b32.xlu0 %v3416, 32
  %v3591 = vpop.permute.xlu0 %3590
  %3592 = vrot.lane.b32.xlu0 %v3417, 32
  %v3593 = vpop.permute.xlu0 %3592
  %3594 = vrot.lane.b32.xlu0 %v3418, 32
  %v3595 = vpop.permute.xlu0 %3594
  %3596 = vrot.lane.b32.xlu0 %v3419, 32
  %v3597 = vpop.permute.xlu0 %3596
  %3598 = vrot.lane.b32.xlu0 %v3420, 32
  %v3599 = vpop.permute.xlu0 %3598
  %3600 = vrot.lane.b32.xlu0 %v3421, 32
  %v3601 = vpop.permute.xlu0 %3600
  %3602 = vrot.lane.b32.xlu0 %v3422, 32
  %v3603 = vpop.permute.xlu0 %3602
  %v3612 = vmul.f32 %v3557, %v3589
  %v3613 = vmul.f32 %v3559, %v3591
  %v3614 = vmul.f32 %v3561, %v3593
  %v3615 = vmul.f32 %v3563, %v3595
  %v3616 = vmul.f32 %v3565, %v3597
  %v3617 = vmul.f32 %v3567, %v3599
  %v3618 = vmul.f32 %v3569, %v3601
  %v3619 = vmul.f32 %v3571, %v3603
  %3628 = vrot.lane.b32.xlu0 %v3572, 32
  %v3629 = vpop.permute.xlu0 %3628
  %3630 = vrot.lane.b32.xlu0 %v3573, 32
  %v3631 = vpop.permute.xlu0 %3630
  %3632 = vrot.lane.b32.xlu0 %v3574, 32
  %v3633 = vpop.permute.xlu0 %3632
  %3634 = vrot.lane.b32.xlu0 %v3575, 32
  %v3635 = vpop.permute.xlu0 %3634
  %3636 = vrot.lane.b32.xlu0 %v3576, 32
  %v3637 = vpop.permute.xlu0 %3636
  %3638 = vrot.lane.b32.xlu0 %v3577, 32
  %v3639 = vpop.permute.xlu0 %3638
  %3640 = vrot.lane.b32.xlu0 %v3578, 32
  %v3641 = vpop.permute.xlu0 %3640
  %3642 = vrot.lane.b32.xlu0 %v3579, 32
  %v3643 = vpop.permute.xlu0 %3642
  %v3652 = vmul.f32 %v3557, %v3629
  %v3653 = vmul.f32 %v3559, %v3631
  %v3654 = vmul.f32 %v3561, %v3633
  %v3655 = vmul.f32 %v3563, %v3635
  %v3656 = vmul.f32 %v3565, %v3637
  %v3657 = vmul.f32 %v3567, %v3639
  %v3658 = vmul.f32 %v3569, %v3641
  %v3659 = vmul.f32 %v3571, %v3643
  %3668 = vrot.lane.b32.xlu0 %v3652, 32
  %v3669 = vpop.permute.xlu0 %3668
  %3670 = vrot.lane.b32.xlu0 %v3653, 32
  %v3671 = vpop.permute.xlu0 %3670
  %3672 = vrot.lane.b32.xlu0 %v3654, 32
  %v3673 = vpop.permute.xlu0 %3672
  %3674 = vrot.lane.b32.xlu0 %v3655, 32
  %v3675 = vpop.permute.xlu0 %3674
  %3676 = vrot.lane.b32.xlu0 %v3656, 32
  %v3677 = vpop.permute.xlu0 %3676
  %3678 = vrot.lane.b32.xlu0 %v3657, 32
  %v3679 = vpop.permute.xlu0 %3678
  %3680 = vrot.lane.b32.xlu0 %v3658, 32
  %v3681 = vpop.permute.xlu0 %3680
  %3682 = vrot.lane.b32.xlu0 %v3659, 32
  %v3683 = vpop.permute.xlu0 %3682
  %v3692 = vadd.f32 %v3612, %v3669
  %v3693 = vadd.f32 %v3613, %v3671
  %v3694 = vadd.f32 %v3614, %v3673
  %v3695 = vadd.f32 %v3615, %v3675
  %v3696 = vadd.f32 %v3616, %v3677
  %v3697 = vadd.f32 %v3617, %v3679
  %v3698 = vadd.f32 %v3618, %v3681
  %v3699 = vadd.f32 %v3619, %v3683
  %v3700 = vtanh.pop %v3692
  %v3701 = vtanh.pop %v3693
  %v3702 = vtanh.pop %v3694
  %v3703 = vtanh.pop %v3695
  %v3704 = vtanh.pop %v3696
  %v3705 = vtanh.pop %v3697
  %v3706 = vtanh.pop %v3698
  %v3707 = vtanh.pop %v3699
  %3716 = vrot.lane.b32.xlu0 %v3700, 32
  %v3717 = vpop.permute.xlu0 %3716
  %3718 = vrot.lane.b32.xlu0 %v3701, 32
  %v3719 = vpop.permute.xlu0 %3718
  %3720 = vrot.lane.b32.xlu0 %v3702, 32
  %v3721 = vpop.permute.xlu0 %3720
  %3722 = vrot.lane.b32.xlu0 %v3703, 32
  %v3723 = vpop.permute.xlu0 %3722
  %3724 = vrot.lane.b32.xlu0 %v3704, 32
  %v3725 = vpop.permute.xlu0 %3724
  %3726 = vrot.lane.b32.xlu0 %v3705, 32
  %v3727 = vpop.permute.xlu0 %3726
  %3728 = vrot.lane.b32.xlu0 %v3706, 32
  %v3729 = vpop.permute.xlu0 %3728
  %3730 = vrot.lane.b32.xlu0 %v3707, 32
  %v3731 = vpop.permute.xlu0 %3730
  %v3740 = vmul.f32 %v3557, %v3717
  %v3741 = vmul.f32 %v3559, %v3719
  %v3742 = vmul.f32 %v3561, %v3721
  %v3743 = vmul.f32 %v3563, %v3723
  %v3744 = vmul.f32 %v3565, %v3725
  %v3745 = vmul.f32 %v3567, %v3727
  %v3746 = vmul.f32 %v3569, %v3729
  %v3747 = vmul.f32 %v3571, %v3731
  %v3748 = vpack.c.bf16 %v3741, %v3740
  %v3749 = vpack.c.bf16 %v3743, %v3742
  %v3750 = vpack.c.bf16 %v3745, %v3744
  %v3751 = vpack.c.bf16 %v3747, %v3746
  %3756 = vrot.lane.b32.xlu0 %v3748, 64
  %v3757 = vpop.permute.xlu0 %3756
  %3758 = vrot.lane.b32.xlu0 %v3749, 64
  %v3759 = vpop.permute.xlu0 %3758
  %3760 = vrot.lane.b32.xlu0 %v3750, 64
  %v3761 = vpop.permute.xlu0 %3760
  %3762 = vrot.lane.b32.xlu0 %v3751, 64
  %v3763 = vpop.permute.xlu0 %3762
  %v3765 = vsel %vm700, %v3757, 0
  %v3768 = vsel %vm700, %v3759, 0
  %v3771 = vsel %vm700, %v3761, 0
  %v3774 = vsel %vm700, %v3763, 0
  %3776 = vmatprep.subr.bf16.mxu0 0
  %3777 = vmatpush1.bf16.msra.mxu0 %v3435
  %3778 = vmatprep.subr.bf16.mxu0 0
  %3779 = vmatpush1.bf16.msra.mxu0 %v3436
  %3780 = vmatprep.subr.bf16.mxu0 0
  %3781 = vmatpush1.bf16.msra.mxu0 0
  %3782 = vmatprep.subr.bf16.mxu0 0
  %3783 = vmatpush1.bf16.msra.mxu0 0
  %3784 = vmatprep.subr.bf16.mxu0 0
  %3785 = vmatpush1.bf16.msra.mxu0 0
  %3786 = vmatprep.subr.bf16.mxu0 0
  %3787 = vmatpush1.bf16.msra.mxu0 0
  %3788 = vmatprep.subr.bf16.mxu0 0
  %3789 = vmatpush1.bf16.msra.mxu0 0
  %3790 = vmatprep.subr.bf16.mxu0 0
  %3791 = vmatpush1.bf16.msra.mxu0 0
  %3792 = vmatprep.subr.bf16.mxu0 0
  %3793 = vmatpush1.bf16.msra.mxu0 0
  %3794 = vmatprep.subr.bf16.mxu0 0
  %3795 = vmatpush1.bf16.msra.mxu0 0
  %3796 = vmatprep.subr.bf16.mxu0 0
  %3797 = vmatpush1.bf16.msra.mxu0 0
  %3798 = vmatprep.subr.bf16.mxu0 0
  %3799 = vmatpush1.bf16.msra.mxu0 0
  %3800 = vmatprep.subr.bf16.mxu0 0
  %3801 = vmatpush1.bf16.msra.mxu0 0
  %3802 = vmatprep.subr.bf16.mxu0 0
  %3803 = vmatpush1.bf16.msra.mxu0 0
  %3804 = vmatprep.subr.bf16.mxu0 0
  %3805 = vmatpush1.bf16.msra.mxu0 0
  %3806 = vmatprep.subr.bf16.mxu0 0
  %3807 = vmatpush1.bf16.msra.mxu0 0
  %3808 = vmatprep.mubr.bf16.mxu0 0
  %3809 = vmatmul.mubr.bf16.gmra.mrb[0].mxu0 %v3765
  %v3810 = vpop.f32.mrb[0].mxu0
  %v3811 = vadd.f32 0.0, %v3810
  %v3812 = vpop.f32.mrb[0].mxu0
  %v3813 = vpop.f32.mrb[0].mxu0
  %v3814 = vadd.f32 0.0, %v3813
  %v3815 = vpop.f32.mrb[0].mxu0
  %3816 = vmatprep.mubr.bf16.mxu0 0
  %3817 = vmatmul.mubr.bf16.gmra.mrb[0].mxu0 %v3768
  %v3818 = vpop.f32.mrb[0].mxu0
  %v3819 = vadd.f32 0.0, %v3818
  %v3820 = vpop.f32.mrb[0].mxu0
  %v3821 = vpop.f32.mrb[0].mxu0
  %v3822 = vadd.f32 0.0, %v3821
  %v3823 = vpop.f32.mrb[0].mxu0
  %3824 = vmatprep.mubr.bf16.mxu0 0
  %3825 = vmatmul.mubr.bf16.gmra.mrb[0].mxu0 %v3771
  %v3826 = vpop.f32.mrb[0].mxu0
  %v3827 = vadd.f32 0.0, %v3826
  %v3828 = vpop.f32.mrb[0].mxu0
  %v3829 = vpop.f32.mrb[0].mxu0
  %v3830 = vadd.f32 0.0, %v3829
  %v3831 = vpop.f32.mrb[0].mxu0
  %3832 = vmatprep.mubr.bf16.mxu0 0
  %3833 = vmatmul.mubr.bf16.gmra.mrb[0].mxu0 %v3774
  %v3834 = vpop.f32.mrb[0].mxu0
  %v3835 = vadd.f32 0.0, %v3834
  %v3836 = vpop.f32.mrb[0].mxu0
  %v3837 = vpop.f32.mrb[0].mxu0
  %v3838 = vadd.f32 0.0, %v3837
  %v3839 = vpop.f32.mrb[0].mxu0
  %3840 = vdwg.mxu0
  %v3841 = vadd.f32 %v3183, %v3811
  %v3842 = vadd.f32 %v3186, %v3814
  %v3843 = vadd.f32 %v3191, %v3819
  %v3844 = vadd.f32 %v3194, %v3822
  %v3845 = vadd.f32 %v3199, %v3827
  %v3846 = vadd.f32 %v3202, %v3830
  %v3847 = vadd.f32 %v3207, %v3835
  %v3848 = vadd.f32 %v3210, %v3838
  %v3849 = vxor.u32 %v3841, 2147483648
  %v3850 = vxor.u32 %v3842, 2147483648
  %v3851 = vxor.u32 %v3843, 2147483648
  %v3852 = vxor.u32 %v3844, 2147483648
  %v3853 = vxor.u32 %v3845, 2147483648
  %v3854 = vxor.u32 %v3846, 2147483648
  %v3855 = vxor.u32 %v3847, 2147483648
  %v3856 = vxor.u32 %v3848, 2147483648
  %v3857 = vmul.f32 %v3849, 1.442695
  %v3858 = vpow.pop %v3857
  %v3859 = vmul.f32 %v3850, 1.442695
  %v3860 = vpow.pop %v3859
  %v3861 = vmul.f32 %v3851, 1.442695
  %v3862 = vpow.pop %v3861
  %v3863 = vmul.f32 %v3852, 1.442695
  %v3864 = vpow.pop %v3863
  %v3865 = vmul.f32 %v3853, 1.442695
  %v3866 = vpow.pop %v3865
  %v3867 = vmul.f32 %v3854, 1.442695
  %v3868 = vpow.pop %v3867
  %v3869 = vmul.f32 %v3855, 1.442695
  %v3870 = vpow.pop %v3869
  %v3871 = vmul.f32 %v3856, 1.442695
  %v3872 = vpow.pop %v3871
  %v3873 = vadd.f32 %v3858, 1.0
  %v3874 = vadd.f32 %v3860, 1.0
  %v3875 = vadd.f32 %v3862, 1.0
  %v3876 = vadd.f32 %v3864, 1.0
  %v3877 = vadd.f32 %v3866, 1.0
  %v3878 = vadd.f32 %v3868, 1.0
  %v3879 = vadd.f32 %v3870, 1.0
  %v3880 = vadd.f32 %v3872, 1.0
  %v3881 = vrcp.pop %v3873
  %v3882 = vmul.f32 1.0, %v3881
  %v3883 = vrcp.pop %v3874
  %v3884 = vmul.f32 1.0, %v3883
  %v3885 = vrcp.pop %v3875
  %v3886 = vmul.f32 1.0, %v3885
  %v3887 = vrcp.pop %v3876
  %v3888 = vmul.f32 1.0, %v3887
  %v3889 = vrcp.pop %v3877
  %v3890 = vmul.f32 1.0, %v3889
  %v3891 = vrcp.pop %v3878
  %v3892 = vmul.f32 1.0, %v3891
  %v3893 = vrcp.pop %v3879
  %v3894 = vmul.f32 1.0, %v3893
  %v3895 = vrcp.pop %v3880
  %v3896 = vmul.f32 1.0, %v3895
  %v3897 = vtanh.pop %v3841
  %v3898 = vtanh.pop %v3842
  %v3899 = vtanh.pop %v3843
  %v3900 = vtanh.pop %v3844
  %v3901 = vtanh.pop %v3845
  %v3902 = vtanh.pop %v3846
  %v3903 = vtanh.pop %v3847
  %v3904 = vtanh.pop %v3848
  %v3905 = vmul.f32 %v3882, %v3692
  %v3906 = vmul.f32 %v3884, %v3693
  %v3907 = vmul.f32 %v3886, %v3694
  %v3908 = vmul.f32 %v3888, %v3695
  %v3909 = vmul.f32 %v3890, %v3696
  %v3910 = vmul.f32 %v3892, %v3697
  %v3911 = vmul.f32 %v3894, %v3698
  %v3912 = vmul.f32 %v3896, %v3699
  %3921 = vrot.lane.b32.xlu0 %v3897, 32
  %v3922 = vpop.permute.xlu0 %3921
  %3923 = vrot.lane.b32.xlu0 %v3898, 32
  %v3924 = vpop.permute.xlu0 %3923
  %3925 = vrot.lane.b32.xlu0 %v3899, 32
  %v3926 = vpop.permute.xlu0 %3925
  %3927 = vrot.lane.b32.xlu0 %v3900, 32
  %v3928 = vpop.permute.xlu0 %3927
  %3929 = vrot.lane.b32.xlu0 %v3901, 32
  %v3930 = vpop.permute.xlu0 %3929
  %3931 = vrot.lane.b32.xlu0 %v3902, 32
  %v3932 = vpop.permute.xlu0 %3931
  %3933 = vrot.lane.b32.xlu0 %v3903, 32
  %v3934 = vpop.permute.xlu0 %3933
  %3935 = vrot.lane.b32.xlu0 %v3904, 32
  %v3936 = vpop.permute.xlu0 %3935
  %v3945 = vmul.f32 %v3882, %v3922
  %v3946 = vmul.f32 %v3884, %v3924
  %v3947 = vmul.f32 %v3886, %v3926
  %v3948 = vmul.f32 %v3888, %v3928
  %v3949 = vmul.f32 %v3890, %v3930
  %v3950 = vmul.f32 %v3892, %v3932
  %v3951 = vmul.f32 %v3894, %v3934
  %v3952 = vmul.f32 %v3896, %v3936
  %3961 = vrot.lane.b32.xlu0 %v3945, 32
  %v3962 = vpop.permute.xlu0 %3961
  %3963 = vrot.lane.b32.xlu0 %v3946, 32
  %v3964 = vpop.permute.xlu0 %3963
  %3965 = vrot.lane.b32.xlu0 %v3947, 32
  %v3966 = vpop.permute.xlu0 %3965
  %3967 = vrot.lane.b32.xlu0 %v3948, 32
  %v3968 = vpop.permute.xlu0 %3967
  %3969 = vrot.lane.b32.xlu0 %v3949, 32
  %v3970 = vpop.permute.xlu0 %3969
  %3971 = vrot.lane.b32.xlu0 %v3950, 32
  %v3972 = vpop.permute.xlu0 %3971
  %3973 = vrot.lane.b32.xlu0 %v3951, 32
  %v3974 = vpop.permute.xlu0 %3973
  %3975 = vrot.lane.b32.xlu0 %v3952, 32
  %v3976 = vpop.permute.xlu0 %3975
  %v3985 = vadd.f32 %v3905, %v3962
  %v3986 = vadd.f32 %v3906, %v3964
  %v3987 = vadd.f32 %v3907, %v3966
  %v3988 = vadd.f32 %v3908, %v3968
  %v3989 = vadd.f32 %v3909, %v3970
  %v3990 = vadd.f32 %v3910, %v3972
  %v3991 = vadd.f32 %v3911, %v3974
  %v3992 = vadd.f32 %v3912, %v3976
  %v3993 = vtanh.pop %v3985
  %v3994 = vtanh.pop %v3986
  %v3995 = vtanh.pop %v3987
  %v3996 = vtanh.pop %v3988
  %v3997 = vtanh.pop %v3989
  %v3998 = vtanh.pop %v3990
  %v3999 = vtanh.pop %v3991
  %v4000 = vtanh.pop %v3992
  %4009 = vrot.lane.b32.xlu0 %v3993, 32
  %v4010 = vpop.permute.xlu0 %4009
  %4011 = vrot.lane.b32.xlu0 %v3994, 32
  %v4012 = vpop.permute.xlu0 %4011
  %4013 = vrot.lane.b32.xlu0 %v3995, 32
  %v4014 = vpop.permute.xlu0 %4013
  %4015 = vrot.lane.b32.xlu0 %v3996, 32
  %v4016 = vpop.permute.xlu0 %4015
  %4017 = vrot.lane.b32.xlu0 %v3997, 32
  %v4018 = vpop.permute.xlu0 %4017
  %4019 = vrot.lane.b32.xlu0 %v3998, 32
  %v4020 = vpop.permute.xlu0 %4019
  %4021 = vrot.lane.b32.xlu0 %v3999, 32
  %v4022 = vpop.permute.xlu0 %4021
  %4023 = vrot.lane.b32.xlu0 %v4000, 32
  %v4024 = vpop.permute.xlu0 %4023
  %v4033 = vmul.f32 %v3882, %v4010
  %v4034 = vmul.f32 %v3884, %v4012
  %v4035 = vmul.f32 %v3886, %v4014
  %v4036 = vmul.f32 %v3888, %v4016
  %v4037 = vmul.f32 %v3890, %v4018
  %v4038 = vmul.f32 %v3892, %v4020
  %v4039 = vmul.f32 %v3894, %v4022
  %v4040 = vmul.f32 %v3896, %v4024
  %v4041 = vpack.c.bf16 %v4034, %v4033
  %v4042 = vpack.c.bf16 %v4036, %v4035
  %v4043 = vpack.c.bf16 %v4038, %v4037
  %v4044 = vpack.c.bf16 %v4040, %v4039
  %4049 = vrot.lane.b32.xlu0 %v4041, 64
  %v4050 = vpop.permute.xlu0 %4049
  %4051 = vrot.lane.b32.xlu0 %v4042, 64
  %v4052 = vpop.permute.xlu0 %4051
  %4053 = vrot.lane.b32.xlu0 %v4043, 64
  %v4054 = vpop.permute.xlu0 %4053
  %4055 = vrot.lane.b32.xlu0 %v4044, 64
  %v4056 = vpop.permute.xlu0 %4055
  %v4058 = vsel %vm700, %v4050, 0
  %v4061 = vsel %vm700, %v4052, 0
  %v4064 = vsel %vm700, %v4054, 0
  %v4067 = vsel %vm700, %v4056, 0
  %4069 = vmatprep.subr.bf16.mxu0 0
  %4070 = vmatpush1.bf16.msra.mxu0 %v3435
  %4071 = vmatprep.subr.bf16.mxu0 0
  %4072 = vmatpush1.bf16.msra.mxu0 %v3436
  %4073 = vmatprep.subr.bf16.mxu0 0
  %4074 = vmatpush1.bf16.msra.mxu0 0
  %4075 = vmatprep.subr.bf16.mxu0 0
  %4076 = vmatpush1.bf16.msra.mxu0 0
  %4077 = vmatprep.subr.bf16.mxu0 0
  %4078 = vmatpush1.bf16.msra.mxu0 0
  %4079 = vmatprep.subr.bf16.mxu0 0
  %4080 = vmatpush1.bf16.msra.mxu0 0
  %4081 = vmatprep.subr.bf16.mxu0 0
  %4082 = vmatpush1.bf16.msra.mxu0 0
  %4083 = vmatprep.subr.bf16.mxu0 0
  %4084 = vmatpush1.bf16.msra.mxu0 0
  %4085 = vmatprep.subr.bf16.mxu0 0
  %4086 = vmatpush1.bf16.msra.mxu0 0
  %4087 = vmatprep.subr.bf16.mxu0 0
  %4088 = vmatpush1.bf16.msra.mxu0 0
  %4089 = vmatprep.subr.bf16.mxu0 0
  %4090 = vmatpush1.bf16.msra.mxu0 0
  %4091 = vmatprep.subr.bf16.mxu0 0
  %4092 = vmatpush1.bf16.msra.mxu0 0
  %4093 = vmatprep.subr.bf16.mxu0 0
  %4094 = vmatpush1.bf16.msra.mxu0 0
  %4095 = vmatprep.subr.bf16.mxu0 0
  %4096 = vmatpush1.bf16.msra.mxu0 0
  %4097 = vmatprep.subr.bf16.mxu0 0
  %4098 = vmatpush1.bf16.msra.mxu0 0
  %4099 = vmatprep.subr.bf16.mxu0 0
  %4100 = vmatpush1.bf16.msra.mxu0 0
  %4101 = vmatprep.mubr.bf16.mxu0 0
  %4102 = vmatmul.mubr.bf16.gmra.mrb[0].mxu0 %v4058
  %v4103 = vpop.f32.mrb[0].mxu0
  %v4104 = vadd.f32 0.0, %v4103
  %v4105 = vpop.f32.mrb[0].mxu0
  %v4106 = vpop.f32.mrb[0].mxu0
  %v4107 = vadd.f32 0.0, %v4106
  %v4108 = vpop.f32.mrb[0].mxu0
  %4109 = vmatprep.mubr.bf16.mxu0 0
  %4110 = vmatmul.mubr.bf16.gmra.mrb[0].mxu0 %v4061
  %v4111 = vpop.f32.mrb[0].mxu0
  %v4112 = vadd.f32 0.0, %v4111
  %v4113 = vpop.f32.mrb[0].mxu0
  %v4114 = vpop.f32.mrb[0].mxu0
  %v4115 = vadd.f32 0.0, %v4114
  %v4116 = vpop.f32.mrb[0].mxu0
  %4117 = vmatprep.mubr.bf16.mxu0 0
  %4118 = vmatmul.mubr.bf16.gmra.mrb[0].mxu0 %v4064
  %v4119 = vpop.f32.mrb[0].mxu0
  %v4120 = vadd.f32 0.0, %v4119
  %v4121 = vpop.f32.mrb[0].mxu0
  %v4122 = vpop.f32.mrb[0].mxu0
  %v4123 = vadd.f32 0.0, %v4122
  %v4124 = vpop.f32.mrb[0].mxu0
  %4125 = vmatprep.mubr.bf16.mxu0 0
  %4126 = vmatmul.mubr.bf16.gmra.mrb[0].mxu0 %v4067
  %v4127 = vpop.f32.mrb[0].mxu0
  %v4128 = vadd.f32 0.0, %v4127
  %v4129 = vpop.f32.mrb[0].mxu0
  %v4130 = vpop.f32.mrb[0].mxu0
  %v4131 = vadd.f32 0.0, %v4130
  %v4132 = vpop.f32.mrb[0].mxu0
  %4133 = vdwg.mxu0
  %v4134 = vadd.f32 %v3215, %v4104
  %v4135 = vadd.f32 %v3218, %v4107
  %v4136 = vadd.f32 %v3223, %v4112
  %v4137 = vadd.f32 %v3226, %v4115
  %v4138 = vadd.f32 %v3231, %v4120
  %v4139 = vadd.f32 %v3234, %v4123
  %v4140 = vadd.f32 %v3239, %v4128
  %v4141 = vadd.f32 %v3242, %v4131
  %v4142 = vxor.u32 %v4134, 2147483648
  %v4143 = vxor.u32 %v4135, 2147483648
  %v4144 = vxor.u32 %v4136, 2147483648
  %v4145 = vxor.u32 %v4137, 2147483648
  %v4146 = vxor.u32 %v4138, 2147483648
  %v4147 = vxor.u32 %v4139, 2147483648
  %v4148 = vxor.u32 %v4140, 2147483648
  %v4149 = vxor.u32 %v4141, 2147483648
  %v4150 = vmul.f32 %v4142, 1.442695
  %v4151 = vpow.pop %v4150
  %v4152 = vmul.f32 %v4143, 1.442695
  %v4153 = vpow.pop %v4152
  %v4154 = vmul.f32 %v4144, 1.442695
  %v4155 = vpow.pop %v4154
  %v4156 = vmul.f32 %v4145, 1.442695
  %v4157 = vpow.pop %v4156
  %v4158 = vmul.f32 %v4146, 1.442695
  %v4159 = vpow.pop %v4158
  %v4160 = vmul.f32 %v4147, 1.442695
  %v4161 = vpow.pop %v4160
  %v4162 = vmul.f32 %v4148, 1.442695
  %v4163 = vpow.pop %v4162
  %v4164 = vmul.f32 %v4149, 1.442695
  %v4165 = vpow.pop %v4164
  %v4166 = vadd.f32 %v4151, 1.0
  %v4167 = vadd.f32 %v4153, 1.0
  %v4168 = vadd.f32 %v4155, 1.0
  %v4169 = vadd.f32 %v4157, 1.0
  %v4170 = vadd.f32 %v4159, 1.0
  %v4171 = vadd.f32 %v4161, 1.0
  %v4172 = vadd.f32 %v4163, 1.0
  %v4173 = vadd.f32 %v4165, 1.0
  %v4174 = vrcp.pop %v4166
  %v4175 = vmul.f32 1.0, %v4174
  %v4176 = vrcp.pop %v4167
  %v4177 = vmul.f32 1.0, %v4176
  %v4178 = vrcp.pop %v4168
  %v4179 = vmul.f32 1.0, %v4178
  %v4180 = vrcp.pop %v4169
  %v4181 = vmul.f32 1.0, %v4180
  %v4182 = vrcp.pop %v4170
  %v4183 = vmul.f32 1.0, %v4182
  %v4184 = vrcp.pop %v4171
  %v4185 = vmul.f32 1.0, %v4184
  %v4186 = vrcp.pop %v4172
  %v4187 = vmul.f32 1.0, %v4186
  %v4188 = vrcp.pop %v4173
  %v4189 = vmul.f32 1.0, %v4188
  %v4190 = vtanh.pop %v4134
  %v4191 = vtanh.pop %v4135
  %v4192 = vtanh.pop %v4136
  %v4193 = vtanh.pop %v4137
  %v4194 = vtanh.pop %v4138
  %v4195 = vtanh.pop %v4139
  %v4196 = vtanh.pop %v4140
  %v4197 = vtanh.pop %v4141
  %v4198 = vmul.f32 %v4175, %v3985
  %v4199 = vmul.f32 %v4177, %v3986
  %v4200 = vmul.f32 %v4179, %v3987
  %v4201 = vmul.f32 %v4181, %v3988
  %v4202 = vmul.f32 %v4183, %v3989
  %v4203 = vmul.f32 %v4185, %v3990
  %v4204 = vmul.f32 %v4187, %v3991
  %v4205 = vmul.f32 %v4189, %v3992
  %4214 = vrot.lane.b32.xlu0 %v4190, 32
  %v4215 = vpop.permute.xlu0 %4214
  %4216 = vrot.lane.b32.xlu0 %v4191, 32
  %v4217 = vpop.permute.xlu0 %4216
  %4218 = vrot.lane.b32.xlu0 %v4192, 32
  %v4219 = vpop.permute.xlu0 %4218
  %4220 = vrot.lane.b32.xlu0 %v4193, 32
  %v4221 = vpop.permute.xlu0 %4220
  %4222 = vrot.lane.b32.xlu0 %v4194, 32
  %v4223 = vpop.permute.xlu0 %4222
  %4224 = vrot.lane.b32.xlu0 %v4195, 32
  %v4225 = vpop.permute.xlu0 %4224
  %4226 = vrot.lane.b32.xlu0 %v4196, 32
  %v4227 = vpop.permute.xlu0 %4226
  %4228 = vrot.lane.b32.xlu0 %v4197, 32
  %v4229 = vpop.permute.xlu0 %4228
  %v4238 = vmul.f32 %v4175, %v4215
  %v4239 = vmul.f32 %v4177, %v4217
  %v4240 = vmul.f32 %v4179, %v4219
  %v4241 = vmul.f32 %v4181, %v4221
  %v4242 = vmul.f32 %v4183, %v4223
  %v4243 = vmul.f32 %v4185, %v4225
  %v4244 = vmul.f32 %v4187, %v4227
  %v4245 = vmul.f32 %v4189, %v4229
  %4254 = vrot.lane.b32.xlu0 %v4238, 32
  %v4255 = vpop.permute.xlu0 %4254
  %4256 = vrot.lane.b32.xlu0 %v4239, 32
  %v4257 = vpop.permute.xlu0 %4256
  %4258 = vrot.lane.b32.xlu0 %v4240, 32
  %v4259 = vpop.permute.xlu0 %4258
  %4260 = vrot.lane.b32.xlu0 %v4241, 32
  %v4261 = vpop.permute.xlu0 %4260
  %4262 = vrot.lane.b32.xlu0 %v4242, 32
  %v4263 = vpop.permute.xlu0 %4262
  %4264 = vrot.lane.b32.xlu0 %v4243, 32
  %v4265 = vpop.permute.xlu0 %4264
  %4266 = vrot.lane.b32.xlu0 %v4244, 32
  %v4267 = vpop.permute.xlu0 %4266
  %4268 = vrot.lane.b32.xlu0 %v4245, 32
  %v4269 = vpop.permute.xlu0 %4268
  %v4278 = vadd.f32 %v4198, %v4255
  %v4279 = vadd.f32 %v4199, %v4257
  %v4280 = vadd.f32 %v4200, %v4259
  %v4281 = vadd.f32 %v4201, %v4261
  %v4282 = vadd.f32 %v4202, %v4263
  %v4283 = vadd.f32 %v4203, %v4265
  %v4284 = vadd.f32 %v4204, %v4267
  %v4285 = vadd.f32 %v4205, %v4269
  %v4286 = vtanh.pop %v4278
  %v4287 = vtanh.pop %v4279
  %v4288 = vtanh.pop %v4280
  %v4289 = vtanh.pop %v4281
  %v4290 = vtanh.pop %v4282
  %v4291 = vtanh.pop %v4283
  %v4292 = vtanh.pop %v4284
  %v4293 = vtanh.pop %v4285
  %4302 = vrot.lane.b32.xlu0 %v4286, 32
  %v4303 = vpop.permute.xlu0 %4302
  %4304 = vrot.lane.b32.xlu0 %v4287, 32
  %v4305 = vpop.permute.xlu0 %4304
  %4306 = vrot.lane.b32.xlu0 %v4288, 32
  %v4307 = vpop.permute.xlu0 %4306
  %4308 = vrot.lane.b32.xlu0 %v4289, 32
  %v4309 = vpop.permute.xlu0 %4308
  %4310 = vrot.lane.b32.xlu0 %v4290, 32
  %v4311 = vpop.permute.xlu0 %4310
  %4312 = vrot.lane.b32.xlu0 %v4291, 32
  %v4313 = vpop.permute.xlu0 %4312
  %4314 = vrot.lane.b32.xlu0 %v4292, 32
  %v4315 = vpop.permute.xlu0 %4314
  %4316 = vrot.lane.b32.xlu0 %v4293, 32
  %v4317 = vpop.permute.xlu0 %4316
  %v4326 = vmul.f32 %v4175, %v4303
  %v4327 = vmul.f32 %v4177, %v4305
  %v4328 = vmul.f32 %v4179, %v4307
  %v4329 = vmul.f32 %v4181, %v4309
  %v4330 = vmul.f32 %v4183, %v4311
  %v4331 = vmul.f32 %v4185, %v4313
  %v4332 = vmul.f32 %v4187, %v4315
  %v4333 = vmul.f32 %v4189, %v4317
  %v4334 = vpack.c.bf16 %v4327, %v4326
  %v4335 = vpack.c.bf16 %v4329, %v4328
  %v4336 = vpack.c.bf16 %v4331, %v4330
  %v4337 = vpack.c.bf16 %v4333, %v4332
  %4342 = vrot.lane.b32.xlu0 %v4334, 64
  %v4343 = vpop.permute.xlu0 %4342
  %4344 = vrot.lane.b32.xlu0 %v4335, 64
  %v4345 = vpop.permute.xlu0 %4344
  %4346 = vrot.lane.b32.xlu0 %v4336, 64
  %v4347 = vpop.permute.xlu0 %4346
  %4348 = vrot.lane.b32.xlu0 %v4337, 64
  %v4349 = vpop.permute.xlu0 %4348
  %v4351 = vsel %vm700, %v4343, 0
  %v4354 = vsel %vm700, %v4345, 0
  %v4357 = vsel %vm700, %v4347, 0
  %v4360 = vsel %vm700, %v4349, 0
  %4362 = vmatprep.subr.bf16.mxu0 0
  %4363 = vmatpush1.bf16.msra.mxu0 %v3435
  %4364 = vmatprep.subr.bf16.mxu0 0
  %4365 = vmatpush1.bf16.msra.mxu0 %v3436
  %4366 = vmatprep.subr.bf16.mxu0 0
  %4367 = vmatpush1.bf16.msra.mxu0 0
  %4368 = vmatprep.subr.bf16.mxu0 0
  %4369 = vmatpush1.bf16.msra.mxu0 0
  %4370 = vmatprep.subr.bf16.mxu0 0
  %4371 = vmatpush1.bf16.msra.mxu0 0
  %4372 = vmatprep.subr.bf16.mxu0 0
  %4373 = vmatpush1.bf16.msra.mxu0 0
  %4374 = vmatprep.subr.bf16.mxu0 0
  %4375 = vmatpush1.bf16.msra.mxu0 0
  %4376 = vmatprep.subr.bf16.mxu0 0
  %4377 = vmatpush1.bf16.msra.mxu0 0
  %4378 = vmatprep.subr.bf16.mxu0 0
  %4379 = vmatpush1.bf16.msra.mxu0 0
  %4380 = vmatprep.subr.bf16.mxu0 0
  %4381 = vmatpush1.bf16.msra.mxu0 0
  %4382 = vmatprep.subr.bf16.mxu0 0
  %4383 = vmatpush1.bf16.msra.mxu0 0
  %4384 = vmatprep.subr.bf16.mxu0 0
  %4385 = vmatpush1.bf16.msra.mxu0 0
  %4386 = vmatprep.subr.bf16.mxu0 0
  %4387 = vmatpush1.bf16.msra.mxu0 0
  %4388 = vmatprep.subr.bf16.mxu0 0
  %4389 = vmatpush1.bf16.msra.mxu0 0
  %4390 = vmatprep.subr.bf16.mxu0 0
  %4391 = vmatpush1.bf16.msra.mxu0 0
  %4392 = vmatprep.subr.bf16.mxu0 0
  %4393 = vmatpush1.bf16.msra.mxu0 0
  %4394 = vmatprep.mubr.bf16.mxu0 0
  %4395 = vmatmul.mubr.bf16.gmra.mrb[0].mxu0 %v4351
  %v4396 = vpop.f32.mrb[0].mxu0
  %v4397 = vadd.f32 0.0, %v4396
  %v4398 = vpop.f32.mrb[0].mxu0
  %v4399 = vpop.f32.mrb[0].mxu0
  %v4400 = vadd.f32 0.0, %v4399
  %v4401 = vpop.f32.mrb[0].mxu0
  %4402 = vmatprep.mubr.bf16.mxu0 0
  %4403 = vmatmul.mubr.bf16.gmra.mrb[0].mxu0 %v4354
  %v4404 = vpop.f32.mrb[0].mxu0
  %v4405 = vadd.f32 0.0, %v4404
  %v4406 = vpop.f32.mrb[0].mxu0
  %v4407 = vpop.f32.mrb[0].mxu0
  %v4408 = vadd.f32 0.0, %v4407
  %v4409 = vpop.f32.mrb[0].mxu0
  %4410 = vmatprep.mubr.bf16.mxu0 0
  %4411 = vmatmul.mubr.bf16.gmra.mrb[0].mxu0 %v4357
  %v4412 = vpop.f32.mrb[0].mxu0
  %v4413 = vadd.f32 0.0, %v4412
  %v4414 = vpop.f32.mrb[0].mxu0
  %v4415 = vpop.f32.mrb[0].mxu0
  %v4416 = vadd.f32 0.0, %v4415
  %v4417 = vpop.f32.mrb[0].mxu0
  %4418 = vmatprep.mubr.bf16.mxu0 0
  %4419 = vmatmul.mubr.bf16.gmra.mrb[0].mxu0 %v4360
  %v4420 = vpop.f32.mrb[0].mxu0
  %v4421 = vadd.f32 0.0, %v4420
  %v4422 = vpop.f32.mrb[0].mxu0
  %v4423 = vpop.f32.mrb[0].mxu0
  %v4424 = vadd.f32 0.0, %v4423
  %v4425 = vpop.f32.mrb[0].mxu0
  %4426 = vdwg.mxu0
  %v4427 = vadd.f32 %v3247, %v4397
  %v4428 = vadd.f32 %v3250, %v4400
  %v4429 = vadd.f32 %v3255, %v4405
  %v4430 = vadd.f32 %v3258, %v4408
  %v4431 = vadd.f32 %v3263, %v4413
  %v4432 = vadd.f32 %v3266, %v4416
  %v4433 = vadd.f32 %v3271, %v4421
  %v4434 = vadd.f32 %v3274, %v4424
  %v4435 = vxor.u32 %v4427, 2147483648
  %v4436 = vxor.u32 %v4428, 2147483648
  %v4437 = vxor.u32 %v4429, 2147483648
  %v4438 = vxor.u32 %v4430, 2147483648
  %v4439 = vxor.u32 %v4431, 2147483648
  %v4440 = vxor.u32 %v4432, 2147483648
  %v4441 = vxor.u32 %v4433, 2147483648
  %v4442 = vxor.u32 %v4434, 2147483648
  %v4443 = vmul.f32 %v4435, 1.442695
  %v4444 = vpow.pop %v4443
  %v4445 = vmul.f32 %v4436, 1.442695
  %v4446 = vpow.pop %v4445
  %v4447 = vmul.f32 %v4437, 1.442695
  %v4448 = vpow.pop %v4447
  %v4449 = vmul.f32 %v4438, 1.442695
  %v4450 = vpow.pop %v4449
  %v4451 = vmul.f32 %v4439, 1.442695
  %v4452 = vpow.pop %v4451
  %v4453 = vmul.f32 %v4440, 1.442695
  %v4454 = vpow.pop %v4453
  %v4455 = vmul.f32 %v4441, 1.442695
  %v4456 = vpow.pop %v4455
  %v4457 = vmul.f32 %v4442, 1.442695
  %v4458 = vpow.pop %v4457
  %v4459 = vadd.f32 %v4444, 1.0
  %v4460 = vadd.f32 %v4446, 1.0
  %v4461 = vadd.f32 %v4448, 1.0
  %v4462 = vadd.f32 %v4450, 1.0
  %v4463 = vadd.f32 %v4452, 1.0
  %v4464 = vadd.f32 %v4454, 1.0
  %v4465 = vadd.f32 %v4456, 1.0
  %v4466 = vadd.f32 %v4458, 1.0
  %v4467 = vrcp.pop %v4459
  %v4468 = vmul.f32 1.0, %v4467
  %v4469 = vrcp.pop %v4460
  %v4470 = vmul.f32 1.0, %v4469
  %v4471 = vrcp.pop %v4461
  %v4472 = vmul.f32 1.0, %v4471
  %v4473 = vrcp.pop %v4462
  %v4474 = vmul.f32 1.0, %v4473
  %v4475 = vrcp.pop %v4463
  %v4476 = vmul.f32 1.0, %v4475
  %v4477 = vrcp.pop %v4464
  %v4478 = vmul.f32 1.0, %v4477
  %v4479 = vrcp.pop %v4465
  %v4480 = vmul.f32 1.0, %v4479
  %v4481 = vrcp.pop %v4466
  %v4482 = vmul.f32 1.0, %v4481
  %v4483 = vtanh.pop %v4427
  %v4484 = vtanh.pop %v4428
  %v4485 = vtanh.pop %v4429
  %v4486 = vtanh.pop %v4430
  %v4487 = vtanh.pop %v4431
  %v4488 = vtanh.pop %v4432
  %v4489 = vtanh.pop %v4433
  %v4490 = vtanh.pop %v4434
  %v4491 = vmul.f32 %v4468, %v4278
  %v4492 = vmul.f32 %v4470, %v4279
  %v4493 = vmul.f32 %v4472, %v4280
  %v4494 = vmul.f32 %v4474, %v4281
  %v4495 = vmul.f32 %v4476, %v4282
  %v4496 = vmul.f32 %v4478, %v4283
  %v4497 = vmul.f32 %v4480, %v4284
  %v4498 = vmul.f32 %v4482, %v4285
  %4507 = vrot.lane.b32.xlu0 %v4483, 32
  %v4508 = vpop.permute.xlu0 %4507
  %4509 = vrot.lane.b32.xlu0 %v4484, 32
  %v4510 = vpop.permute.xlu0 %4509
  %4511 = vrot.lane.b32.xlu0 %v4485, 32
  %v4512 = vpop.permute.xlu0 %4511
  %4513 = vrot.lane.b32.xlu0 %v4486, 32
  %v4514 = vpop.permute.xlu0 %4513
  %4515 = vrot.lane.b32.xlu0 %v4487, 32
  %v4516 = vpop.permute.xlu0 %4515
  %4517 = vrot.lane.b32.xlu0 %v4488, 32
  %v4518 = vpop.permute.xlu0 %4517
  %4519 = vrot.lane.b32.xlu0 %v4489, 32
  %v4520 = vpop.permute.xlu0 %4519
  %4521 = vrot.lane.b32.xlu0 %v4490, 32
  %v4522 = vpop.permute.xlu0 %4521
  %v4531 = vmul.f32 %v4468, %v4508
  %v4532 = vmul.f32 %v4470, %v4510
  %v4533 = vmul.f32 %v4472, %v4512
  %v4534 = vmul.f32 %v4474, %v4514
  %v4535 = vmul.f32 %v4476, %v4516
  %v4536 = vmul.f32 %v4478, %v4518
  %v4537 = vmul.f32 %v4480, %v4520
  %v4538 = vmul.f32 %v4482, %v4522
  %4547 = vrot.lane.b32.xlu0 %v4531, 32
  %v4548 = vpop.permute.xlu0 %4547
  %4549 = vrot.lane.b32.xlu0 %v4532, 32
  %v4550 = vpop.permute.xlu0 %4549
  %4551 = vrot.lane.b32.xlu0 %v4533, 32
  %v4552 = vpop.permute.xlu0 %4551
  %4553 = vrot.lane.b32.xlu0 %v4534, 32
  %v4554 = vpop.permute.xlu0 %4553
  %4555 = vrot.lane.b32.xlu0 %v4535, 32
  %v4556 = vpop.permute.xlu0 %4555
  %4557 = vrot.lane.b32.xlu0 %v4536, 32
  %v4558 = vpop.permute.xlu0 %4557
  %4559 = vrot.lane.b32.xlu0 %v4537, 32
  %v4560 = vpop.permute.xlu0 %4559
  %4561 = vrot.lane.b32.xlu0 %v4538, 32
  %v4562 = vpop.permute.xlu0 %4561
  %v4571 = vadd.f32 %v4491, %v4548
  %v4572 = vadd.f32 %v4492, %v4550
  %v4573 = vadd.f32 %v4493, %v4552
  %v4574 = vadd.f32 %v4494, %v4554
  %v4575 = vadd.f32 %v4495, %v4556
  %v4576 = vadd.f32 %v4496, %v4558
  %v4577 = vadd.f32 %v4497, %v4560
  %v4578 = vadd.f32 %v4498, %v4562
  %v4579 = vtanh.pop %v4571
  %v4580 = vtanh.pop %v4572
  %v4581 = vtanh.pop %v4573
  %v4582 = vtanh.pop %v4574
  %v4583 = vtanh.pop %v4575
  %v4584 = vtanh.pop %v4576
  %v4585 = vtanh.pop %v4577
  %v4586 = vtanh.pop %v4578
  %4595 = vrot.lane.b32.xlu0 %v4579, 32
  %v4596 = vpop.permute.xlu0 %4595
  %4597 = vrot.lane.b32.xlu0 %v4580, 32
  %v4598 = vpop.permute.xlu0 %4597
  %4599 = vrot.lane.b32.xlu0 %v4581, 32
  %v4600 = vpop.permute.xlu0 %4599
  %4601 = vrot.lane.b32.xlu0 %v4582, 32
  %v4602 = vpop.permute.xlu0 %4601
  %4603 = vrot.lane.b32.xlu0 %v4583, 32
  %v4604 = vpop.permute.xlu0 %4603
  %4605 = vrot.lane.b32.xlu0 %v4584, 32
  %v4606 = vpop.permute.xlu0 %4605
  %4607 = vrot.lane.b32.xlu0 %v4585, 32
  %v4608 = vpop.permute.xlu0 %4607
  %4609 = vrot.lane.b32.xlu0 %v4586, 32
  %v4610 = vpop.permute.xlu0 %4609
  %v4619 = vmul.f32 %v4468, %v4596
  %v4620 = vmul.f32 %v4470, %v4598
  %v4621 = vmul.f32 %v4472, %v4600
  %v4622 = vmul.f32 %v4474, %v4602
  %v4623 = vmul.f32 %v4476, %v4604
  %v4624 = vmul.f32 %v4478, %v4606
  %v4625 = vmul.f32 %v4480, %v4608
  %v4626 = vmul.f32 %v4482, %v4610
  %v4627 = vpack.c.bf16 %v4620, %v4619
  %v4628 = vpack.c.bf16 %v4622, %v4621
  %v4629 = vpack.c.bf16 %v4624, %v4623
  %v4630 = vpack.c.bf16 %v4626, %v4625
  %4635 = vrot.lane.b32.xlu0 %v4627, 64
  %v4636 = vpop.permute.xlu0 %4635
  %4637 = vrot.lane.b32.xlu0 %v4628, 64
  %v4638 = vpop.permute.xlu0 %4637
  %4639 = vrot.lane.b32.xlu0 %v4629, 64
  %v4640 = vpop.permute.xlu0 %4639
  %4641 = vrot.lane.b32.xlu0 %v4630, 64
  %v4642 = vpop.permute.xlu0 %4641
  %v4644 = vsel %vm700, %v4636, 0
  %v4647 = vsel %vm700, %v4638, 0
  %v4650 = vsel %vm700, %v4640, 0
  %v4653 = vsel %vm700, %v4642, 0
  %4655 = vmatprep.subr.bf16.mxu0 0
  %4656 = vmatpush1.bf16.msra.mxu0 %v3435
  %4657 = vmatprep.subr.bf16.mxu0 0
  %4658 = vmatpush1.bf16.msra.mxu0 %v3436
  %4659 = vmatprep.subr.bf16.mxu0 0
  %4660 = vmatpush1.bf16.msra.mxu0 0
  %4661 = vmatprep.subr.bf16.mxu0 0
  %4662 = vmatpush1.bf16.msra.mxu0 0
  %4663 = vmatprep.subr.bf16.mxu0 0
  %4664 = vmatpush1.bf16.msra.mxu0 0
  %4665 = vmatprep.subr.bf16.mxu0 0
  %4666 = vmatpush1.bf16.msra.mxu0 0
  %4667 = vmatprep.subr.bf16.mxu0 0
  %4668 = vmatpush1.bf16.msra.mxu0 0
  %4669 = vmatprep.subr.bf16.mxu0 0
  %4670 = vmatpush1.bf16.msra.mxu0 0
  %4671 = vmatprep.subr.bf16.mxu0 0
  %4672 = vmatpush1.bf16.msra.mxu0 0
  %4673 = vmatprep.subr.bf16.mxu0 0
  %4674 = vmatpush1.bf16.msra.mxu0 0
  %4675 = vmatprep.subr.bf16.mxu0 0
  %4676 = vmatpush1.bf16.msra.mxu0 0
  %4677 = vmatprep.subr.bf16.mxu0 0
  %4678 = vmatpush1.bf16.msra.mxu0 0
  %4679 = vmatprep.subr.bf16.mxu0 0
  %4680 = vmatpush1.bf16.msra.mxu0 0
  %4681 = vmatprep.subr.bf16.mxu0 0
  %4682 = vmatpush1.bf16.msra.mxu0 0
  %4683 = vmatprep.subr.bf16.mxu0 0
  %4684 = vmatpush1.bf16.msra.mxu0 0
  %4685 = vmatprep.subr.bf16.mxu0 0
  %4686 = vmatpush1.bf16.msra.mxu0 0
  %4687 = vmatprep.mubr.bf16.mxu0 0
  %4688 = vmatmul.mubr.bf16.gmra.mrb[0].mxu0 %v4644
  %v4689 = vpop.f32.mrb[0].mxu0
  %v4690 = vadd.f32 0.0, %v4689
  %v4691 = vpop.f32.mrb[0].mxu0
  %v4692 = vpop.f32.mrb[0].mxu0
  %v4693 = vadd.f32 0.0, %v4692
  %v4694 = vpop.f32.mrb[0].mxu0
  %4695 = vmatprep.mubr.bf16.mxu0 0
  %4696 = vmatmul.mubr.bf16.gmra.mrb[0].mxu0 %v4647
  %v4697 = vpop.f32.mrb[0].mxu0
  %v4698 = vadd.f32 0.0, %v4697
  %v4699 = vpop.f32.mrb[0].mxu0
  %v4700 = vpop.f32.mrb[0].mxu0
  %v4701 = vadd.f32 0.0, %v4700
  %v4702 = vpop.f32.mrb[0].mxu0
  %4703 = vmatprep.mubr.bf16.mxu0 0
  %4704 = vmatmul.mubr.bf16.gmra.mrb[0].mxu0 %v4650
  %v4705 = vpop.f32.mrb[0].mxu0
  %v4706 = vadd.f32 0.0, %v4705
  %v4707 = vpop.f32.mrb[0].mxu0
  %v4708 = vpop.f32.mrb[0].mxu0
  %v4709 = vadd.f32 0.0, %v4708
  %v4710 = vpop.f32.mrb[0].mxu0
  %4711 = vmatprep.mubr.bf16.mxu0 0
  %4712 = vmatmul.mubr.bf16.gmra.mrb[0].mxu0 %v4653
  %v4713 = vpop.f32.mrb[0].mxu0
  %v4714 = vadd.f32 0.0, %v4713
  %v4715 = vpop.f32.mrb[0].mxu0
  %v4716 = vpop.f32.mrb[0].mxu0
  %v4717 = vadd.f32 0.0, %v4716
  %v4718 = vpop.f32.mrb[0].mxu0
  %4719 = vdwg.mxu0
  %v4720 = vadd.f32 %v3279, %v4690
  %v4721 = vadd.f32 %v3282, %v4693
  %v4722 = vadd.f32 %v3287, %v4698
  %v4723 = vadd.f32 %v3290, %v4701
  %v4724 = vadd.f32 %v3295, %v4706
  %v4725 = vadd.f32 %v3298, %v4709
  %v4726 = vadd.f32 %v3303, %v4714
  %v4727 = vadd.f32 %v3306, %v4717
  %v4728 = vxor.u32 %v4720, 2147483648
  %v4729 = vxor.u32 %v4721, 2147483648
  %v4730 = vxor.u32 %v4722, 2147483648
  %v4731 = vxor.u32 %v4723, 2147483648
  %v4732 = vxor.u32 %v4724, 2147483648
  %v4733 = vxor.u32 %v4725, 2147483648
  %v4734 = vxor.u32 %v4726, 2147483648
  %v4735 = vxor.u32 %v4727, 2147483648
  %v4736 = vmul.f32 %v4728, 1.442695
  %v4737 = vpow.pop %v4736
  %v4738 = vmul.f32 %v4729, 1.442695
  %v4739 = vpow.pop %v4738
  %v4740 = vmul.f32 %v4730, 1.442695
  %v4741 = vpow.pop %v4740
  %v4742 = vmul.f32 %v4731, 1.442695
  %v4743 = vpow.pop %v4742
  %v4744 = vmul.f32 %v4732, 1.442695
  %v4745 = vpow.pop %v4744
  %v4746 = vmul.f32 %v4733, 1.442695
  %v4747 = vpow.pop %v4746
  %v4748 = vmul.f32 %v4734, 1.442695
  %v4749 = vpow.pop %v4748
  %v4750 = vmul.f32 %v4735, 1.442695
  %v4751 = vpow.pop %v4750
  %v4752 = vadd.f32 %v4737, 1.0
  %v4753 = vadd.f32 %v4739, 1.0
  %v4754 = vadd.f32 %v4741, 1.0
  %v4755 = vadd.f32 %v4743, 1.0
  %v4756 = vadd.f32 %v4745, 1.0
  %v4757 = vadd.f32 %v4747, 1.0
  %v4758 = vadd.f32 %v4749, 1.0
  %v4759 = vadd.f32 %v4751, 1.0
  %v4760 = vrcp.pop %v4752
  %v4761 = vmul.f32 1.0, %v4760
  %v4762 = vrcp.pop %v4753
  %v4763 = vmul.f32 1.0, %v4762
  %v4764 = vrcp.pop %v4754
  %v4765 = vmul.f32 1.0, %v4764
  %v4766 = vrcp.pop %v4755
  %v4767 = vmul.f32 1.0, %v4766
  %v4768 = vrcp.pop %v4756
  %v4769 = vmul.f32 1.0, %v4768
  %v4770 = vrcp.pop %v4757
  %v4771 = vmul.f32 1.0, %v4770
  %v4772 = vrcp.pop %v4758
  %v4773 = vmul.f32 1.0, %v4772
  %v4774 = vrcp.pop %v4759
  %v4775 = vmul.f32 1.0, %v4774
  %v4776 = vtanh.pop %v4720
  %v4777 = vtanh.pop %v4721
  %v4778 = vtanh.pop %v4722
  %v4779 = vtanh.pop %v4723
  %v4780 = vtanh.pop %v4724
  %v4781 = vtanh.pop %v4725
  %v4782 = vtanh.pop %v4726
  %v4783 = vtanh.pop %v4727
  %v4784 = vmul.f32 %v4761, %v4571
  %v4785 = vmul.f32 %v4763, %v4572
  %v4786 = vmul.f32 %v4765, %v4573
  %v4787 = vmul.f32 %v4767, %v4574
  %v4788 = vmul.f32 %v4769, %v4575
  %v4789 = vmul.f32 %v4771, %v4576
  %v4790 = vmul.f32 %v4773, %v4577
  %v4791 = vmul.f32 %v4775, %v4578
  %4800 = vrot.lane.b32.xlu0 %v4776, 32
  %v4801 = vpop.permute.xlu0 %4800
  %4802 = vrot.lane.b32.xlu0 %v4777, 32
  %v4803 = vpop.permute.xlu0 %4802
  %4804 = vrot.lane.b32.xlu0 %v4778, 32
  %v4805 = vpop.permute.xlu0 %4804
  %4806 = vrot.lane.b32.xlu0 %v4779, 32
  %v4807 = vpop.permute.xlu0 %4806
  %4808 = vrot.lane.b32.xlu0 %v4780, 32
  %v4809 = vpop.permute.xlu0 %4808
  %4810 = vrot.lane.b32.xlu0 %v4781, 32
  %v4811 = vpop.permute.xlu0 %4810
  %4812 = vrot.lane.b32.xlu0 %v4782, 32
  %v4813 = vpop.permute.xlu0 %4812
  %4814 = vrot.lane.b32.xlu0 %v4783, 32
  %v4815 = vpop.permute.xlu0 %4814
  %v4824 = vmul.f32 %v4761, %v4801
  %v4825 = vmul.f32 %v4763, %v4803
  %v4826 = vmul.f32 %v4765, %v4805
  %v4827 = vmul.f32 %v4767, %v4807
  %v4828 = vmul.f32 %v4769, %v4809
  %v4829 = vmul.f32 %v4771, %v4811
  %v4830 = vmul.f32 %v4773, %v4813
  %v4831 = vmul.f32 %v4775, %v4815
  %4840 = vrot.lane.b32.xlu0 %v4824, 32
  %v4841 = vpop.permute.xlu0 %4840
  %4842 = vrot.lane.b32.xlu0 %v4825, 32
  %v4843 = vpop.permute.xlu0 %4842
  %4844 = vrot.lane.b32.xlu0 %v4826, 32
  %v4845 = vpop.permute.xlu0 %4844
  %4846 = vrot.lane.b32.xlu0 %v4827, 32
  %v4847 = vpop.permute.xlu0 %4846
  %4848 = vrot.lane.b32.xlu0 %v4828, 32
  %v4849 = vpop.permute.xlu0 %4848
  %4850 = vrot.lane.b32.xlu0 %v4829, 32
  %v4851 = vpop.permute.xlu0 %4850
  %4852 = vrot.lane.b32.xlu0 %v4830, 32
  %v4853 = vpop.permute.xlu0 %4852
  %4854 = vrot.lane.b32.xlu0 %v4831, 32
  %v4855 = vpop.permute.xlu0 %4854
  %v4864 = vadd.f32 %v4784, %v4841
  %v4865 = vadd.f32 %v4785, %v4843
  %v4866 = vadd.f32 %v4786, %v4845
  %v4867 = vadd.f32 %v4787, %v4847
  %v4868 = vadd.f32 %v4788, %v4849
  %v4869 = vadd.f32 %v4789, %v4851
  %v4870 = vadd.f32 %v4790, %v4853
  %v4871 = vadd.f32 %v4791, %v4855
  %v4872 = vtanh.pop %v4864
  %v4873 = vtanh.pop %v4865
  %v4874 = vtanh.pop %v4866
  %v4875 = vtanh.pop %v4867
  %v4876 = vtanh.pop %v4868
  %v4877 = vtanh.pop %v4869
  %v4878 = vtanh.pop %v4870
  %v4879 = vtanh.pop %v4871
  %4888 = vrot.lane.b32.xlu0 %v4872, 32
  %v4889 = vpop.permute.xlu0 %4888
  %4890 = vrot.lane.b32.xlu0 %v4873, 32
  %v4891 = vpop.permute.xlu0 %4890
  %4892 = vrot.lane.b32.xlu0 %v4874, 32
  %v4893 = vpop.permute.xlu0 %4892
  %4894 = vrot.lane.b32.xlu0 %v4875, 32
  %v4895 = vpop.permute.xlu0 %4894
  %4896 = vrot.lane.b32.xlu0 %v4876, 32
  %v4897 = vpop.permute.xlu0 %4896
  %4898 = vrot.lane.b32.xlu0 %v4877, 32
  %v4899 = vpop.permute.xlu0 %4898
  %4900 = vrot.lane.b32.xlu0 %v4878, 32
  %v4901 = vpop.permute.xlu0 %4900
  %4902 = vrot.lane.b32.xlu0 %v4879, 32
  %v4903 = vpop.permute.xlu0 %4902
  %v4912 = vmul.f32 %v4761, %v4889
  %v4913 = vmul.f32 %v4763, %v4891
  %v4914 = vmul.f32 %v4765, %v4893
  %v4915 = vmul.f32 %v4767, %v4895
  %v4916 = vmul.f32 %v4769, %v4897
  %v4917 = vmul.f32 %v4771, %v4899
  %v4918 = vmul.f32 %v4773, %v4901
  %v4919 = vmul.f32 %v4775, %v4903
  %v4920 = vpack.c.bf16 %v4913, %v4912
  %v4921 = vpack.c.bf16 %v4915, %v4914
  %v4922 = vpack.c.bf16 %v4917, %v4916
  %v4923 = vpack.c.bf16 %v4919, %v4918
  %4928 = vrot.lane.b32.xlu0 %v4920, 64
  %v4929 = vpop.permute.xlu0 %4928
  %4930 = vrot.lane.b32.xlu0 %v4921, 64
  %v4931 = vpop.permute.xlu0 %4930
  %4932 = vrot.lane.b32.xlu0 %v4922, 64
  %v4933 = vpop.permute.xlu0 %4932
  %4934 = vrot.lane.b32.xlu0 %v4923, 64
  %v4935 = vpop.permute.xlu0 %4934
  %v4937 = vsel %vm700, %v4929, 0
  %v4940 = vsel %vm700, %v4931, 0
  %v4943 = vsel %vm700, %v4933, 0
  %v4946 = vsel %vm700, %v4935, 0
  %4948 = vmatprep.subr.bf16.mxu0 0
  %4949 = vmatpush1.bf16.msra.mxu0 %v3435
  %4950 = vmatprep.subr.bf16.mxu0 0
  %4951 = vmatpush1.bf16.msra.mxu0 %v3436
  %4952 = vmatprep.subr.bf16.mxu0 0
  %4953 = vmatpush1.bf16.msra.mxu0 0
  %4954 = vmatprep.subr.bf16.mxu0 0
  %4955 = vmatpush1.bf16.msra.mxu0 0
  %4956 = vmatprep.subr.bf16.mxu0 0
  %4957 = vmatpush1.bf16.msra.mxu0 0
  %4958 = vmatprep.subr.bf16.mxu0 0
  %4959 = vmatpush1.bf16.msra.mxu0 0
  %4960 = vmatprep.subr.bf16.mxu0 0
  %4961 = vmatpush1.bf16.msra.mxu0 0
  %4962 = vmatprep.subr.bf16.mxu0 0
  %4963 = vmatpush1.bf16.msra.mxu0 0
  %4964 = vmatprep.subr.bf16.mxu0 0
  %4965 = vmatpush1.bf16.msra.mxu0 0
  %4966 = vmatprep.subr.bf16.mxu0 0
  %4967 = vmatpush1.bf16.msra.mxu0 0
  %4968 = vmatprep.subr.bf16.mxu0 0
  %4969 = vmatpush1.bf16.msra.mxu0 0
  %4970 = vmatprep.subr.bf16.mxu0 0
  %4971 = vmatpush1.bf16.msra.mxu0 0
  %4972 = vmatprep.subr.bf16.mxu0 0
  %4973 = vmatpush1.bf16.msra.mxu0 0
  %4974 = vmatprep.subr.bf16.mxu0 0
  %4975 = vmatpush1.bf16.msra.mxu0 0
  %4976 = vmatprep.subr.bf16.mxu0 0
  %4977 = vmatpush1.bf16.msra.mxu0 0
  %4978 = vmatprep.subr.bf16.mxu0 0
  %4979 = vmatpush1.bf16.msra.mxu0 0
  %4980 = vmatprep.mubr.bf16.mxu0 0
  %4981 = vmatmul.mubr.bf16.gmra.mrb[0].mxu0 %v4937
  %v4982 = vpop.f32.mrb[0].mxu0
  %v4983 = vadd.f32 0.0, %v4982
  %v4984 = vpop.f32.mrb[0].mxu0
  %v4985 = vpop.f32.mrb[0].mxu0
  %v4986 = vadd.f32 0.0, %v4985
  %v4987 = vpop.f32.mrb[0].mxu0
  %4988 = vmatprep.mubr.bf16.mxu0 0
  %4989 = vmatmul.mubr.bf16.gmra.mrb[0].mxu0 %v4940
  %v4990 = vpop.f32.mrb[0].mxu0
  %v4991 = vadd.f32 0.0, %v4990
  %v4992 = vpop.f32.mrb[0].mxu0
  %v4993 = vpop.f32.mrb[0].mxu0
  %v4994 = vadd.f32 0.0, %v4993
  %v4995 = vpop.f32.mrb[0].mxu0
  %4996 = vmatprep.mubr.bf16.mxu0 0
  %4997 = vmatmul.mubr.bf16.gmra.mrb[0].mxu0 %v4943
  %v4998 = vpop.f32.mrb[0].mxu0
  %v4999 = vadd.f32 0.0, %v4998
  %v5000 = vpop.f32.mrb[0].mxu0
  %v5001 = vpop.f32.mrb[0].mxu0
  %v5002 = vadd.f32 0.0, %v5001
  %v5003 = vpop.f32.mrb[0].mxu0
  %5004 = vmatprep.mubr.bf16.mxu0 0
  %5005 = vmatmul.mubr.bf16.gmra.mrb[0].mxu0 %v4946
  %v5006 = vpop.f32.mrb[0].mxu0
  %v5007 = vadd.f32 0.0, %v5006
  %v5008 = vpop.f32.mrb[0].mxu0
  %v5009 = vpop.f32.mrb[0].mxu0
  %v5010 = vadd.f32 0.0, %v5009
  %v5011 = vpop.f32.mrb[0].mxu0
  %5012 = vdwg.mxu0
  %v5013 = vadd.f32 %v3311, %v4983
  %v5014 = vadd.f32 %v3314, %v4986
  %v5015 = vadd.f32 %v3319, %v4991
  %v5016 = vadd.f32 %v3322, %v4994
  %v5017 = vadd.f32 %v3327, %v4999
  %v5018 = vadd.f32 %v3330, %v5002
  %v5019 = vadd.f32 %v3335, %v5007
  %v5020 = vadd.f32 %v3338, %v5010
  %v5021 = vxor.u32 %v5013, 2147483648
  %v5022 = vxor.u32 %v5014, 2147483648
  %v5023 = vxor.u32 %v5015, 2147483648
  %v5024 = vxor.u32 %v5016, 2147483648
  %v5025 = vxor.u32 %v5017, 2147483648
  %v5026 = vxor.u32 %v5018, 2147483648
  %v5027 = vxor.u32 %v5019, 2147483648
  %v5028 = vxor.u32 %v5020, 2147483648
  %v5029 = vmul.f32 %v5021, 1.442695
  %v5030 = vpow.pop %v5029
  %v5031 = vmul.f32 %v5022, 1.442695
  %v5032 = vpow.pop %v5031
  %v5033 = vmul.f32 %v5023, 1.442695
  %v5034 = vpow.pop %v5033
  %v5035 = vmul.f32 %v5024, 1.442695
  %v5036 = vpow.pop %v5035
  %v5037 = vmul.f32 %v5025, 1.442695
  %v5038 = vpow.pop %v5037
  %v5039 = vmul.f32 %v5026, 1.442695
  %v5040 = vpow.pop %v5039
  %v5041 = vmul.f32 %v5027, 1.442695
  %v5042 = vpow.pop %v5041
  %v5043 = vmul.f32 %v5028, 1.442695
  %v5044 = vpow.pop %v5043
  %v5045 = vadd.f32 %v5030, 1.0
  %v5046 = vadd.f32 %v5032, 1.0
  %v5047 = vadd.f32 %v5034, 1.0
  %v5048 = vadd.f32 %v5036, 1.0
  %v5049 = vadd.f32 %v5038, 1.0
  %v5050 = vadd.f32 %v5040, 1.0
  %v5051 = vadd.f32 %v5042, 1.0
  %v5052 = vadd.f32 %v5044, 1.0
  %v5053 = vrcp.pop %v5045
  %v5054 = vmul.f32 1.0, %v5053
  %v5055 = vrcp.pop %v5046
  %v5056 = vmul.f32 1.0, %v5055
  %v5057 = vrcp.pop %v5047
  %v5058 = vmul.f32 1.0, %v5057
  %v5059 = vrcp.pop %v5048
  %v5060 = vmul.f32 1.0, %v5059
  %v5061 = vrcp.pop %v5049
  %v5062 = vmul.f32 1.0, %v5061
  %v5063 = vrcp.pop %v5050
  %v5064 = vmul.f32 1.0, %v5063
  %v5065 = vrcp.pop %v5051
  %v5066 = vmul.f32 1.0, %v5065
  %v5067 = vrcp.pop %v5052
  %v5068 = vmul.f32 1.0, %v5067
  %v5069 = vtanh.pop %v5013
  %v5070 = vtanh.pop %v5014
  %v5071 = vtanh.pop %v5015
  %v5072 = vtanh.pop %v5016
  %v5073 = vtanh.pop %v5017
  %v5074 = vtanh.pop %v5018
  %v5075 = vtanh.pop %v5019
  %v5076 = vtanh.pop %v5020
  %v5077 = vmul.f32 %v5054, %v4864
  %v5078 = vmul.f32 %v5056, %v4865
  %v5079 = vmul.f32 %v5058, %v4866
  %v5080 = vmul.f32 %v5060, %v4867
  %v5081 = vmul.f32 %v5062, %v4868
  %v5082 = vmul.f32 %v5064, %v4869
  %v5083 = vmul.f32 %v5066, %v4870
  %v5084 = vmul.f32 %v5068, %v4871
  %5093 = vrot.lane.b32.xlu0 %v5069, 32
  %v5094 = vpop.permute.xlu0 %5093
  %5095 = vrot.lane.b32.xlu0 %v5070, 32
  %v5096 = vpop.permute.xlu0 %5095
  %5097 = vrot.lane.b32.xlu0 %v5071, 32
  %v5098 = vpop.permute.xlu0 %5097
  %5099 = vrot.lane.b32.xlu0 %v5072, 32
  %v5100 = vpop.permute.xlu0 %5099
  %5101 = vrot.lane.b32.xlu0 %v5073, 32
  %v5102 = vpop.permute.xlu0 %5101
  %5103 = vrot.lane.b32.xlu0 %v5074, 32
  %v5104 = vpop.permute.xlu0 %5103
  %5105 = vrot.lane.b32.xlu0 %v5075, 32
  %v5106 = vpop.permute.xlu0 %5105
  %5107 = vrot.lane.b32.xlu0 %v5076, 32
  %v5108 = vpop.permute.xlu0 %5107
  %v5117 = vmul.f32 %v5054, %v5094
  %v5118 = vmul.f32 %v5056, %v5096
  %v5119 = vmul.f32 %v5058, %v5098
  %v5120 = vmul.f32 %v5060, %v5100
  %v5121 = vmul.f32 %v5062, %v5102
  %v5122 = vmul.f32 %v5064, %v5104
  %v5123 = vmul.f32 %v5066, %v5106
  %v5124 = vmul.f32 %v5068, %v5108
  %5133 = vrot.lane.b32.xlu0 %v5117, 32
  %v5134 = vpop.permute.xlu0 %5133
  %5135 = vrot.lane.b32.xlu0 %v5118, 32
  %v5136 = vpop.permute.xlu0 %5135
  %5137 = vrot.lane.b32.xlu0 %v5119, 32
  %v5138 = vpop.permute.xlu0 %5137
  %5139 = vrot.lane.b32.xlu0 %v5120, 32
  %v5140 = vpop.permute.xlu0 %5139
  %5141 = vrot.lane.b32.xlu0 %v5121, 32
  %v5142 = vpop.permute.xlu0 %5141
  %5143 = vrot.lane.b32.xlu0 %v5122, 32
  %v5144 = vpop.permute.xlu0 %5143
  %5145 = vrot.lane.b32.xlu0 %v5123, 32
  %v5146 = vpop.permute.xlu0 %5145
  %5147 = vrot.lane.b32.xlu0 %v5124, 32
  %v5148 = vpop.permute.xlu0 %5147
  %v5157 = vadd.f32 %v5077, %v5134
  %v5158 = vadd.f32 %v5078, %v5136
  %v5159 = vadd.f32 %v5079, %v5138
  %v5160 = vadd.f32 %v5080, %v5140
  %v5161 = vadd.f32 %v5081, %v5142
  %v5162 = vadd.f32 %v5082, %v5144
  %v5163 = vadd.f32 %v5083, %v5146
  %v5164 = vadd.f32 %v5084, %v5148
  %v5165 = vtanh.pop %v5157
  %v5166 = vtanh.pop %v5158
  %v5167 = vtanh.pop %v5159
  %v5168 = vtanh.pop %v5160
  %v5169 = vtanh.pop %v5161
  %v5170 = vtanh.pop %v5162
  %v5171 = vtanh.pop %v5163
  %v5172 = vtanh.pop %v5164
  %5181 = vrot.lane.b32.xlu0 %v5165, 32
  %v5182 = vpop.permute.xlu0 %5181
  %5183 = vrot.lane.b32.xlu0 %v5166, 32
  %v5184 = vpop.permute.xlu0 %5183
  %5185 = vrot.lane.b32.xlu0 %v5167, 32
  %v5186 = vpop.permute.xlu0 %5185
  %5187 = vrot.lane.b32.xlu0 %v5168, 32
  %v5188 = vpop.permute.xlu0 %5187
  %5189 = vrot.lane.b32.xlu0 %v5169, 32
  %v5190 = vpop.permute.xlu0 %5189
  %5191 = vrot.lane.b32.xlu0 %v5170, 32
  %v5192 = vpop.permute.xlu0 %5191
  %5193 = vrot.lane.b32.xlu0 %v5171, 32
  %v5194 = vpop.permute.xlu0 %5193
  %5195 = vrot.lane.b32.xlu0 %v5172, 32
  %v5196 = vpop.permute.xlu0 %5195
  %v5205 = vmul.f32 %v5054, %v5182
  %v5206 = vmul.f32 %v5056, %v5184
  %v5207 = vmul.f32 %v5058, %v5186
  %v5208 = vmul.f32 %v5060, %v5188
  %v5209 = vmul.f32 %v5062, %v5190
  %v5210 = vmul.f32 %v5064, %v5192
  %v5211 = vmul.f32 %v5066, %v5194
  %v5212 = vmul.f32 %v5068, %v5196
  %v5213 = vpack.c.bf16 %v5206, %v5205
  %v5214 = vpack.c.bf16 %v5208, %v5207
  %v5215 = vpack.c.bf16 %v5210, %v5209
  %v5216 = vpack.c.bf16 %v5212, %v5211
  %5221 = vrot.lane.b32.xlu0 %v5213, 64
  %v5222 = vpop.permute.xlu0 %5221
  %5223 = vrot.lane.b32.xlu0 %v5214, 64
  %v5224 = vpop.permute.xlu0 %5223
  %5225 = vrot.lane.b32.xlu0 %v5215, 64
  %v5226 = vpop.permute.xlu0 %5225
  %5227 = vrot.lane.b32.xlu0 %v5216, 64
  %v5228 = vpop.permute.xlu0 %5227
  %v5230 = vsel %vm700, %v5222, 0
  %v5233 = vsel %vm700, %v5224, 0
  %v5236 = vsel %vm700, %v5226, 0
  %v5239 = vsel %vm700, %v5228, 0
  %5241 = vmatprep.subr.bf16.mxu0 0
  %5242 = vmatpush1.bf16.msra.mxu0 %v3435
  %5243 = vmatprep.subr.bf16.mxu0 0
  %5244 = vmatpush1.bf16.msra.mxu0 %v3436
  %5245 = vmatprep.subr.bf16.mxu0 0
  %5246 = vmatpush1.bf16.msra.mxu0 0
  %5247 = vmatprep.subr.bf16.mxu0 0
  %5248 = vmatpush1.bf16.msra.mxu0 0
  %5249 = vmatprep.subr.bf16.mxu0 0
  %5250 = vmatpush1.bf16.msra.mxu0 0
  %5251 = vmatprep.subr.bf16.mxu0 0
  %5252 = vmatpush1.bf16.msra.mxu0 0
  %5253 = vmatprep.subr.bf16.mxu0 0
  %5254 = vmatpush1.bf16.msra.mxu0 0
  %5255 = vmatprep.subr.bf16.mxu0 0
  %5256 = vmatpush1.bf16.msra.mxu0 0
  %5257 = vmatprep.subr.bf16.mxu0 0
  %5258 = vmatpush1.bf16.msra.mxu0 0
  %5259 = vmatprep.subr.bf16.mxu0 0
  %5260 = vmatpush1.bf16.msra.mxu0 0
  %5261 = vmatprep.subr.bf16.mxu0 0
  %5262 = vmatpush1.bf16.msra.mxu0 0
  %5263 = vmatprep.subr.bf16.mxu0 0
  %5264 = vmatpush1.bf16.msra.mxu0 0
  %5265 = vmatprep.subr.bf16.mxu0 0
  %5266 = vmatpush1.bf16.msra.mxu0 0
  %5267 = vmatprep.subr.bf16.mxu0 0
  %5268 = vmatpush1.bf16.msra.mxu0 0
  %5269 = vmatprep.subr.bf16.mxu0 0
  %5270 = vmatpush1.bf16.msra.mxu0 0
  %5271 = vmatprep.subr.bf16.mxu0 0
  %5272 = vmatpush1.bf16.msra.mxu0 0
  %5273 = vmatprep.mubr.bf16.mxu0 0
  %5274 = vmatmul.mubr.bf16.gmra.mrb[0].mxu0 %v5230
  %v5275 = vpop.f32.mrb[0].mxu0
  %v5276 = vadd.f32 0.0, %v5275
  %v5277 = vpop.f32.mrb[0].mxu0
  %v5278 = vpop.f32.mrb[0].mxu0
  %v5279 = vadd.f32 0.0, %v5278
  %v5280 = vpop.f32.mrb[0].mxu0
  %5281 = vmatprep.mubr.bf16.mxu0 0
  %5282 = vmatmul.mubr.bf16.gmra.mrb[0].mxu0 %v5233
  %v5283 = vpop.f32.mrb[0].mxu0
  %v5284 = vadd.f32 0.0, %v5283
  %v5285 = vpop.f32.mrb[0].mxu0
  %v5286 = vpop.f32.mrb[0].mxu0
  %v5287 = vadd.f32 0.0, %v5286
  %v5288 = vpop.f32.mrb[0].mxu0
  %5289 = vmatprep.mubr.bf16.mxu0 0
  %5290 = vmatmul.mubr.bf16.gmra.mrb[0].mxu0 %v5236
  %v5291 = vpop.f32.mrb[0].mxu0
  %v5292 = vadd.f32 0.0, %v5291
  %v5293 = vpop.f32.mrb[0].mxu0
  %v5294 = vpop.f32.mrb[0].mxu0
  %v5295 = vadd.f32 0.0, %v5294
  %v5296 = vpop.f32.mrb[0].mxu0
  %5297 = vmatprep.mubr.bf16.mxu0 0
  %5298 = vmatmul.mubr.bf16.gmra.mrb[0].mxu0 %v5239
  %v5299 = vpop.f32.mrb[0].mxu0
  %v5300 = vadd.f32 0.0, %v5299
  %v5301 = vpop.f32.mrb[0].mxu0
  %v5302 = vpop.f32.mrb[0].mxu0
  %v5303 = vadd.f32 0.0, %v5302
  %v5304 = vpop.f32.mrb[0].mxu0
  %5305 = vdwg.mxu0
  %v5306 = vadd.f32 %v3343, %v5276
  %v5307 = vadd.f32 %v3346, %v5279
  %v5308 = vadd.f32 %v3351, %v5284
  %v5309 = vadd.f32 %v3354, %v5287
  %v5310 = vadd.f32 %v3359, %v5292
  %v5311 = vadd.f32 %v3362, %v5295
  %v5312 = vadd.f32 %v3367, %v5300
  %v5313 = vadd.f32 %v3370, %v5303
  %v5314 = vxor.u32 %v5306, 2147483648
  %v5315 = vxor.u32 %v5307, 2147483648
  %v5316 = vxor.u32 %v5308, 2147483648
  %v5317 = vxor.u32 %v5309, 2147483648
  %v5318 = vxor.u32 %v5310, 2147483648
  %v5319 = vxor.u32 %v5311, 2147483648
  %v5320 = vxor.u32 %v5312, 2147483648
  %v5321 = vxor.u32 %v5313, 2147483648
  %v5322 = vmul.f32 %v5314, 1.442695
  %v5323 = vpow.pop %v5322
  %v5324 = vmul.f32 %v5315, 1.442695
  %v5325 = vpow.pop %v5324
  %v5326 = vmul.f32 %v5316, 1.442695
  %v5327 = vpow.pop %v5326
  %v5328 = vmul.f32 %v5317, 1.442695
  %v5329 = vpow.pop %v5328
  %v5330 = vmul.f32 %v5318, 1.442695
  %v5331 = vpow.pop %v5330
  %v5332 = vmul.f32 %v5319, 1.442695
  %v5333 = vpow.pop %v5332
  %v5334 = vmul.f32 %v5320, 1.442695
  %v5335 = vpow.pop %v5334
  %v5336 = vmul.f32 %v5321, 1.442695
  %v5337 = vpow.pop %v5336
  %v5338 = vadd.f32 %v5323, 1.0
  %v5339 = vadd.f32 %v5325, 1.0
  %v5340 = vadd.f32 %v5327, 1.0
  %v5341 = vadd.f32 %v5329, 1.0
  %v5342 = vadd.f32 %v5331, 1.0
  %v5343 = vadd.f32 %v5333, 1.0
  %v5344 = vadd.f32 %v5335, 1.0
  %v5345 = vadd.f32 %v5337, 1.0
  %v5346 = vrcp.pop %v5338
  %v5347 = vmul.f32 1.0, %v5346
  %v5348 = vrcp.pop %v5339
  %v5349 = vmul.f32 1.0, %v5348
  %v5350 = vrcp.pop %v5340
  %v5351 = vmul.f32 1.0, %v5350
  %v5352 = vrcp.pop %v5341
  %v5353 = vmul.f32 1.0, %v5352
  %v5354 = vrcp.pop %v5342
  %v5355 = vmul.f32 1.0, %v5354
  %v5356 = vrcp.pop %v5343
  %v5357 = vmul.f32 1.0, %v5356
  %v5358 = vrcp.pop %v5344
  %v5359 = vmul.f32 1.0, %v5358
  %v5360 = vrcp.pop %v5345
  %v5361 = vmul.f32 1.0, %v5360
  %v5362 = vtanh.pop %v5306
  %v5363 = vtanh.pop %v5307
  %v5364 = vtanh.pop %v5308
  %v5365 = vtanh.pop %v5309
  %v5366 = vtanh.pop %v5310
  %v5367 = vtanh.pop %v5311
  %v5368 = vtanh.pop %v5312
  %v5369 = vtanh.pop %v5313
  %v5370 = vmul.f32 %v5347, %v5157
  %v5371 = vmul.f32 %v5349, %v5158
  %v5372 = vmul.f32 %v5351, %v5159
  %v5373 = vmul.f32 %v5353, %v5160
  %v5374 = vmul.f32 %v5355, %v5161
  %v5375 = vmul.f32 %v5357, %v5162
  %v5376 = vmul.f32 %v5359, %v5163
  %v5377 = vmul.f32 %v5361, %v5164
  %5386 = vrot.lane.b32.xlu0 %v5362, 32
  %v5387 = vpop.permute.xlu0 %5386
  %5388 = vrot.lane.b32.xlu0 %v5363, 32
  %v5389 = vpop.permute.xlu0 %5388
  %5390 = vrot.lane.b32.xlu0 %v5364, 32
  %v5391 = vpop.permute.xlu0 %5390
  %5392 = vrot.lane.b32.xlu0 %v5365, 32
  %v5393 = vpop.permute.xlu0 %5392
  %5394 = vrot.lane.b32.xlu0 %v5366, 32
  %v5395 = vpop.permute.xlu0 %5394
  %5396 = vrot.lane.b32.xlu0 %v5367, 32
  %v5397 = vpop.permute.xlu0 %5396
  %5398 = vrot.lane.b32.xlu0 %v5368, 32
  %v5399 = vpop.permute.xlu0 %5398
  %5400 = vrot.lane.b32.xlu0 %v5369, 32
  %v5401 = vpop.permute.xlu0 %5400
  %v5410 = vmul.f32 %v5347, %v5387
  %v5411 = vmul.f32 %v5349, %v5389
  %v5412 = vmul.f32 %v5351, %v5391
  %v5413 = vmul.f32 %v5353, %v5393
  %v5414 = vmul.f32 %v5355, %v5395
  %v5415 = vmul.f32 %v5357, %v5397
  %v5416 = vmul.f32 %v5359, %v5399
  %v5417 = vmul.f32 %v5361, %v5401
  %5426 = vrot.lane.b32.xlu0 %v5410, 32
  %v5427 = vpop.permute.xlu0 %5426
  %5428 = vrot.lane.b32.xlu0 %v5411, 32
  %v5429 = vpop.permute.xlu0 %5428
  %5430 = vrot.lane.b32.xlu0 %v5412, 32
  %v5431 = vpop.permute.xlu0 %5430
  %5432 = vrot.lane.b32.xlu0 %v5413, 32
  %v5433 = vpop.permute.xlu0 %5432
  %5434 = vrot.lane.b32.xlu0 %v5414, 32
  %v5435 = vpop.permute.xlu0 %5434
  %5436 = vrot.lane.b32.xlu0 %v5415, 32
  %v5437 = vpop.permute.xlu0 %5436
  %5438 = vrot.lane.b32.xlu0 %v5416, 32
  %v5439 = vpop.permute.xlu0 %5438
  %5440 = vrot.lane.b32.xlu0 %v5417, 32
  %v5441 = vpop.permute.xlu0 %5440
  %v5450 = vadd.f32 %v5370, %v5427
  %v5451 = vadd.f32 %v5371, %v5429
  %v5452 = vadd.f32 %v5372, %v5431
  %v5453 = vadd.f32 %v5373, %v5433
  %v5454 = vadd.f32 %v5374, %v5435
  %v5455 = vadd.f32 %v5375, %v5437
  %v5456 = vadd.f32 %v5376, %v5439
  %v5457 = vadd.f32 %v5377, %v5441
  %v5458 = vtanh.pop %v5450
  %v5459 = vtanh.pop %v5451
  %v5460 = vtanh.pop %v5452
  %v5461 = vtanh.pop %v5453
  %v5462 = vtanh.pop %v5454
  %v5463 = vtanh.pop %v5455
  %v5464 = vtanh.pop %v5456
  %v5465 = vtanh.pop %v5457
  %5474 = vrot.lane.b32.xlu0 %v5458, 32
  %v5475 = vpop.permute.xlu0 %5474
  %5476 = vrot.lane.b32.xlu0 %v5459, 32
  %v5477 = vpop.permute.xlu0 %5476
  %5478 = vrot.lane.b32.xlu0 %v5460, 32
  %v5479 = vpop.permute.xlu0 %5478
  %5480 = vrot.lane.b32.xlu0 %v5461, 32
  %v5481 = vpop.permute.xlu0 %5480
  %5482 = vrot.lane.b32.xlu0 %v5462, 32
  %v5483 = vpop.permute.xlu0 %5482
  %5484 = vrot.lane.b32.xlu0 %v5463, 32
  %v5485 = vpop.permute.xlu0 %5484
  %5486 = vrot.lane.b32.xlu0 %v5464, 32
  %v5487 = vpop.permute.xlu0 %5486
  %5488 = vrot.lane.b32.xlu0 %v5465, 32
  %v5489 = vpop.permute.xlu0 %5488
  %v5498 = vmul.f32 %v5347, %v5475
  %v5499 = vmul.f32 %v5349, %v5477
  %v5500 = vmul.f32 %v5351, %v5479
  %v5501 = vmul.f32 %v5353, %v5481
  %v5502 = vmul.f32 %v5355, %v5483
  %v5503 = vmul.f32 %v5357, %v5485
  %v5504 = vmul.f32 %v5359, %v5487
  %v5505 = vmul.f32 %v5361, %v5489
  %v5506 = vpack.c.bf16 %v5499, %v5498
  %v5507 = vpack.c.bf16 %v5501, %v5500
  %v5508 = vpack.c.bf16 %v5503, %v5502
  %v5509 = vpack.c.bf16 %v5505, %v5504
  %5514 = vrot.lane.b32.xlu0 %v5506, 64
  %v5515 = vpop.permute.xlu0 %5514
  %5516 = vrot.lane.b32.xlu0 %v5507, 64
  %v5517 = vpop.permute.xlu0 %5516
  %5518 = vrot.lane.b32.xlu0 %v5508, 64
  %v5519 = vpop.permute.xlu0 %5518
  %5520 = vrot.lane.b32.xlu0 %v5509, 64
  %v5521 = vpop.permute.xlu0 %5520
  %v5523 = vsel %vm700, %v5515, 0
  %v5526 = vsel %vm700, %v5517, 0
  %v5529 = vsel %vm700, %v5519, 0
  %v5532 = vsel %vm700, %v5521, 0
  %5534 = vmatprep.subr.bf16.mxu0 0
  %5535 = vmatpush1.bf16.msra.mxu0 %v3435
  %5536 = vmatprep.subr.bf16.mxu0 0
  %5537 = vmatpush1.bf16.msra.mxu0 %v3436
  %5538 = vmatprep.subr.bf16.mxu0 0
  %5539 = vmatpush1.bf16.msra.mxu0 0
  %5540 = vmatprep.subr.bf16.mxu0 0
  %5541 = vmatpush1.bf16.msra.mxu0 0
  %5542 = vmatprep.subr.bf16.mxu0 0
  %5543 = vmatpush1.bf16.msra.mxu0 0
  %5544 = vmatprep.subr.bf16.mxu0 0
  %5545 = vmatpush1.bf16.msra.mxu0 0
  %5546 = vmatprep.subr.bf16.mxu0 0
  %5547 = vmatpush1.bf16.msra.mxu0 0
  %5548 = vmatprep.subr.bf16.mxu0 0
  %5549 = vmatpush1.bf16.msra.mxu0 0
  %5550 = vmatprep.subr.bf16.mxu0 0
  %5551 = vmatpush1.bf16.msra.mxu0 0
  %5552 = vmatprep.subr.bf16.mxu0 0
  %5553 = vmatpush1.bf16.msra.mxu0 0
  %5554 = vmatprep.subr.bf16.mxu0 0
  %5555 = vmatpush1.bf16.msra.mxu0 0
  %5556 = vmatprep.subr.bf16.mxu0 0
  %5557 = vmatpush1.bf16.msra.mxu0 0
  %5558 = vmatprep.subr.bf16.mxu0 0
  %5559 = vmatpush1.bf16.msra.mxu0 0
  %5560 = vmatprep.subr.bf16.mxu0 0
  %5561 = vmatpush1.bf16.msra.mxu0 0
  %5562 = vmatprep.subr.bf16.mxu0 0
  %5563 = vmatpush1.bf16.msra.mxu0 0
  %5564 = vmatprep.subr.bf16.mxu0 0
  %5565 = vmatpush1.bf16.msra.mxu0 0
  %5566 = vmatprep.mubr.bf16.mxu0 0
  %5567 = vmatmul.mubr.bf16.gmra.mrb[0].mxu0 %v5523
  %v5568 = vpop.f32.mrb[0].mxu0
  %v5569 = vadd.f32 0.0, %v5568
  %v5570 = vpop.f32.mrb[0].mxu0
  %v5571 = vpop.f32.mrb[0].mxu0
  %v5572 = vadd.f32 0.0, %v5571
  %v5573 = vpop.f32.mrb[0].mxu0
  %5574 = vmatprep.mubr.bf16.mxu0 0
  %5575 = vmatmul.mubr.bf16.gmra.mrb[0].mxu0 %v5526
  %v5576 = vpop.f32.mrb[0].mxu0
  %v5577 = vadd.f32 0.0, %v5576
  %v5578 = vpop.f32.mrb[0].mxu0
  %v5579 = vpop.f32.mrb[0].mxu0
  %v5580 = vadd.f32 0.0, %v5579
  %v5581 = vpop.f32.mrb[0].mxu0
  %5582 = vmatprep.mubr.bf16.mxu0 0
  %5583 = vmatmul.mubr.bf16.gmra.mrb[0].mxu0 %v5529
  %v5584 = vpop.f32.mrb[0].mxu0
  %v5585 = vadd.f32 0.0, %v5584
  %v5586 = vpop.f32.mrb[0].mxu0
  %v5587 = vpop.f32.mrb[0].mxu0
  %v5588 = vadd.f32 0.0, %v5587
  %v5589 = vpop.f32.mrb[0].mxu0
  %5590 = vmatprep.mubr.bf16.mxu0 0
  %5591 = vmatmul.mubr.bf16.gmra.mrb[0].mxu0 %v5532
  %v5592 = vpop.f32.mrb[0].mxu0
  %v5593 = vadd.f32 0.0, %v5592
  %v5594 = vpop.f32.mrb[0].mxu0
  %v5595 = vpop.f32.mrb[0].mxu0
  %v5596 = vadd.f32 0.0, %v5595
  %v5597 = vpop.f32.mrb[0].mxu0
  %5598 = vdwg.mxu0
  %v5599 = vadd.f32 %v3375, %v5569
  %v5600 = vadd.f32 %v3378, %v5572
  %v5601 = vadd.f32 %v3383, %v5577
  %v5602 = vadd.f32 %v3386, %v5580
  %v5603 = vadd.f32 %v3391, %v5585
  %v5604 = vadd.f32 %v3394, %v5588
  %v5605 = vadd.f32 %v3399, %v5593
  %v5606 = vadd.f32 %v3402, %v5596
  %v5607 = vxor.u32 %v5599, 2147483648
  %v5608 = vxor.u32 %v5600, 2147483648
  %v5609 = vxor.u32 %v5601, 2147483648
  %v5610 = vxor.u32 %v5602, 2147483648
  %v5611 = vxor.u32 %v5603, 2147483648
  %v5612 = vxor.u32 %v5604, 2147483648
  %v5613 = vxor.u32 %v5605, 2147483648
  %v5614 = vxor.u32 %v5606, 2147483648
  %v5615 = vmul.f32 %v5607, 1.442695
  %v5616 = vpow.pop %v5615
  %v5617 = vmul.f32 %v5608, 1.442695
  %v5618 = vpow.pop %v5617
  %v5619 = vmul.f32 %v5609, 1.442695
  %v5620 = vpow.pop %v5619
  %v5621 = vmul.f32 %v5610, 1.442695
  %v5622 = vpow.pop %v5621
  %v5623 = vmul.f32 %v5611, 1.442695
  %v5624 = vpow.pop %v5623
  %v5625 = vmul.f32 %v5612, 1.442695
  %v5626 = vpow.pop %v5625
  %v5627 = vmul.f32 %v5613, 1.442695
  %v5628 = vpow.pop %v5627
  %v5629 = vmul.f32 %v5614, 1.442695
  %v5630 = vpow.pop %v5629
  %v5631 = vadd.f32 %v5616, 1.0
  %v5632 = vadd.f32 %v5618, 1.0
  %v5633 = vadd.f32 %v5620, 1.0
  %v5634 = vadd.f32 %v5622, 1.0
  %v5635 = vadd.f32 %v5624, 1.0
  %v5636 = vadd.f32 %v5626, 1.0
  %v5637 = vadd.f32 %v5628, 1.0
  %v5638 = vadd.f32 %v5630, 1.0
  %v5639 = vrcp.pop %v5631
  %v5640 = vmul.f32 1.0, %v5639
  %v5641 = vrcp.pop %v5632
  %v5642 = vmul.f32 1.0, %v5641
  %v5643 = vrcp.pop %v5633
  %v5644 = vmul.f32 1.0, %v5643
  %v5645 = vrcp.pop %v5634
  %v5646 = vmul.f32 1.0, %v5645
  %v5647 = vrcp.pop %v5635
  %v5648 = vmul.f32 1.0, %v5647
  %v5649 = vrcp.pop %v5636
  %v5650 = vmul.f32 1.0, %v5649
  %v5651 = vrcp.pop %v5637
  %v5652 = vmul.f32 1.0, %v5651
  %v5653 = vrcp.pop %v5638
  %v5654 = vmul.f32 1.0, %v5653
  %v5655 = vtanh.pop %v5599
  %v5656 = vtanh.pop %v5600
  %v5657 = vtanh.pop %v5601
  %v5658 = vtanh.pop %v5602
  %v5659 = vtanh.pop %v5603
  %v5660 = vtanh.pop %v5604
  %v5661 = vtanh.pop %v5605
  %v5662 = vtanh.pop %v5606
  %v5663 = vmul.f32 %v5640, %v5450
  %v5664 = vmul.f32 %v5642, %v5451
  %v5665 = vmul.f32 %v5644, %v5452
  %v5666 = vmul.f32 %v5646, %v5453
  %v5667 = vmul.f32 %v5648, %v5454
  %v5668 = vmul.f32 %v5650, %v5455
  %v5669 = vmul.f32 %v5652, %v5456
  %v5670 = vmul.f32 %v5654, %v5457
  %5679 = vrot.lane.b32.xlu0 %v5655, 32
  %v5680 = vpop.permute.xlu0 %5679
  %5681 = vrot.lane.b32.xlu0 %v5656, 32
  %v5682 = vpop.permute.xlu0 %5681
  %5683 = vrot.lane.b32.xlu0 %v5657, 32
  %v5684 = vpop.permute.xlu0 %5683
  %5685 = vrot.lane.b32.xlu0 %v5658, 32
  %v5686 = vpop.permute.xlu0 %5685
  %5687 = vrot.lane.b32.xlu0 %v5659, 32
  %v5688 = vpop.permute.xlu0 %5687
  %5689 = vrot.lane.b32.xlu0 %v5660, 32
  %v5690 = vpop.permute.xlu0 %5689
  %5691 = vrot.lane.b32.xlu0 %v5661, 32
  %v5692 = vpop.permute.xlu0 %5691
  %5693 = vrot.lane.b32.xlu0 %v5662, 32
  %v5694 = vpop.permute.xlu0 %5693
  %v5703 = vmul.f32 %v5640, %v5680
  %v5704 = vmul.f32 %v5642, %v5682
  %v5705 = vmul.f32 %v5644, %v5684
  %v5706 = vmul.f32 %v5646, %v5686
  %v5707 = vmul.f32 %v5648, %v5688
  %v5708 = vmul.f32 %v5650, %v5690
  %v5709 = vmul.f32 %v5652, %v5692
  %v5710 = vmul.f32 %v5654, %v5694
  %5719 = vrot.lane.b32.xlu0 %v5703, 32
  %v5720 = vpop.permute.xlu0 %5719
  %5721 = vrot.lane.b32.xlu0 %v5704, 32
  %v5722 = vpop.permute.xlu0 %5721
  %5723 = vrot.lane.b32.xlu0 %v5705, 32
  %v5724 = vpop.permute.xlu0 %5723
  %5725 = vrot.lane.b32.xlu0 %v5706, 32
  %v5726 = vpop.permute.xlu0 %5725
  %5727 = vrot.lane.b32.xlu0 %v5707, 32
  %v5728 = vpop.permute.xlu0 %5727
  %5729 = vrot.lane.b32.xlu0 %v5708, 32
  %v5730 = vpop.permute.xlu0 %5729
  %5731 = vrot.lane.b32.xlu0 %v5709, 32
  %v5732 = vpop.permute.xlu0 %5731
  %5733 = vrot.lane.b32.xlu0 %v5710, 32
  %v5734 = vpop.permute.xlu0 %5733
  %v5743 = vadd.f32 %v5663, %v5720
  %v5744 = vadd.f32 %v5664, %v5722
  %v5745 = vadd.f32 %v5665, %v5724
  %v5746 = vadd.f32 %v5666, %v5726
  %v5747 = vadd.f32 %v5667, %v5728
  %v5748 = vadd.f32 %v5668, %v5730
  %v5749 = vadd.f32 %v5669, %v5732
  %v5750 = vadd.f32 %v5670, %v5734
  %v5751 = vtanh.pop %v5743
  %v5752 = vtanh.pop %v5744
  %v5753 = vtanh.pop %v5745
  %v5754 = vtanh.pop %v5746
  %v5755 = vtanh.pop %v5747
  %v5756 = vtanh.pop %v5748
  %v5757 = vtanh.pop %v5749
  %v5758 = vtanh.pop %v5750
  %5767 = vrot.lane.b32.xlu0 %v5751, 32
  %v5768 = vpop.permute.xlu0 %5767
  %5769 = vrot.lane.b32.xlu0 %v5752, 32
  %v5770 = vpop.permute.xlu0 %5769
  %5771 = vrot.lane.b32.xlu0 %v5753, 32
  %v5772 = vpop.permute.xlu0 %5771
  %5773 = vrot.lane.b32.xlu0 %v5754, 32
  %v5774 = vpop.permute.xlu0 %5773
  %5775 = vrot.lane.b32.xlu0 %v5755, 32
  %v5776 = vpop.permute.xlu0 %5775
  %5777 = vrot.lane.b32.xlu0 %v5756, 32
  %v5778 = vpop.permute.xlu0 %5777
  %5779 = vrot.lane.b32.xlu0 %v5757, 32
  %v5780 = vpop.permute.xlu0 %5779
  %5781 = vrot.lane.b32.xlu0 %v5758, 32
  %v5782 = vpop.permute.xlu0 %5781
  %v5791 = vmul.f32 %v5640, %v5768
  %v5792 = vmul.f32 %v5642, %v5770
  %v5793 = vmul.f32 %v5644, %v5772
  %v5794 = vmul.f32 %v5646, %v5774
  %v5795 = vmul.f32 %v5648, %v5776
  %v5796 = vmul.f32 %v5650, %v5778
  %v5797 = vmul.f32 %v5652, %v5780
  %v5798 = vmul.f32 %v5654, %v5782
  %v5799 = vld [vmem:[%s9] sm:$0xf]
  %v5800 = vld [vmem:[%s9 + $0x4] sm:$0xf]
  %v5801 = vld [vmem:[%s9 + $0x8] sm:$0xf]
  %v5802 = vld [vmem:[%s9 + $0xc] sm:$0xf]
  %v5803 = vld [vmem:[%s9 + $0x10] sm:$0xf]
  %v5804 = vld [vmem:[%s9 + $0x14] sm:$0xf]
  %v5805 = vld [vmem:[%s9 + $0x18] sm:$0xf]
  %v5806 = vld [vmem:[%s9 + $0x1c] sm:$0xf]
  %v5807 = vld [vmem:[%s10] sm:$0x1]
  %v5808 = vld [vmem:[%s11] sm:$0xff]
  %v5809 = vld [vmem:[%s11 + $0x8] sm:$0xff]
  %v5810 = vld [vmem:[%s11 + $0x10] sm:$0xff]
  %v5811 = vld [vmem:[%s11 + $0x18] sm:$0xff]
  %v5812 = vld [vmem:[%s11 + $0x20] sm:$0xff]
  %v5813 = vld [vmem:[%s11 + $0x28] sm:$0xff]
  %v5814 = vld [vmem:[%s11 + $0x30] sm:$0xff]
  %v5815 = vld [vmem:[%s11 + $0x38] sm:$0xff]
  %5832 = vrot.lane.b32.xlu0 %v3053, 64
  %v5833 = vpop.permute.xlu0 %5832
  %5834 = vrot.lane.b32.xlu0 %v3054, 64
  %v5835 = vpop.permute.xlu0 %5834
  %5836 = vrot.lane.b32.xlu0 %v3055, 64
  %v5837 = vpop.permute.xlu0 %5836
  %5838 = vrot.lane.b32.xlu0 %v3056, 64
  %v5839 = vpop.permute.xlu0 %5838
  %5840 = vrot.lane.b32.xlu0 %v3057, 64
  %v5841 = vpop.permute.xlu0 %5840
  %5842 = vrot.lane.b32.xlu0 %v3058, 64
  %v5843 = vpop.permute.xlu0 %5842
  %5844 = vrot.lane.b32.xlu0 %v3059, 64
  %v5845 = vpop.permute.xlu0 %5844
  %5846 = vrot.lane.b32.xlu0 %v3060, 64
  %v5847 = vpop.permute.xlu0 %5846
  %5848 = vrot.lane.b32.xlu0 %v5791, 64
  %v5849 = vpop.permute.xlu0 %5848
  %5850 = vrot.lane.b32.xlu0 %v5792, 64
  %v5851 = vpop.permute.xlu0 %5850
  %5852 = vrot.lane.b32.xlu0 %v5793, 64
  %v5853 = vpop.permute.xlu0 %5852
  %5854 = vrot.lane.b32.xlu0 %v5794, 64
  %v5855 = vpop.permute.xlu0 %5854
  %5856 = vrot.lane.b32.xlu0 %v5795, 64
  %v5857 = vpop.permute.xlu0 %5856
  %5858 = vrot.lane.b32.xlu0 %v5796, 64
  %v5859 = vpop.permute.xlu0 %5858
  %5860 = vrot.lane.b32.xlu0 %v5797, 64
  %v5861 = vpop.permute.xlu0 %5860
  %5862 = vrot.lane.b32.xlu0 %v5798, 64
  %v5863 = vpop.permute.xlu0 %5862
  %5880 = vmatprep.subr.mxu0 0.0
  %5881 = vmatpush1.msra.mxu0 %v5833
  %5882 = vmatprep.subr.mxu0 0.0
  %5883 = vmatpush1.msra.mxu0 %v5835
  %5884 = vmatprep.subr.mxu0 0.0
  %5885 = vmatpush1.msra.mxu0 %v5837
  %5886 = vmatprep.subr.mxu0 0.0
  %5887 = vmatpush1.msra.mxu0 %v5839
  %5888 = vmatprep.subr.mxu0 0.0
  %5889 = vmatpush1.msra.mxu0 %v5841
  %5890 = vmatprep.subr.mxu0 0.0
  %5891 = vmatpush1.msra.mxu0 %v5843
  %5892 = vmatprep.subr.mxu0 0.0
  %5893 = vmatpush1.msra.mxu0 %v5845
  %5894 = vmatprep.subr.mxu0 0.0
  %5895 = vmatpush1.msra.mxu0 %v5847
  %5896 = vmatprep.subr.mxu0 0.0
  %5897 = vmatpush1.msra.mxu0 %v5849
  %5898 = vmatprep.subr.mxu0 0.0
  %5899 = vmatpush1.msra.mxu0 %v5851
  %5900 = vmatprep.subr.mxu0 0.0
  %5901 = vmatpush1.msra.mxu0 %v5853
  %5902 = vmatprep.subr.mxu0 0.0
  %5903 = vmatpush1.msra.mxu0 %v5855
  %5904 = vmatprep.subr.mxu0 0.0
  %5905 = vmatpush1.msra.mxu0 %v5857
  %5906 = vmatprep.subr.mxu0 0.0
  %5907 = vmatpush1.msra.mxu0 %v5859
  %5908 = vmatprep.subr.mxu0 0.0
  %5909 = vmatpush1.msra.mxu0 %v5861
  %5910 = vmatprep.subr.mxu0 0.0
  %5911 = vmatpush1.msra.mxu0 %v5863
  %5912 = vmatprep.subr.mxu0 0.0
  %5913 = vmatpush1.msra.mxu0 0.0
  %5914 = vmatprep.subr.mxu0 0.0
  %5915 = vmatpush1.msra.mxu0 0.0
  %5916 = vmatprep.subr.mxu0 0.0
  %5917 = vmatpush1.msra.mxu0 0.0
  %5918 = vmatprep.subr.mxu0 0.0
  %5919 = vmatpush1.msra.mxu0 0.0
  %5920 = vmatprep.subr.mxu0 0.0
  %5921 = vmatpush1.msra.mxu0 0.0
  %5922 = vmatprep.subr.mxu0 0.0
  %5923 = vmatpush1.msra.mxu0 0.0
  %5924 = vmatprep.subr.mxu0 0.0
  %5925 = vmatpush1.msra.mxu0 0.0
  %5926 = vmatprep.subr.mxu0 0.0
  %5927 = vmatpush1.msra.mxu0 0.0
  %5928 = vmatprep.subr.mxu0 0.0
  %5929 = vmatpush1.msra.mxu0 0.0
  %5930 = vmatprep.subr.mxu0 0.0
  %5931 = vmatpush1.msra.mxu0 0.0
  %5932 = vmatprep.subr.mxu0 0.0
  %5933 = vmatpush1.msra.mxu0 0.0
  %5934 = vmatprep.subr.mxu0 0.0
  %5935 = vmatpush1.msra.mxu0 0.0
  %5936 = vmatprep.subr.mxu0 0.0
  %5937 = vmatpush1.msra.mxu0 0.0
  %5938 = vmatprep.subr.mxu0 0.0
  %5939 = vmatpush1.msra.mxu0 0.0
  %5940 = vmatprep.subr.mxu0 0.0
  %5941 = vmatpush1.msra.mxu0 0.0
  %5942 = vmatprep.subr.mxu0 0.0
  %5943 = vmatpush1.msra.mxu0 0.0
  %5944 = vmatprep.mubr.f32.mxu0 0.0
  %5945 = vmatmul.mubr.f32.gmra.mrb[0].mxu0 %v5808
  %v5946 = vpop.f32.mrb[0].mxu0
  %v5947 = vadd.f32 0.0, %v5946
  %v5948 = vpop.f32.mrb[0].mxu0
  %5949 = vmatprep.mubr.f32.mxu0 0.0
  %5950 = vmatmul.mubr.f32.gmra.mrb[0].mxu0 %v5809
  %v5951 = vpop.f32.mrb[0].mxu0
  %v5952 = vadd.f32 0.0, %v5951
  %v5953 = vpop.f32.mrb[0].mxu0
  %5954 = vmatprep.mubr.f32.mxu0 0.0
  %5955 = vmatmul.mubr.f32.gmra.mrb[0].mxu0 %v5810
  %v5956 = vpop.f32.mrb[0].mxu0
  %v5957 = vadd.f32 0.0, %v5956
  %v5958 = vpop.f32.mrb[0].mxu0
  %5959 = vmatprep.mubr.f32.mxu0 0.0
  %5960 = vmatmul.mubr.f32.gmra.mrb[0].mxu0 %v5811
  %v5961 = vpop.f32.mrb[0].mxu0
  %v5962 = vadd.f32 0.0, %v5961
  %v5963 = vpop.f32.mrb[0].mxu0
  %5964 = vmatprep.mubr.f32.mxu0 0.0
  %5965 = vmatmul.mubr.f32.gmra.mrb[0].mxu0 %v5812
  %v5966 = vpop.f32.mrb[0].mxu0
  %v5967 = vadd.f32 0.0, %v5966
  %v5968 = vpop.f32.mrb[0].mxu0
  %5969 = vmatprep.mubr.f32.mxu0 0.0
  %5970 = vmatmul.mubr.f32.gmra.mrb[0].mxu0 %v5813
  %v5971 = vpop.f32.mrb[0].mxu0
  %v5972 = vadd.f32 0.0, %v5971
  %v5973 = vpop.f32.mrb[0].mxu0
  %5974 = vmatprep.mubr.f32.mxu0 0.0
  %5975 = vmatmul.mubr.f32.gmra.mrb[0].mxu0 %v5814
  %v5976 = vpop.f32.mrb[0].mxu0
  %v5977 = vadd.f32 0.0, %v5976
  %v5978 = vpop.f32.mrb[0].mxu0
  %5979 = vmatprep.mubr.f32.mxu0 0.0
  %5980 = vmatmul.mubr.f32.gmra.mrb[0].mxu0 %v5815
  %v5981 = vpop.f32.mrb[0].mxu0
  %v5982 = vadd.f32 0.0, %v5981
  %v5983 = vpop.f32.mrb[0].mxu0
  %5984 = vdwg.mxu0
  %v5985 = vpack.c.bf16 %v5952, %v5947
  %v5986 = vpack.c.bf16 %v5962, %v5957
  %v5987 = vpack.c.bf16 %v5972, %v5967
  %v5988 = vpack.c.bf16 %v5982, %v5977
  %v5993 = vunpack.c.l.b16 %v5799
  %v5994 = vunpack.c.l.b16 %v5800
  %v5995 = vunpack.c.l.b16 %v5801
  %v5996 = vunpack.c.l.b16 %v5802
  %v5997 = vpack.c.b16 %v5994, %v5993
  %v5998 = vpack.c.b16 %v5996, %v5995
  %v6002 = vsel %vm700, %v5985, 0
  %v6005 = vsel %vm700, %v5986, 0
  %v6008 = vsel %vm700, %v5987, 0
  %v6011 = vsel %vm700, %v5988, 0
  %6013 = vmatprep.subr.bf16.mxu0 0
  %6014 = vmatpush1.bf16.msra.mxu0 %v5997
  %6015 = vmatprep.subr.bf16.mxu0 0
  %6016 = vmatpush1.bf16.msra.mxu0 %v5998
  %6017 = vmatprep.subr.bf16.mxu0 0
  %6018 = vmatpush1.bf16.msra.mxu0 0
  %6019 = vmatprep.subr.bf16.mxu0 0
  %6020 = vmatpush1.bf16.msra.mxu0 0
  %6021 = vmatprep.subr.bf16.mxu0 0
  %6022 = vmatpush1.bf16.msra.mxu0 0
  %6023 = vmatprep.subr.bf16.mxu0 0
  %6024 = vmatpush1.bf16.msra.mxu0 0
  %6025 = vmatprep.subr.bf16.mxu0 0
  %6026 = vmatpush1.bf16.msra.mxu0 0
  %6027 = vmatprep.subr.bf16.mxu0 0
  %6028 = vmatpush1.bf16.msra.mxu0 0
  %6029 = vmatprep.subr.bf16.mxu0 0
  %6030 = vmatpush1.bf16.msra.mxu0 0
  %6031 = vmatprep.subr.bf16.mxu0 0
  %6032 = vmatpush1.bf16.msra.mxu0 0
  %6033 = vmatprep.subr.bf16.mxu0 0
  %6034 = vmatpush1.bf16.msra.mxu0 0
  %6035 = vmatprep.subr.bf16.mxu0 0
  %6036 = vmatpush1.bf16.msra.mxu0 0
  %6037 = vmatprep.subr.bf16.mxu0 0
  %6038 = vmatpush1.bf16.msra.mxu0 0
  %6039 = vmatprep.subr.bf16.mxu0 0
  %6040 = vmatpush1.bf16.msra.mxu0 0
  %6041 = vmatprep.subr.bf16.mxu0 0
  %6042 = vmatpush1.bf16.msra.mxu0 0
  %6043 = vmatprep.subr.bf16.mxu0 0
  %6044 = vmatpush1.bf16.msra.mxu0 0
  %6045 = vmatprep.mubr.bf16.mxu0 0
  %6046 = vmatmul.mubr.bf16.gmra.mrb[0].mxu0 %v6002
  %v6047 = vpop.f32.mrb[0].mxu0
  %v6048 = vadd.f32 0.0, %v6047
  %v6049 = vpop.f32.mrb[0].mxu0
  %v6050 = vpop.f32.mrb[0].mxu0
  %v6051 = vadd.f32 0.0, %v6050
  %v6052 = vpop.f32.mrb[0].mxu0
  %6053 = vmatprep.mubr.bf16.mxu0 0
  %6054 = vmatmul.mubr.bf16.gmra.mrb[0].mxu0 %v6005
  %v6055 = vpop.f32.mrb[0].mxu0
  %v6056 = vadd.f32 0.0, %v6055
  %v6057 = vpop.f32.mrb[0].mxu0
  %v6058 = vpop.f32.mrb[0].mxu0
  %v6059 = vadd.f32 0.0, %v6058
  %v6060 = vpop.f32.mrb[0].mxu0
  %6061 = vmatprep.mubr.bf16.mxu0 0
  %6062 = vmatmul.mubr.bf16.gmra.mrb[0].mxu0 %v6008
  %v6063 = vpop.f32.mrb[0].mxu0
  %v6064 = vadd.f32 0.0, %v6063
  %v6065 = vpop.f32.mrb[0].mxu0
  %v6066 = vpop.f32.mrb[0].mxu0
  %v6067 = vadd.f32 0.0, %v6066
  %v6068 = vpop.f32.mrb[0].mxu0
  %6069 = vmatprep.mubr.bf16.mxu0 0
  %6070 = vmatmul.mubr.bf16.gmra.mrb[0].mxu0 %v6011
  %v6071 = vpop.f32.mrb[0].mxu0
  %v6072 = vadd.f32 0.0, %v6071
  %v6073 = vpop.f32.mrb[0].mxu0
  %v6074 = vpop.f32.mrb[0].mxu0
  %v6075 = vadd.f32 0.0, %v6074
  %v6076 = vpop.f32.mrb[0].mxu0
  %6077 = vdwg.mxu0
  %v6079 = vlaneseq
  %v6080 = vshrl.u32 %v6079, 7
  %v6081 = vsub.s32 0, %v6080
  %v6082 = vrot.slane %v5807, %v6081
  %v6084 = vadd.f32 %v6082, %v6048
  %v6085 = vadd.f32 %v6082, %v6051
  %v6086 = vadd.f32 %v6082, %v6056
  %v6087 = vadd.f32 %v6082, %v6059
  %v6088 = vadd.f32 %v6082, %v6064
  %v6089 = vadd.f32 %v6082, %v6067
  %v6090 = vadd.f32 %v6082, %v6072
  %v6091 = vadd.f32 %v6082, %v6075
  %s6092 = scalar_lea.vmem %s11, 64
  %v6093 = vld [vmem:[%s6092] sm:$0xff]
  %v6094 = vld [vmem:[%s6092 + $0x8] sm:$0xff]
  %v6095 = vld [vmem:[%s6092 + $0x10] sm:$0xff]
  %v6096 = vld [vmem:[%s6092 + $0x18] sm:$0xff]
  %v6097 = vld [vmem:[%s6092 + $0x20] sm:$0xff]
  %v6098 = vld [vmem:[%s6092 + $0x28] sm:$0xff]
  %v6099 = vld [vmem:[%s6092 + $0x30] sm:$0xff]
  %v6100 = vld [vmem:[%s6092 + $0x38] sm:$0xff]
  %6101 = vmatprep.subr.mxu0 0.0
  %6102 = vmatpush1.msra.mxu0 %v5833
  %6103 = vmatprep.subr.mxu0 0.0
  %6104 = vmatpush1.msra.mxu0 %v5835
  %6105 = vmatprep.subr.mxu0 0.0
  %6106 = vmatpush1.msra.mxu0 %v5837
  %6107 = vmatprep.subr.mxu0 0.0
  %6108 = vmatpush1.msra.mxu0 %v5839
  %6109 = vmatprep.subr.mxu0 0.0
  %6110 = vmatpush1.msra.mxu0 %v5841
  %6111 = vmatprep.subr.mxu0 0.0
  %6112 = vmatpush1.msra.mxu0 %v5843
  %6113 = vmatprep.subr.mxu0 0.0
  %6114 = vmatpush1.msra.mxu0 %v5845
  %6115 = vmatprep.subr.mxu0 0.0
  %6116 = vmatpush1.msra.mxu0 %v5847
  %6117 = vmatprep.subr.mxu0 0.0
  %6118 = vmatpush1.msra.mxu0 %v5849
  %6119 = vmatprep.subr.mxu0 0.0
  %6120 = vmatpush1.msra.mxu0 %v5851
  %6121 = vmatprep.subr.mxu0 0.0
  %6122 = vmatpush1.msra.mxu0 %v5853
  %6123 = vmatprep.subr.mxu0 0.0
  %6124 = vmatpush1.msra.mxu0 %v5855
  %6125 = vmatprep.subr.mxu0 0.0
  %6126 = vmatpush1.msra.mxu0 %v5857
  %6127 = vmatprep.subr.mxu0 0.0
  %6128 = vmatpush1.msra.mxu0 %v5859
  %6129 = vmatprep.subr.mxu0 0.0
  %6130 = vmatpush1.msra.mxu0 %v5861
  %6131 = vmatprep.subr.mxu0 0.0
  %6132 = vmatpush1.msra.mxu0 %v5863
  %6133 = vmatprep.subr.mxu0 0.0
  %6134 = vmatpush1.msra.mxu0 0.0
  %6135 = vmatprep.subr.mxu0 0.0
  %6136 = vmatpush1.msra.mxu0 0.0
  %6137 = vmatprep.subr.mxu0 0.0
  %6138 = vmatpush1.msra.mxu0 0.0
  %6139 = vmatprep.subr.mxu0 0.0
  %6140 = vmatpush1.msra.mxu0 0.0
  %6141 = vmatprep.subr.mxu0 0.0
  %6142 = vmatpush1.msra.mxu0 0.0
  %6143 = vmatprep.subr.mxu0 0.0
  %6144 = vmatpush1.msra.mxu0 0.0
  %6145 = vmatprep.subr.mxu0 0.0
  %6146 = vmatpush1.msra.mxu0 0.0
  %6147 = vmatprep.subr.mxu0 0.0
  %6148 = vmatpush1.msra.mxu0 0.0
  %6149 = vmatprep.subr.mxu0 0.0
  %6150 = vmatpush1.msra.mxu0 0.0
  %6151 = vmatprep.subr.mxu0 0.0
  %6152 = vmatpush1.msra.mxu0 0.0
  %6153 = vmatprep.subr.mxu0 0.0
  %6154 = vmatpush1.msra.mxu0 0.0
  %6155 = vmatprep.subr.mxu0 0.0
  %6156 = vmatpush1.msra.mxu0 0.0
  %6157 = vmatprep.subr.mxu0 0.0
  %6158 = vmatpush1.msra.mxu0 0.0
  %6159 = vmatprep.subr.mxu0 0.0
  %6160 = vmatpush1.msra.mxu0 0.0
  %6161 = vmatprep.subr.mxu0 0.0
  %6162 = vmatpush1.msra.mxu0 0.0
  %6163 = vmatprep.subr.mxu0 0.0
  %6164 = vmatpush1.msra.mxu0 0.0
  %6165 = vmatprep.mubr.f32.mxu0 0.0
  %6166 = vmatmul.mubr.f32.gmra.mrb[0].mxu0 %v6093
  %v6167 = vpop.f32.mrb[0].mxu0
  %v6168 = vadd.f32 0.0, %v6167
  %v6169 = vpop.f32.mrb[0].mxu0
  %6170 = vmatprep.mubr.f32.mxu0 0.0
  %6171 = vmatmul.mubr.f32.gmra.mrb[0].mxu0 %v6094
  %v6172 = vpop.f32.mrb[0].mxu0
  %v6173 = vadd.f32 0.0, %v6172
  %v6174 = vpop.f32.mrb[0].mxu0
  %6175 = vmatprep.mubr.f32.mxu0 0.0
  %6176 = vmatmul.mubr.f32.gmra.mrb[0].mxu0 %v6095
  %v6177 = vpop.f32.mrb[0].mxu0
  %v6178 = vadd.f32 0.0, %v6177
  %v6179 = vpop.f32.mrb[0].mxu0
  %6180 = vmatprep.mubr.f32.mxu0 0.0
  %6181 = vmatmul.mubr.f32.gmra.mrb[0].mxu0 %v6096
  %v6182 = vpop.f32.mrb[0].mxu0
  %v6183 = vadd.f32 0.0, %v6182
  %v6184 = vpop.f32.mrb[0].mxu0
  %6185 = vmatprep.mubr.f32.mxu0 0.0
  %6186 = vmatmul.mubr.f32.gmra.mrb[0].mxu0 %v6097
  %v6187 = vpop.f32.mrb[0].mxu0
  %v6188 = vadd.f32 0.0, %v6187
  %v6189 = vpop.f32.mrb[0].mxu0
  %6190 = vmatprep.mubr.f32.mxu0 0.0
  %6191 = vmatmul.mubr.f32.gmra.mrb[0].mxu0 %v6098
  %v6192 = vpop.f32.mrb[0].mxu0
  %v6193 = vadd.f32 0.0, %v6192
  %v6194 = vpop.f32.mrb[0].mxu0
  %6195 = vmatprep.mubr.f32.mxu0 0.0
  %6196 = vmatmul.mubr.f32.gmra.mrb[0].mxu0 %v6099
  %v6197 = vpop.f32.mrb[0].mxu0
  %v6198 = vadd.f32 0.0, %v6197
  %v6199 = vpop.f32.mrb[0].mxu0
  %6200 = vmatprep.mubr.f32.mxu0 0.0
  %6201 = vmatmul.mubr.f32.gmra.mrb[0].mxu0 %v6100
  %v6202 = vpop.f32.mrb[0].mxu0
  %v6203 = vadd.f32 0.0, %v6202
  %v6204 = vpop.f32.mrb[0].mxu0
  %6205 = vdwg.mxu0
  %v6206 = vpack.c.bf16 %v6173, %v6168
  %v6207 = vpack.c.bf16 %v6183, %v6178
  %v6208 = vpack.c.bf16 %v6193, %v6188
  %v6209 = vpack.c.bf16 %v6203, %v6198
  %v6214 = vunpack.c.l.b16 %v5803
  %v6215 = vunpack.c.l.b16 %v5804
  %v6216 = vunpack.c.l.b16 %v5805
  %v6217 = vunpack.c.l.b16 %v5806
  %v6218 = vpack.c.b16 %v6215, %v6214
  %v6219 = vpack.c.b16 %v6217, %v6216
  %v6223 = vsel %vm700, %v6206, 0
  %v6226 = vsel %vm700, %v6207, 0
  %v6229 = vsel %vm700, %v6208, 0
  %v6232 = vsel %vm700, %v6209, 0
  %6234 = vmatprep.subr.bf16.mxu0 0
  %6235 = vmatpush1.bf16.msra.mxu0 %v6218
  %6236 = vmatprep.subr.bf16.mxu0 0
  %6237 = vmatpush1.bf16.msra.mxu0 %v6219
  %6238 = vmatprep.subr.bf16.mxu0 0
  %6239 = vmatpush1.bf16.msra.mxu0 0
  %6240 = vmatprep.subr.bf16.mxu0 0
  %6241 = vmatpush1.bf16.msra.mxu0 0
  %6242 = vmatprep.subr.bf16.mxu0 0
  %6243 = vmatpush1.bf16.msra.mxu0 0
  %6244 = vmatprep.subr.bf16.mxu0 0
  %6245 = vmatpush1.bf16.msra.mxu0 0
  %6246 = vmatprep.subr.bf16.mxu0 0
  %6247 = vmatpush1.bf16.msra.mxu0 0
  %6248 = vmatprep.subr.bf16.mxu0 0
  %6249 = vmatpush1.bf16.msra.mxu0 0
  %6250 = vmatprep.subr.bf16.mxu0 0
  %6251 = vmatpush1.bf16.msra.mxu0 0
  %6252 = vmatprep.subr.bf16.mxu0 0
  %6253 = vmatpush1.bf16.msra.mxu0 0
  %6254 = vmatprep.subr.bf16.mxu0 0
  %6255 = vmatpush1.bf16.msra.mxu0 0
  %6256 = vmatprep.subr.bf16.mxu0 0
  %6257 = vmatpush1.bf16.msra.mxu0 0
  %6258 = vmatprep.subr.bf16.mxu0 0
  %6259 = vmatpush1.bf16.msra.mxu0 0
  %6260 = vmatprep.subr.bf16.mxu0 0
  %6261 = vmatpush1.bf16.msra.mxu0 0
  %6262 = vmatprep.subr.bf16.mxu0 0
  %6263 = vmatpush1.bf16.msra.mxu0 0
  %6264 = vmatprep.subr.bf16.mxu0 0
  %6265 = vmatpush1.bf16.msra.mxu0 0
  %6266 = vmatprep.mubr.bf16.mxu0 0
  %6267 = vmatmul.mubr.bf16.gmra.mrb[0].mxu0 %v6223
  %v6268 = vpop.f32.mrb[0].mxu0
  %v6269 = vadd.f32 0.0, %v6268
  %v6270 = vpop.f32.mrb[0].mxu0
  %v6271 = vpop.f32.mrb[0].mxu0
  %v6272 = vadd.f32 0.0, %v6271
  %v6273 = vpop.f32.mrb[0].mxu0
  %6274 = vmatprep.mubr.bf16.mxu0 0
  %6275 = vmatmul.mubr.bf16.gmra.mrb[0].mxu0 %v6226
  %v6276 = vpop.f32.mrb[0].mxu0
  %v6277 = vadd.f32 0.0, %v6276
  %v6278 = vpop.f32.mrb[0].mxu0
  %v6279 = vpop.f32.mrb[0].mxu0
  %v6280 = vadd.f32 0.0, %v6279
  %v6281 = vpop.f32.mrb[0].mxu0
  %6282 = vmatprep.mubr.bf16.mxu0 0
  %6283 = vmatmul.mubr.bf16.gmra.mrb[0].mxu0 %v6229
  %v6284 = vpop.f32.mrb[0].mxu0
  %v6285 = vadd.f32 0.0, %v6284
  %v6286 = vpop.f32.mrb[0].mxu0
  %v6287 = vpop.f32.mrb[0].mxu0
  %v6288 = vadd.f32 0.0, %v6287
  %v6289 = vpop.f32.mrb[0].mxu0
  %6290 = vmatprep.mubr.bf16.mxu0 0
  %6291 = vmatmul.mubr.bf16.gmra.mrb[0].mxu0 %v6232
  %v6292 = vpop.f32.mrb[0].mxu0
  %v6293 = vadd.f32 0.0, %v6292
  %v6294 = vpop.f32.mrb[0].mxu0
  %v6295 = vpop.f32.mrb[0].mxu0
  %v6296 = vadd.f32 0.0, %v6295
  %v6297 = vpop.f32.mrb[0].mxu0
  %6298 = vdwg.mxu0
  %v6299 = vadd.f32 %v6084, %v6269
  %v6300 = vadd.f32 %v6085, %v6272
  %v6301 = vadd.f32 %v6086, %v6277
  %v6302 = vadd.f32 %v6087, %v6280
  %v6303 = vadd.f32 %v6088, %v6285
  %v6304 = vadd.f32 %v6089, %v6288
  %v6305 = vadd.f32 %v6090, %v6293
  %v6306 = vadd.f32 %v6091, %v6296
  %6307 = vst.msk [vmem:[%s12] sm:$0xff] %vm278, %v6299
  %6308 = vst.msk [vmem:[%s12 + $0x8] sm:$0xff] %vm278, %v6300
  %6309 = vst.msk [vmem:[%s12 + $0x10] sm:$0xff] %vm278, %v6301
  %6310 = vst.msk [vmem:[%s12 + $0x18] sm:$0xff] %vm278, %v6302
  %6311 = vst.msk [vmem:[%s12 + $0x20] sm:$0xff] %vm278, %v6303
  %6312 = vst.msk [vmem:[%s12 + $0x28] sm:$0xff] %vm278, %v6304
  %6313 = vst.msk [vmem:[%s12 + $0x30] sm:$0xff] %vm278, %v6305
  %6314 = vst.msk [vmem:[%s12 + $0x38] sm:$0xff] %vm278, %v6306
  // Predicated region
  $region50: #{lstm2_forward.1} parent=0 // pred_check
    _
  $region51: #{lstm2_forward.1} parent=0 // pred_check_branch
    %6316 = sbr.rel (0) target = $region53
  $region52: #{lstm2_forward.1} parent=0 // pred_region
    _
  $region53: #{lstm2_forward.1} parent=0 // pred_fallthru
    _
  // Predicated region
  $region54: #{lstm2_forward.1} parent=0 // pred_check
    _
  $region55: #{lstm2_forward.1} parent=0 // pred_check_branch
    %6318 = sbr.rel (0) target = $region57
  $region56: #{lstm2_forward.1} parent=0 // pred_region
    _
  $region57: #{lstm2_forward.1} parent=0 // pred_fallthru
    _

</llo_original>
